<compile_context>
chip_gen: v7x
topology: tpu7x:2x2x1
jax: 0.10.0
libtpu: 0.0.40
codegen_flags: <defaults>
</compile_context>

<pallas_src>
import math
import functools

import jax
import jax.numpy as jnp
from jax.experimental import pallas as pl
from jax.experimental.pallas import tpu as pltpu


# ----------------------------------------------------------------------------
# Fused stack kernel: one batch *tile* per outer grid step, one layer per inner
# grid step; both cross-attention blocks of the layer fused in the body.
# ----------------------------------------------------------------------------
def _stack_kernel(q0_ref, k0_ref, v_ref, w_ref, wkv_ref, b_ref,
                  outq_ref, outk_ref, q_sc, k_sc, *, num_heads):
    layer = pl.program_id(1)
    n_layers = pl.num_programs(1)

    Bt, Lq, E = q_sc.shape
    Lk = k_sc.shape[1]
    D = E // num_heads

    # Load the residual streams into VMEM scratch at the first layer of each
    # batch tile; they stay resident for all subsequent layers.
    @pl.when(layer == 0)
    def _():
        q_sc[...] = q0_ref[...].astype(jnp.float32)
        k_sc[...] = k0_ref[...].astype(jnp.float32)

    def layer_norm(y, gamma, beta):
        mean = jnp.mean(y, axis=-1, keepdims=True)
        ctr = y - mean
        var = jnp.mean(ctr * ctr, axis=-1, keepdims=True)
        return ctr * jax.lax.rsqrt(var + 1e-5) * gamma + beta

    def matmul(x_f32, wt_bf16, bias=None):
        # bf16 MXU operands, f32 accumulation.  Weights are pre-transposed
        # (x @ Wt == x @ W.T in PyTorch convention).
        out = jnp.dot(x_f32.astype(jnp.bfloat16), wt_bf16,
                      preferred_element_type=jnp.float32)
        return out if bias is None else out + bias

    def attention(qp, kp, vp):
        # qp: (Bt, Mq, E), kp/vp: (Bt, Mk, E), f32.  1/sqrt(D) already folded
        # into the q projection.  Heads are sliced from lanes in registers and
        # head outputs concatenated back in registers (no scratch round-trip,
        # no materialized k^T).
        qb = qp.astype(jnp.bfloat16)
        kb = kp.astype(jnp.bfloat16)
        vb = vp.astype(jnp.bfloat16)
        heads = []
        for h in range(num_heads):
            lo = h * D
            qh = qb[:, :, lo:lo + D]
            kh = kb[:, :, lo:lo + D]
            vh = vb[:, :, lo:lo + D]
            # scores: batched over Bt, contract head dim of both (no transpose).
            s = jax.lax.dot_general(qh, kh, (((2,), (2,)), ((0,), (0,))),
                                    preferred_element_type=jnp.float32)  # (Bt,Mq,Mk)
            s = s - jnp.max(s, axis=-1, keepdims=True)
            p = jnp.exp(s)
            p = p * pl.reciprocal(jnp.sum(p, axis=-1, keepdims=True), approx=True)
            heads.append(jax.lax.dot_general(
                p.astype(jnp.bfloat16), vh, (((2,), (1,)), ((0,), (0,))),
                preferred_element_type=jnp.float32))                     # (Bt,Mq,D)
        return jnp.concatenate(heads, axis=-1)                           # (Bt,Mq,E)

    # Flattened residual streams: projections / LayerNorm run on (Bt*L, E).
    xq = q_sc[...].reshape(Bt * Lq, E)
    xk = k_sc[...].reshape(Bt * Lk, E)
    xv = v_ref[...].astype(jnp.float32).reshape(Bt * Lk, E)   # original value, every layer

    # ---- block 0: q <- LN1(q + MHA_qkv(q, k, value)) ----
    q_p = matmul(xq, w_ref[0, 0], b_ref[0, 0:1])     # scale folded into weight & bias
    k_p = matmul(xk, w_ref[0, 1], b_ref[0, 1:2])
    v_p = matmul(xv, w_ref[0, 2], b_ref[0, 2:3])
    o0 = attention(q_p.reshape(Bt, Lq, E),
                   k_p.reshape(Bt, Lk, E),
                   v_p.reshape(Bt, Lk, E)).reshape(Bt * Lq, E)
    new_q = layer_norm(xq + matmul(o0, w_ref[0, 3], b_ref[0, 3:4]),
                       b_ref[0, 4:5], b_ref[0, 5:6])

    # ---- block 1: k <- LN2(k + MHA_kvq(k, new_q, new_q)) ----
    q1_p = matmul(xk, w_ref[0, 4], b_ref[0, 6:7])
    kv1 = matmul(new_q, wkv_ref[0])                  # fused [K|V] projection, N = 2E
    k1_p = kv1[:, :E] + b_ref[0, 7:8]
    v1_p = kv1[:, E:] + b_ref[0, 8:9]
    o1 = attention(q1_p.reshape(Bt, Lk, E),
                   k1_p.reshape(Bt, Lq, E),
                   v1_p.reshape(Bt, Lq, E)).reshape(Bt * Lk, E)
    new_k = layer_norm(xk + matmul(o1, w_ref[0, 5], b_ref[0, 9:10]),
                       b_ref[0, 10:11], b_ref[0, 11:12])

    q_sc[...] = new_q.reshape(Bt, Lq, E)
    k_sc[...] = new_k.reshape(Bt, Lk, E)

    @pl.when(layer == n_layers - 1)
    def _():
        # TODO(synk): for production keep E a multiple of 128 so this store is
        # lane-dense; at E=32 it happens once per batch tile and is negligible.
        outq_ref[...] = new_q.reshape(Bt, Lq, E).astype(outq_ref.dtype)
        outk_ref[...] = new_k.reshape(Bt, Lk, E).astype(outk_ref.dtype)


def _pick_batch_tile(batch):
    # Fold several batch elements into one block (taller matmul M, fewer grid
    # steps, fewer weight re-streams) while keeping >=2 blocks on the parallel
    # axis so both v7x TensorCores get work.
    for bt in (32, 16, 8, 4, 2):
        if batch % bt == 0 and batch // bt >= 2:
            return bt
    return 1


# ----------------------------------------------------------------------------
# Wrapper: PyTorch MHA layout (L, B, E) in/out, one pallas_call for the stack.
# ----------------------------------------------------------------------------
def bidirectional_cross_attention_stack(w_main, w_kv1, b_packed,
                                        query, key, value, num_heads):
    """query: (Lq,B,E); key/value: (Lk,B,E); w_main: (L,6,E,E) bf16;
    w_kv1: (L,E,2E) bf16; b_packed: (L,12,E) f32."""
    q = jnp.transpose(query, (1, 0, 2))
    k = jnp.transpose(key, (1, 0, 2))
    v = jnp.transpose(value, (1, 0, 2))
    B, Lq, E = q.shape
    Lk = k.shape[1]
    num_layers = w_main.shape[0]
    assert E % num_heads == 0

    Bt = _pick_batch_tile(B)
    assert B % Bt == 0

    # Explicit VMEM budget: double-buffered I/O + weight blocks, resident scratch,
    # 2x headroom; floored at the 32 MiB scoped default, capped at v7x's 64 MiB.
    f32b, bf16b = 4, 2
    io_block = f32b * Bt * E * (Lq + 2 * Lk) + f32b * Bt * E * (Lq + Lk)
    w_block = bf16b * (6 * E * E + 2 * E * E) + f32b * 12 * E
    scratch = f32b * Bt * E * (Lq + Lk)
    vmem_limit = int(min(max(2 * (2 * (io_block + w_block) + scratch), 32 << 20),
                         64 << 20))

    kernel = functools.partial(_stack_kernel, num_heads=num_heads)
    out_q, out_k = pl.pallas_call(
        kernel,
        out_shape=(jax.ShapeDtypeStruct((B, Lq, E), q.dtype),
                   jax.ShapeDtypeStruct((B, Lk, E), k.dtype)),
        grid=(B // Bt, num_layers),
        in_specs=[
            pl.BlockSpec((Bt, Lq, E), lambda bi, li: (bi, 0, 0)),          # q0
            pl.BlockSpec((Bt, Lk, E), lambda bi, li: (bi, 0, 0)),          # k0
            pl.BlockSpec((Bt, Lk, E), lambda bi, li: (bi, 0, 0)),          # value (original)
            pl.BlockSpec((1, 6, E, E), lambda bi, li: (li, 0, 0, 0)),      # packed weights (bf16)
            pl.BlockSpec((1, E, 2 * E), lambda bi, li: (li, 0, 0)),        # fused K|V of block 1 (bf16)
            pl.BlockSpec((1, 12, E), lambda bi, li: (li, 0, 0)),           # biases + LN (f32)
        ],
        out_specs=(pl.BlockSpec((Bt, Lq, E), lambda bi, li: (bi, 0, 0)),
                   pl.BlockSpec((Bt, Lk, E), lambda bi, li: (bi, 0, 0))),
        scratch_shapes=[
            pltpu.VMEM((Bt, Lq, E), jnp.float32),   # resident q stream
            pltpu.VMEM((Bt, Lk, E), jnp.float32),   # resident k stream
        ],
        compiler_params=pltpu.CompilerParams(
            dimension_semantics=("parallel", "arbitrary"),
            vmem_limit_bytes=vmem_limit),
    )(q, k, v, w_main, w_kv1, b_packed)
    return jnp.transpose(out_q, (1, 0, 2)), jnp.transpose(out_k, (1, 0, 2))


# ----------------------------------------------------------------------------
# Deterministic raw parameters (PyTorch nn.MultiheadAttention / LayerNorm shapes)
# and the kernel-side packing (pre-transposed, scale-folded, bf16, fused K|V).
# ----------------------------------------------------------------------------
def init_params(rng, embed_dim, num_layers):
    E = embed_dim
    bound = 1.0 / math.sqrt(E)
    layers = []
    for lk in jax.random.split(rng, num_layers):
        ks = jax.random.split(lk, 8)

        def mha(k0, k1, k2, k3):
            return dict(
                in_w=jax.random.uniform(k0, (3 * E, E), jnp.float32, -bound, bound),
                in_b=jax.random.uniform(k1, (3 * E,), jnp.float32, -bound, bound),
                out_w=jax.random.uniform(k2, (E, E), jnp.float32, -bound, bound),
                out_b=jax.random.uniform(k3, (E,), jnp.float32, -bound, bound))

        layers.append(dict(
            qkv=mha(*ks[0:4]), kvq=mha(*ks[4:8]),
            ln1_w=jnp.ones((E,), jnp.float32), ln1_b=jnp.zeros((E,), jnp.float32),
            ln2_w=jnp.ones((E,), jnp.float32), ln2_b=jnp.zeros((E,), jnp.float32)))
    return layers


def pack_params(layers, num_heads):
    E = layers[0]['qkv']['in_w'].shape[1]
    D = E // num_heads
    scale = 1.0 / math.sqrt(D)
    w_main, w_kv1, b_all = [], [], []
    for lp in layers:
        wq0, wk0, wv0 = jnp.split(lp['qkv']['in_w'], 3, axis=0)
        bq0, bk0, bv0 = jnp.split(lp['qkv']['in_b'], 3)
        wo0, bo0 = lp['qkv']['out_w'], lp['qkv']['out_b']
        wq1, wk1, wv1 = jnp.split(lp['kvq']['in_w'], 3, axis=0)
        bq1, bk1, bv1 = jnp.split(lp['kvq']['in_b'], 3)
        wo1, bo1 = lp['kvq']['out_w'], lp['kvq']['out_b']
        # Pre-transposed so the kernel computes x @ Wt; 1/sqrt(D) folded into the
        # q projection weight AND bias (PyTorch scales (x Wq^T + bq)).
        w_main.append(jnp.stack([wq0.T * scale, wk0.T, wv0.T, wo0.T,
                                 wq1.T * scale, wo1.T], axis=0))            # (6,E,E)
        w_kv1.append(jnp.concatenate([wk1.T, wv1.T], axis=1))               # (E,2E)
        b_all.append(jnp.stack([bq0 * scale, bk0, bv0, bo0, lp['ln1_w'], lp['ln1_b'],
                                bq1 * scale, bk1, bv1, bo1, lp['ln2_w'], lp['ln2_b']],
                               axis=0))                                      # (12,E)
    return (jnp.stack(w_main).astype(jnp.bfloat16),
            jnp.stack(w_kv1).astype(jnp.bfloat16),
            jnp.stack(b_all).astype(jnp.float32))


# ----------------------------------------------------------------------------
# Pure-JAX f32 reference (standard MHA math on the raw parameters).
# ----------------------------------------------------------------------------
def _ref_mha(x_q, x_k, x_v, p, num_heads):
    B, Lq, E = x_q.shape
    Lk = x_k.shape[1]
    D = E // num_heads
    wq, wk, wv = jnp.split(p['in_w'], 3, axis=0)
    bq, bk, bv = jnp.split(p['in_b'], 3)
    q = (x_q @ wq.T + bq).reshape(B, Lq, num_heads, D) / math.sqrt(D)
    k = (x_k @ wk.T + bk).reshape(B, Lk, num_heads, D)
    v = (x_v @ wv.T + bv).reshape(B, Lk, num_heads, D)
    s = jnp.einsum('bqhd,bkhd->bhqk', q, k)
    a = jax.nn.softmax(s, axis=-1)
    o = jnp.einsum('bhqk,bkhd->bqhd', a, v).reshape(B, Lq, E)
    return o @ p['out_w'].T + p['out_b']


def _ref_ln(x, w, b):
    mean = jnp.mean(x, axis=-1, keepdims=True)
    var = jnp.mean((x - mean) ** 2, axis=-1, keepdims=True)
    return (x - mean) * jax.lax.rsqrt(var + 1e-5) * w + b


def _ref_stack(layers, query, key, value, num_heads):
    q = jnp.transpose(query, (1, 0, 2))
    k = jnp.transpose(key, (1, 0, 2))
    v = jnp.transpose(value, (1, 0, 2))
    for lp in layers:
        q = _ref_ln(q + _ref_mha(q, k, v, lp['qkv'], num_heads), lp['ln1_w'], lp['ln1_b'])
        k = _ref_ln(k + _ref_mha(k, q, q, lp['kvq'], num_heads), lp['ln2_w'], lp['ln2_b'])
    return jnp.transpose(q, (1, 0, 2)), jnp.transpose(k, (1, 0, 2))


# ----------------------------------------------------------------------------
if __name__ == "__main__":
    embed_dim, num_heads, num_layers = 32, 4, 2
    B, Lq, Lk = 8, 8, 16

    root = jax.random.PRNGKey(0)
    kp, kq, kk, kv = jax.random.split(root, 4)
    params = init_params(kp, embed_dim, num_layers)
    w_main, w_kv1, b_packed = pack_params(params, num_heads)

    query = jax.random.normal(kq, (Lq, B, embed_dim), jnp.float32)
    key = jax.random.normal(kk, (Lk, B, embed_dim), jnp.float32)
    value = jax.random.normal(kv, (Lk, B, embed_dim), jnp.float32)

    out_q, out_k = bidirectional_cross_attention_stack(
        w_main, w_kv1, b_packed, query, key, value, num_heads)
    out_q = jax.block_until_ready(out_q)
    out_k = jax.block_until_ready(out_k)

    ref_q, ref_k = _ref_stack(params, query, key, value, num_heads)
    assert out_q.shape == (Lq, B, embed_dim) and out_k.shape == (Lk, B, embed_dim)
    # Tolerance loosened vs pure-f32 because the kernel uses bf16 MXU operands and an
    # approximate EUP reciprocal in the softmax denominator (per perf review).
    assert jnp.allclose(out_q, ref_q, atol=5e-2, rtol=5e-2), \
        float(jnp.max(jnp.abs(out_q - ref_q)))
    assert jnp.allclose(out_k, ref_k, atol=5e-2, rtol=5e-2), \
        float(jnp.max(jnp.abs(out_k - ref_k)))

    print("KERNEL_OK")
</pallas_src>

<mosaic_0001>
module attributes {stable_mosaic.version = 11 : i64} {
  func.func @_stack_kernel(%arg0: i32, %arg1: i32, %arg2: memref<4x8x32xf32, #tpu.memory_space<vmem>>, %arg3: memref<4x16x32xf32, #tpu.memory_space<vmem>>, %arg4: memref<4x16x32xf32, #tpu.memory_space<vmem>>, %arg5: memref<1x6x32x32xbf16, #tpu.memory_space<vmem>>, %arg6: memref<1x32x64xbf16, #tpu.memory_space<vmem>>, %arg7: memref<1x12x32xf32, #tpu.memory_space<vmem>>, %arg8: memref<4x8x32xf32, #tpu.memory_space<vmem>>, %arg9: memref<4x16x32xf32, #tpu.memory_space<vmem>>, %arg10: memref<4x8x32xf32, #tpu.memory_space<vmem>>, %arg11: memref<4x16x32xf32, #tpu.memory_space<vmem>>) attributes {dimension_semantics = [#tpu.dimension_semantics<parallel>, #tpu.dimension_semantics<arbitrary>], iteration_bounds = array<i64: 2, 2>, scalar_prefetch = 0 : i64, scratch_operands = 2 : i64, tpu.core_type = #tpu.core_type<tc>, window_params = [{transform_indices = @transform_0, window_bounds = array<i64: 4, 8, 32>}, {transform_indices = @transform_1, window_bounds = array<i64: 4, 16, 32>}, {transform_indices = @transform_2, window_bounds = array<i64: 4, 16, 32>}, {transform_indices = @transform_3, window_bounds = array<i64: 1, 6, 32, 32>}, {transform_indices = @transform_4, window_bounds = array<i64: 1, 32, 64>}, {transform_indices = @transform_5, window_bounds = array<i64: 1, 12, 32>}, {transform_indices = @transform_6, window_bounds = array<i64: 4, 8, 32>}, {transform_indices = @transform_7, window_bounds = array<i64: 4, 16, 32>}]} {
    %c0_i32 = arith.constant 0 : i32
    %0 = arith.cmpi eq, %arg1, %c0_i32 : i32
    %1 = arith.extui %0 : i1 to i32
    %c0_i32_0 = arith.constant 0 : i32
    %2 = arith.cmpi ne, %1, %c0_i32_0 : i32
    scf.if %2 {
      %c0_116 = arith.constant 0 : index
      %c0_117 = arith.constant 0 : index
      %c0_118 = arith.constant 0 : index
      %272 = vector.load %arg2[%c0_116, %c0_117, %c0_118] : memref<4x8x32xf32, #tpu.memory_space<vmem>>, vector<4x8x32xf32>
      %c0_119 = arith.constant 0 : index
      %c0_120 = arith.constant 0 : index
      %c0_121 = arith.constant 0 : index
      %273 = vector.load %arg10[%c0_119, %c0_120, %c0_121] : memref<4x8x32xf32, #tpu.memory_space<vmem>>, vector<4x8x32xf32>
      tpu.vector_store %arg10[%c0_119, %c0_120, %c0_121], %272 {strides = array<i32>} : memref<4x8x32xf32, #tpu.memory_space<vmem>>, vector<4x8x32xf32>,
      %c0_122 = arith.constant 0 : index
      %c0_123 = arith.constant 0 : index
      %c0_124 = arith.constant 0 : index
      %274 = vector.load %arg3[%c0_122, %c0_123, %c0_124] : memref<4x16x32xf32, #tpu.memory_space<vmem>>, vector<4x16x32xf32>
      %c0_125 = arith.constant 0 : index
      %c0_126 = arith.constant 0 : index
      %c0_127 = arith.constant 0 : index
      %275 = vector.load %arg11[%c0_125, %c0_126, %c0_127] : memref<4x16x32xf32, #tpu.memory_space<vmem>>, vector<4x16x32xf32>
      tpu.vector_store %arg11[%c0_125, %c0_126, %c0_127], %274 {strides = array<i32>} : memref<4x16x32xf32, #tpu.memory_space<vmem>>, vector<4x16x32xf32>,
    } else {
    }
    %c0 = arith.constant 0 : index
    %c0_1 = arith.constant 0 : index
    %c0_2 = arith.constant 0 : index
    %3 = vector.load %arg10[%c0, %c0_1, %c0_2] : memref<4x8x32xf32, #tpu.memory_space<vmem>>, vector<4x8x32xf32>
    %4 = vector.shape_cast %3 : vector<4x8x32xf32> to vector<32x32xf32>
    %c0_3 = arith.constant 0 : index
    %c0_4 = arith.constant 0 : index
    %c0_5 = arith.constant 0 : index
    %5 = vector.load %arg11[%c0_3, %c0_4, %c0_5] : memref<4x16x32xf32, #tpu.memory_space<vmem>>, vector<4x16x32xf32>
    %6 = vector.shape_cast %5 : vector<4x16x32xf32> to vector<64x32xf32>
    %c0_6 = arith.constant 0 : index
    %c0_7 = arith.constant 0 : index
    %c0_8 = arith.constant 0 : index
    %7 = vector.load %arg4[%c0_6, %c0_7, %c0_8] : memref<4x16x32xf32, #tpu.memory_space<vmem>>, vector<4x16x32xf32>
    %8 = vector.shape_cast %7 : vector<4x16x32xf32> to vector<64x32xf32>
    %c0_9 = arith.constant 0 : index
    %c0_10 = arith.constant 0 : index
    %c0_11 = arith.constant 0 : index
    %c0_12 = arith.constant 0 : index
    %9 = vector.load %arg5[%c0_9, %c0_10, %c0_11, %c0_12] : memref<1x6x32x32xbf16, #tpu.memory_space<vmem>>, vector<1x1x32x32xbf16>
    %10 = vector.shape_cast %9 : vector<1x1x32x32xbf16> to vector<32x32xbf16>
    %c0_13 = arith.constant 0 : index
    %c0_14 = arith.constant 0 : index
    %c0_15 = arith.constant 0 : index
    %11 = vector.load %arg7[%c0_13, %c0_14, %c0_15] : memref<1x12x32xf32, #tpu.memory_space<vmem>>, vector<1x1x32xf32>
    %12 = vector.shape_cast %11 : vector<1x1x32xf32> to vector<1x32xf32>
    %13 = arith.truncf %4 : vector<32x32xf32> to vector<32x32xbf16>
    %cst = arith.constant dense<0.000000e+00> : vector<32x32xf32>
    %14 = tpu.matmul %13, %10, %cst {dimension_numbers = #tpu.dot_dimension_numbers<[1], [0], [0], [1], [0, 0, 1, 1], [], []>} : vector<32x32xbf16>, vector<32x32xbf16>, vector<32x32xf32> -> vector<32x32xf32>
    %15 = vector.broadcast %12 : vector<1x32xf32> to vector<32x32xf32>
    %16 = arith.addf %14, %15 : vector<32x32xf32>
    %c0_16 = arith.constant 0 : index
    %c1 = arith.constant 1 : index
    %c0_17 = arith.constant 0 : index
    %c0_18 = arith.constant 0 : index
    %17 = vector.load %arg5[%c0_16, %c1, %c0_17, %c0_18] : memref<1x6x32x32xbf16, #tpu.memory_space<vmem>>, vector<1x1x32x32xbf16>
    %18 = vector.shape_cast %17 : vector<1x1x32x32xbf16> to vector<32x32xbf16>
    %c0_19 = arith.constant 0 : index
    %c1_20 = arith.constant 1 : index
    %c0_21 = arith.constant 0 : index
    %19 = vector.load %arg7[%c0_19, %c1_20, %c0_21] : memref<1x12x32xf32, #tpu.memory_space<vmem>>, vector<1x1x32xf32>
    %20 = vector.shape_cast %19 : vector<1x1x32xf32> to vector<1x32xf32>
    %21 = arith.truncf %6 : vector<64x32xf32> to vector<64x32xbf16>
    %cst_22 = arith.constant dense<0.000000e+00> : vector<64x32xf32>
    %22 = tpu.matmul %21, %18, %cst_22 {dimension_numbers = #tpu.dot_dimension_numbers<[1], [0], [0], [1], [0, 0, 1, 1], [], []>} : vector<64x32xbf16>, vector<32x32xbf16>, vector<64x32xf32> -> vector<64x32xf32>
    %23 = vector.broadcast %20 : vector<1x32xf32> to vector<64x32xf32>
    %24 = arith.addf %22, %23 : vector<64x32xf32>
    %c0_23 = arith.constant 0 : index
    %c2 = arith.constant 2 : index
    %c0_24 = arith.constant 0 : index
    %c0_25 = arith.constant 0 : index
    %25 = vector.load %arg5[%c0_23, %c2, %c0_24, %c0_25] : memref<1x6x32x32xbf16, #tpu.memory_space<vmem>>, vector<1x1x32x32xbf16>
    %26 = vector.shape_cast %25 : vector<1x1x32x32xbf16> to vector<32x32xbf16>
    %c0_26 = arith.constant 0 : index
    %c2_27 = arith.constant 2 : index
    %c0_28 = arith.constant 0 : index
    %27 = vector.load %arg7[%c0_26, %c2_27, %c0_28] : memref<1x12x32xf32, #tpu.memory_space<vmem>>, vector<1x1x32xf32>
    %28 = vector.shape_cast %27 : vector<1x1x32xf32> to vector<1x32xf32>
    %29 = arith.truncf %8 : vector<64x32xf32> to vector<64x32xbf16>
    %cst_29 = arith.constant dense<0.000000e+00> : vector<64x32xf32>
    %30 = tpu.matmul %29, %26, %cst_29 {dimension_numbers = #tpu.dot_dimension_numbers<[1], [0], [0], [1], [0, 0, 1, 1], [], []>} : vector<64x32xbf16>, vector<32x32xbf16>, vector<64x32xf32> -> vector<64x32xf32>
    %31 = vector.broadcast %28 : vector<1x32xf32> to vector<64x32xf32>
    %32 = arith.addf %30, %31 : vector<64x32xf32>
    %33 = vector.shape_cast %16 : vector<32x32xf32> to vector<4x8x32xf32>
    %34 = vector.shape_cast %24 : vector<64x32xf32> to vector<4x16x32xf32>
    %35 = vector.shape_cast %32 : vector<64x32xf32> to vector<4x16x32xf32>
    %36 = arith.truncf %33 : vector<4x8x32xf32> to vector<4x8x32xbf16>
    %37 = arith.truncf %34 : vector<4x16x32xf32> to vector<4x16x32xbf16>
    %38 = arith.truncf %35 : vector<4x16x32xf32> to vector<4x16x32xbf16>
    %39 = vector.extract_strided_slice %36 {offsets = [0, 0, 0], sizes = [4, 8, 8], strides = [1, 1, 1]} : vector<4x8x32xbf16> to vector<4x8x8xbf16>
    %40 = vector.extract_strided_slice %37 {offsets = [0, 0, 0], sizes = [4, 16, 8], strides = [1, 1, 1]} : vector<4x16x32xbf16> to vector<4x16x8xbf16>
    %41 = vector.extract_strided_slice %38 {offsets = [0, 0, 0], sizes = [4, 16, 8], strides = [1, 1, 1]} : vector<4x16x32xbf16> to vector<4x16x8xbf16>
    %cst_30 = arith.constant dense<0.000000e+00> : vector<4x8x16xf32>
    %42 = tpu.matmul %39, %40, %cst_30 {dimension_numbers = #tpu.dot_dimension_numbers<[2], [2], [1], [1], [0, 0, 0, 1, 1, 1], [0], [0]>} : vector<4x8x8xbf16>, vector<4x16x8xbf16>, vector<4x8x16xf32> -> vector<4x8x16xf32>
    %cst_31 = arith.constant dense<0xFF800000> : vector<4x8xf32>
    %43 = vector.multi_reduction <maximumf>, %42, %cst_31 [2] : vector<4x8x16xf32> to vector<4x8xf32>
    %44 = vector.shape_cast %43 : vector<4x8xf32> to vector<4x8x1xf32>
    %45 = vector.broadcast %44 : vector<4x8x1xf32> to vector<4x8x16xf32>
    %46 = arith.subf %42, %45 : vector<4x8x16xf32>
    %47 = math.exp %46 : vector<4x8x16xf32>
    %cst_32 = arith.constant dense<0.000000e+00> : vector<4x8xf32>
    %48 = vector.multi_reduction <add>, %47, %cst_32 [2] : vector<4x8x16xf32> to vector<4x8xf32>
    %49 = vector.shape_cast %48 : vector<4x8xf32> to vector<4x8x1xf32>
    %50 = tpu.reciprocal %49 {approx = true} : vector<4x8x1xf32> -> vector<4x8x1xf32>
    %51 = vector.broadcast %50 : vector<4x8x1xf32> to vector<4x8x16xf32>
    %52 = arith.mulf %47, %51 : vector<4x8x16xf32>
    %53 = arith.truncf %52 : vector<4x8x16xf32> to vector<4x8x16xbf16>
    %cst_33 = arith.constant dense<0.000000e+00> : vector<4x8x8xf32>
    %54 = tpu.matmul %53, %41, %cst_33 {dimension_numbers = #tpu.dot_dimension_numbers<[2], [1], [1], [2], [0, 0, 0, 1, 1, 2], [0], [0]>} : vector<4x8x16xbf16>, vector<4x16x8xbf16>, vector<4x8x8xf32> -> vector<4x8x8xf32>
    %55 = vector.extract_strided_slice %36 {offsets = [0, 0, 8], sizes = [4, 8, 8], strides = [1, 1, 1]} : vector<4x8x32xbf16> to vector<4x8x8xbf16>
    %56 = vector.extract_strided_slice %37 {offsets = [0, 0, 8], sizes = [4, 16, 8], strides = [1, 1, 1]} : vector<4x16x32xbf16> to vector<4x16x8xbf16>
    %57 = vector.extract_strided_slice %38 {offsets = [0, 0, 8], sizes = [4, 16, 8], strides = [1, 1, 1]} : vector<4x16x32xbf16> to vector<4x16x8xbf16>
    %cst_34 = arith.constant dense<0.000000e+00> : vector<4x8x16xf32>
    %58 = tpu.matmul %55, %56, %cst_34 {dimension_numbers = #tpu.dot_dimension_numbers<[2], [2], [1], [1], [0, 0, 0, 1, 1, 1], [0], [0]>} : vector<4x8x8xbf16>, vector<4x16x8xbf16>, vector<4x8x16xf32> -> vector<4x8x16xf32>
    %cst_35 = arith.constant dense<0xFF800000> : vector<4x8xf32>
    %59 = vector.multi_reduction <maximumf>, %58, %cst_35 [2] : vector<4x8x16xf32> to vector<4x8xf32>
    %60 = vector.shape_cast %59 : vector<4x8xf32> to vector<4x8x1xf32>
    %61 = vector.broadcast %60 : vector<4x8x1xf32> to vector<4x8x16xf32>
    %62 = arith.subf %58, %61 : vector<4x8x16xf32>
    %63 = math.exp %62 : vector<4x8x16xf32>
    %cst_36 = arith.constant dense<0.000000e+00> : vector<4x8xf32>
    %64 = vector.multi_reduction <add>, %63, %cst_36 [2] : vector<4x8x16xf32> to vector<4x8xf32>
    %65 = vector.shape_cast %64 : vector<4x8xf32> to vector<4x8x1xf32>
    %66 = tpu.reciprocal %65 {approx = true} : vector<4x8x1xf32> -> vector<4x8x1xf32>
    %67 = vector.broadcast %66 : vector<4x8x1xf32> to vector<4x8x16xf32>
    %68 = arith.mulf %63, %67 : vector<4x8x16xf32>
    %69 = arith.truncf %68 : vector<4x8x16xf32> to vector<4x8x16xbf16>
    %cst_37 = arith.constant dense<0.000000e+00> : vector<4x8x8xf32>
    %70 = tpu.matmul %69, %57, %cst_37 {dimension_numbers = #tpu.dot_dimension_numbers<[2], [1], [1], [2], [0, 0, 0, 1, 1, 2], [0], [0]>} : vector<4x8x16xbf16>, vector<4x16x8xbf16>, vector<4x8x8xf32> -> vector<4x8x8xf32>
    %71 = vector.extract_strided_slice %36 {offsets = [0, 0, 16], sizes = [4, 8, 8], strides = [1, 1, 1]} : vector<4x8x32xbf16> to vector<4x8x8xbf16>
    %72 = vector.extract_strided_slice %37 {offsets = [0, 0, 16], sizes = [4, 16, 8], strides = [1, 1, 1]} : vector<4x16x32xbf16> to vector<4x16x8xbf16>
    %73 = vector.extract_strided_slice %38 {offsets = [0, 0, 16], sizes = [4, 16, 8], strides = [1, 1, 1]} : vector<4x16x32xbf16> to vector<4x16x8xbf16>
    %cst_38 = arith.constant dense<0.000000e+00> : vector<4x8x16xf32>
    %74 = tpu.matmul %71, %72, %cst_38 {dimension_numbers = #tpu.dot_dimension_numbers<[2], [2], [1], [1], [0, 0, 0, 1, 1, 1], [0], [0]>} : vector<4x8x8xbf16>, vector<4x16x8xbf16>, vector<4x8x16xf32> -> vector<4x8x16xf32>
    %cst_39 = arith.constant dense<0xFF800000> : vector<4x8xf32>
    %75 = vector.multi_reduction <maximumf>, %74, %cst_39 [2] : vector<4x8x16xf32> to vector<4x8xf32>
    %76 = vector.shape_cast %75 : vector<4x8xf32> to vector<4x8x1xf32>
    %77 = vector.broadcast %76 : vector<4x8x1xf32> to vector<4x8x16xf32>
    %78 = arith.subf %74, %77 : vector<4x8x16xf32>
    %79 = math.exp %78 : vector<4x8x16xf32>
    %cst_40 = arith.constant dense<0.000000e+00> : vector<4x8xf32>
    %80 = vector.multi_reduction <add>, %79, %cst_40 [2] : vector<4x8x16xf32> to vector<4x8xf32>
    %81 = vector.shape_cast %80 : vector<4x8xf32> to vector<4x8x1xf32>
    %82 = tpu.reciprocal %81 {approx = true} : vector<4x8x1xf32> -> vector<4x8x1xf32>
    %83 = vector.broadcast %82 : vector<4x8x1xf32> to vector<4x8x16xf32>
    %84 = arith.mulf %79, %83 : vector<4x8x16xf32>
    %85 = arith.truncf %84 : vector<4x8x16xf32> to vector<4x8x16xbf16>
    %cst_41 = arith.constant dense<0.000000e+00> : vector<4x8x8xf32>
    %86 = tpu.matmul %85, %73, %cst_41 {dimension_numbers = #tpu.dot_dimension_numbers<[2], [1], [1], [2], [0, 0, 0, 1, 1, 2], [0], [0]>} : vector<4x8x16xbf16>, vector<4x16x8xbf16>, vector<4x8x8xf32> -> vector<4x8x8xf32>
    %87 = vector.extract_strided_slice %36 {offsets = [0, 0, 24], sizes = [4, 8, 8], strides = [1, 1, 1]} : vector<4x8x32xbf16> to vector<4x8x8xbf16>
    %88 = vector.extract_strided_slice %37 {offsets = [0, 0, 24], sizes = [4, 16, 8], strides = [1, 1, 1]} : vector<4x16x32xbf16> to vector<4x16x8xbf16>
    %89 = vector.extract_strided_slice %38 {offsets = [0, 0, 24], sizes = [4, 16, 8], strides = [1, 1, 1]} : vector<4x16x32xbf16> to vector<4x16x8xbf16>
    %cst_42 = arith.constant dense<0.000000e+00> : vector<4x8x16xf32>
    %90 = tpu.matmul %87, %88, %cst_42 {dimension_numbers = #tpu.dot_dimension_numbers<[2], [2], [1], [1], [0, 0, 0, 1, 1, 1], [0], [0]>} : vector<4x8x8xbf16>, vector<4x16x8xbf16>, vector<4x8x16xf32> -> vector<4x8x16xf32>
    %cst_43 = arith.constant dense<0xFF800000> : vector<4x8xf32>
    %91 = vector.multi_reduction <maximumf>, %90, %cst_43 [2] : vector<4x8x16xf32> to vector<4x8xf32>
    %92 = vector.shape_cast %91 : vector<4x8xf32> to vector<4x8x1xf32>
    %93 = vector.broadcast %92 : vector<4x8x1xf32> to vector<4x8x16xf32>
    %94 = arith.subf %90, %93 : vector<4x8x16xf32>
    %95 = math.exp %94 : vector<4x8x16xf32>
    %cst_44 = arith.constant dense<0.000000e+00> : vector<4x8xf32>
    %96 = vector.multi_reduction <add>, %95, %cst_44 [2] : vector<4x8x16xf32> to vector<4x8xf32>
    %97 = vector.shape_cast %96 : vector<4x8xf32> to vector<4x8x1xf32>
    %98 = tpu.reciprocal %97 {approx = true} : vector<4x8x1xf32> -> vector<4x8x1xf32>
    %99 = vector.broadcast %98 : vector<4x8x1xf32> to vector<4x8x16xf32>
    %100 = arith.mulf %95, %99 : vector<4x8x16xf32>
    %101 = arith.truncf %100 : vector<4x8x16xf32> to vector<4x8x16xbf16>
    %cst_45 = arith.constant dense<0.000000e+00> : vector<4x8x8xf32>
    %102 = tpu.matmul %101, %89, %cst_45 {dimension_numbers = #tpu.dot_dimension_numbers<[2], [1], [1], [2], [0, 0, 0, 1, 1, 2], [0], [0]>} : vector<4x8x16xbf16>, vector<4x16x8xbf16>, vector<4x8x8xf32> -> vector<4x8x8xf32>
    %103 = tpu.concatenate %54, %70, %86, %102 in 2 : vector<4x8x8xf32>, vector<4x8x8xf32>, vector<4x8x8xf32>, vector<4x8x8xf32> -> vector<4x8x32xf32>
    %104 = vector.shape_cast %103 : vector<4x8x32xf32> to vector<32x32xf32>
    %c0_46 = arith.constant 0 : index
    %c3 = arith.constant 3 : index
    %c0_47 = arith.constant 0 : index
    %c0_48 = arith.constant 0 : index
    %105 = vector.load %arg5[%c0_46, %c3, %c0_47, %c0_48] : memref<1x6x32x32xbf16, #tpu.memory_space<vmem>>, vector<1x1x32x32xbf16>
    %106 = vector.shape_cast %105 : vector<1x1x32x32xbf16> to vector<32x32xbf16>
    %c0_49 = arith.constant 0 : index
    %c3_50 = arith.constant 3 : index
    %c0_51 = arith.constant 0 : index
    %107 = vector.load %arg7[%c0_49, %c3_50, %c0_51] : memref<1x12x32xf32, #tpu.memory_space<vmem>>, vector<1x1x32xf32>
    %108 = vector.shape_cast %107 : vector<1x1x32xf32> to vector<1x32xf32>
    %109 = arith.truncf %104 : vector<32x32xf32> to vector<32x32xbf16>
    %cst_52 = arith.constant dense<0.000000e+00> : vector<32x32xf32>
    %110 = tpu.matmul %109, %106, %cst_52 {dimension_numbers = #tpu.dot_dimension_numbers<[1], [0], [0], [1], [0, 0, 1, 1], [], []>} : vector<32x32xbf16>, vector<32x32xbf16>, vector<32x32xf32> -> vector<32x32xf32>
    %111 = vector.broadcast %108 : vector<1x32xf32> to vector<32x32xf32>
    %112 = arith.addf %110, %111 : vector<32x32xf32>
    %113 = arith.addf %4, %112 : vector<32x32xf32>
    %c0_53 = arith.constant 0 : index
    %c4 = arith.constant 4 : index
    %c0_54 = arith.constant 0 : index
    %114 = vector.load %arg7[%c0_53, %c4, %c0_54] : memref<1x12x32xf32, #tpu.memory_space<vmem>>, vector<1x1x32xf32>
    %115 = vector.shape_cast %114 : vector<1x1x32xf32> to vector<1x32xf32>
    %c0_55 = arith.constant 0 : index
    %c5 = arith.constant 5 : index
    %c0_56 = arith.constant 0 : index
    %116 = vector.load %arg7[%c0_55, %c5, %c0_56] : memref<1x12x32xf32, #tpu.memory_space<vmem>>, vector<1x1x32xf32>
    %117 = vector.shape_cast %116 : vector<1x1x32xf32> to vector<1x32xf32>
    %cst_57 = arith.constant dense<0.000000e+00> : vector<32xf32>
    %118 = vector.multi_reduction <add>, %113, %cst_57 [1] : vector<32x32xf32> to vector<32xf32>
    %119 = vector.shape_cast %118 : vector<32xf32> to vector<32x1xf32>
    %cst_58 = arith.constant 3.200000e+01 : f32
    %120 = vector.broadcast %cst_58 : f32 to vector<32x1xf32>
    %121 = arith.divf %119, %120 : vector<32x1xf32>
    %122 = vector.broadcast %121 : vector<32x1xf32> to vector<32x32xf32>
    %123 = arith.subf %113, %122 : vector<32x32xf32>
    %124 = arith.mulf %123, %123 : vector<32x32xf32>
    %cst_59 = arith.constant dense<0.000000e+00> : vector<32xf32>
    %125 = vector.multi_reduction <add>, %124, %cst_59 [1] : vector<32x32xf32> to vector<32xf32>
    %126 = vector.shape_cast %125 : vector<32xf32> to vector<32x1xf32>
    %cst_60 = arith.constant 3.200000e+01 : f32
    %127 = vector.broadcast %cst_60 : f32 to vector<32x1xf32>
    %128 = arith.divf %126, %127 : vector<32x1xf32>
    %cst_61 = arith.constant 9.99999974E-6 : f32
    %129 = vector.broadcast %cst_61 : f32 to vector<32x1xf32>
    %130 = arith.addf %128, %129 : vector<32x1xf32>
    %131 = math.rsqrt %130 : vector<32x1xf32>
    %132 = vector.broadcast %131 : vector<32x1xf32> to vector<32x32xf32>
    %133 = arith.mulf %123, %132 : vector<32x32xf32>
    %134 = vector.broadcast %115 : vector<1x32xf32> to vector<32x32xf32>
    %135 = arith.mulf %133, %134 : vector<32x32xf32>
    %136 = vector.broadcast %117 : vector<1x32xf32> to vector<32x32xf32>
    %137 = arith.addf %135, %136 : vector<32x32xf32>
    %c0_62 = arith.constant 0 : index
    %c4_63 = arith.constant 4 : index
    %c0_64 = arith.constant 0 : index
    %c0_65 = arith.constant 0 : index
    %138 = vector.load %arg5[%c0_62, %c4_63, %c0_64, %c0_65] : memref<1x6x32x32xbf16, #tpu.memory_space<vmem>>, vector<1x1x32x32xbf16>
    %139 = vector.shape_cast %138 : vector<1x1x32x32xbf16> to vector<32x32xbf16>
    %c0_66 = arith.constant 0 : index
    %c6 = arith.constant 6 : index
    %c0_67 = arith.constant 0 : index
    %140 = vector.load %arg7[%c0_66, %c6, %c0_67] : memref<1x12x32xf32, #tpu.memory_space<vmem>>, vector<1x1x32xf32>
    %141 = vector.shape_cast %140 : vector<1x1x32xf32> to vector<1x32xf32>
    %142 = arith.truncf %6 : vector<64x32xf32> to vector<64x32xbf16>
    %cst_68 = arith.constant dense<0.000000e+00> : vector<64x32xf32>
    %143 = tpu.matmul %142, %139, %cst_68 {dimension_numbers = #tpu.dot_dimension_numbers<[1], [0], [0], [1], [0, 0, 1, 1], [], []>} : vector<64x32xbf16>, vector<32x32xbf16>, vector<64x32xf32> -> vector<64x32xf32>
    %144 = vector.broadcast %141 : vector<1x32xf32> to vector<64x32xf32>
    %145 = arith.addf %143, %144 : vector<64x32xf32>
    %c0_69 = arith.constant 0 : index
    %c0_70 = arith.constant 0 : index
    %c0_71 = arith.constant 0 : index
    %146 = vector.load %arg6[%c0_69, %c0_70, %c0_71] : memref<1x32x64xbf16, #tpu.memory_space<vmem>>, vector<1x32x64xbf16>
    %147 = vector.shape_cast %146 : vector<1x32x64xbf16> to vector<32x64xbf16>
    %148 = arith.truncf %137 : vector<32x32xf32> to vector<32x32xbf16>
    %cst_72 = arith.constant dense<0.000000e+00> : vector<32x64xf32>
    %149 = tpu.matmul %148, %147, %cst_72 {dimension_numbers = #tpu.dot_dimension_numbers<[1], [0], [0], [1], [0, 0, 1, 1], [], []>} : vector<32x32xbf16>, vector<32x64xbf16>, vector<32x64xf32> -> vector<32x64xf32>
    %150 = vector.extract_strided_slice %149 {offsets = [0, 0], sizes = [32, 32], strides = [1, 1]} : vector<32x64xf32> to vector<32x32xf32>
    %c0_73 = arith.constant 0 : index
    %c7 = arith.constant 7 : index
    %c0_74 = arith.constant 0 : index
    %151 = vector.load %arg7[%c0_73, %c7, %c0_74] : memref<1x12x32xf32, #tpu.memory_space<vmem>>, vector<1x1x32xf32>
    %152 = vector.shape_cast %151 : vector<1x1x32xf32> to vector<1x32xf32>
    %153 = vector.broadcast %152 : vector<1x32xf32> to vector<32x32xf32>
    %154 = arith.addf %150, %153 : vector<32x32xf32>
    %155 = vector.extract_strided_slice %149 {offsets = [0, 32], sizes = [32, 32], strides = [1, 1]} : vector<32x64xf32> to vector<32x32xf32>
    %c0_75 = arith.constant 0 : index
    %c8 = arith.constant 8 : index
    %c0_76 = arith.constant 0 : index
    %156 = vector.load %arg7[%c0_75, %c8, %c0_76] : memref<1x12x32xf32, #tpu.memory_space<vmem>>, vector<1x1x32xf32>
    %157 = vector.shape_cast %156 : vector<1x1x32xf32> to vector<1x32xf32>
    %158 = vector.broadcast %157 : vector<1x32xf32> to vector<32x32xf32>
    %159 = arith.addf %155, %158 : vector<32x32xf32>
    %160 = vector.shape_cast %145 : vector<64x32xf32> to vector<4x16x32xf32>
    %161 = vector.shape_cast %154 : vector<32x32xf32> to vector<4x8x32xf32>
    %162 = vector.shape_cast %159 : vector<32x32xf32> to vector<4x8x32xf32>
    %163 = arith.truncf %160 : vector<4x16x32xf32> to vector<4x16x32xbf16>
    %164 = arith.truncf %161 : vector<4x8x32xf32> to vector<4x8x32xbf16>
    %165 = arith.truncf %162 : vector<4x8x32xf32> to vector<4x8x32xbf16>
    %166 = vector.extract_strided_slice %163 {offsets = [0, 0, 0], sizes = [4, 16, 8], strides = [1, 1, 1]} : vector<4x16x32xbf16> to vector<4x16x8xbf16>
    %167 = vector.extract_strided_slice %164 {offsets = [0, 0, 0], sizes = [4, 8, 8], strides = [1, 1, 1]} : vector<4x8x32xbf16> to vector<4x8x8xbf16>
    %168 = vector.extract_strided_slice %165 {offsets = [0, 0, 0], sizes = [4, 8, 8], strides = [1, 1, 1]} : vector<4x8x32xbf16> to vector<4x8x8xbf16>
    %cst_77 = arith.constant dense<0.000000e+00> : vector<4x16x8xf32>
    %169 = tpu.matmul %166, %167, %cst_77 {dimension_numbers = #tpu.dot_dimension_numbers<[2], [2], [1], [1], [0, 0, 0, 1, 1, 1], [0], [0]>} : vector<4x16x8xbf16>, vector<4x8x8xbf16>, vector<4x16x8xf32> -> vector<4x16x8xf32>
    %cst_78 = arith.constant dense<0xFF800000> : vector<4x16xf32>
    %170 = vector.multi_reduction <maximumf>, %169, %cst_78 [2] : vector<4x16x8xf32> to vector<4x16xf32>
    %171 = vector.shape_cast %170 : vector<4x16xf32> to vector<4x16x1xf32>
    %172 = vector.broadcast %171 : vector<4x16x1xf32> to vector<4x16x8xf32>
    %173 = arith.subf %169, %172 : vector<4x16x8xf32>
    %174 = math.exp %173 : vector<4x16x8xf32>
    %cst_79 = arith.constant dense<0.000000e+00> : vector<4x16xf32>
    %175 = vector.multi_reduction <add>, %174, %cst_79 [2] : vector<4x16x8xf32> to vector<4x16xf32>
    %176 = vector.shape_cast %175 : vector<4x16xf32> to vector<4x16x1xf32>
    %177 = tpu.reciprocal %176 {approx = true} : vector<4x16x1xf32> -> vector<4x16x1xf32>
    %178 = vector.broadcast %177 : vector<4x16x1xf32> to vector<4x16x8xf32>
    %179 = arith.mulf %174, %178 : vector<4x16x8xf32>
    %180 = arith.truncf %179 : vector<4x16x8xf32> to vector<4x16x8xbf16>
    %cst_80 = arith.constant dense<0.000000e+00> : vector<4x16x8xf32>
    %181 = tpu.matmul %180, %168, %cst_80 {dimension_numbers = #tpu.dot_dimension_numbers<[2], [1], [1], [2], [0, 0, 0, 1, 1, 2], [0], [0]>} : vector<4x16x8xbf16>, vector<4x8x8xbf16>, vector<4x16x8xf32> -> vector<4x16x8xf32>
    %182 = vector.extract_strided_slice %163 {offsets = [0, 0, 8], sizes = [4, 16, 8], strides = [1, 1, 1]} : vector<4x16x32xbf16> to vector<4x16x8xbf16>
    %183 = vector.extract_strided_slice %164 {offsets = [0, 0, 8], sizes = [4, 8, 8], strides = [1, 1, 1]} : vector<4x8x32xbf16> to vector<4x8x8xbf16>
    %184 = vector.extract_strided_slice %165 {offsets = [0, 0, 8], sizes = [4, 8, 8], strides = [1, 1, 1]} : vector<4x8x32xbf16> to vector<4x8x8xbf16>
    %cst_81 = arith.constant dense<0.000000e+00> : vector<4x16x8xf32>
    %185 = tpu.matmul %182, %183, %cst_81 {dimension_numbers = #tpu.dot_dimension_numbers<[2], [2], [1], [1], [0, 0, 0, 1, 1, 1], [0], [0]>} : vector<4x16x8xbf16>, vector<4x8x8xbf16>, vector<4x16x8xf32> -> vector<4x16x8xf32>
    %cst_82 = arith.constant dense<0xFF800000> : vector<4x16xf32>
    %186 = vector.multi_reduction <maximumf>, %185, %cst_82 [2] : vector<4x16x8xf32> to vector<4x16xf32>
    %187 = vector.shape_cast %186 : vector<4x16xf32> to vector<4x16x1xf32>
    %188 = vector.broadcast %187 : vector<4x16x1xf32> to vector<4x16x8xf32>
    %189 = arith.subf %185, %188 : vector<4x16x8xf32>
    %190 = math.exp %189 : vector<4x16x8xf32>
    %cst_83 = arith.constant dense<0.000000e+00> : vector<4x16xf32>
    %191 = vector.multi_reduction <add>, %190, %cst_83 [2] : vector<4x16x8xf32> to vector<4x16xf32>
    %192 = vector.shape_cast %191 : vector<4x16xf32> to vector<4x16x1xf32>
    %193 = tpu.reciprocal %192 {approx = true} : vector<4x16x1xf32> -> vector<4x16x1xf32>
    %194 = vector.broadcast %193 : vector<4x16x1xf32> to vector<4x16x8xf32>
    %195 = arith.mulf %190, %194 : vector<4x16x8xf32>
    %196 = arith.truncf %195 : vector<4x16x8xf32> to vector<4x16x8xbf16>
    %cst_84 = arith.constant dense<0.000000e+00> : vector<4x16x8xf32>
    %197 = tpu.matmul %196, %184, %cst_84 {dimension_numbers = #tpu.dot_dimension_numbers<[2], [1], [1], [2], [0, 0, 0, 1, 1, 2], [0], [0]>} : vector<4x16x8xbf16>, vector<4x8x8xbf16>, vector<4x16x8xf32> -> vector<4x16x8xf32>
    %198 = vector.extract_strided_slice %163 {offsets = [0, 0, 16], sizes = [4, 16, 8], strides = [1, 1, 1]} : vector<4x16x32xbf16> to vector<4x16x8xbf16>
    %199 = vector.extract_strided_slice %164 {offsets = [0, 0, 16], sizes = [4, 8, 8], strides = [1, 1, 1]} : vector<4x8x32xbf16> to vector<4x8x8xbf16>
    %200 = vector.extract_strided_slice %165 {offsets = [0, 0, 16], sizes = [4, 8, 8], strides = [1, 1, 1]} : vector<4x8x32xbf16> to vector<4x8x8xbf16>
    %cst_85 = arith.constant dense<0.000000e+00> : vector<4x16x8xf32>
    %201 = tpu.matmul %198, %199, %cst_85 {dimension_numbers = #tpu.dot_dimension_numbers<[2], [2], [1], [1], [0, 0, 0, 1, 1, 1], [0], [0]>} : vector<4x16x8xbf16>, vector<4x8x8xbf16>, vector<4x16x8xf32> -> vector<4x16x8xf32>
    %cst_86 = arith.constant dense<0xFF800000> : vector<4x16xf32>
    %202 = vector.multi_reduction <maximumf>, %201, %cst_86 [2] : vector<4x16x8xf32> to vector<4x16xf32>
    %203 = vector.shape_cast %202 : vector<4x16xf32> to vector<4x16x1xf32>
    %204 = vector.broadcast %203 : vector<4x16x1xf32> to vector<4x16x8xf32>
    %205 = arith.subf %201, %204 : vector<4x16x8xf32>
    %206 = math.exp %205 : vector<4x16x8xf32>
    %cst_87 = arith.constant dense<0.000000e+00> : vector<4x16xf32>
    %207 = vector.multi_reduction <add>, %206, %cst_87 [2] : vector<4x16x8xf32> to vector<4x16xf32>
    %208 = vector.shape_cast %207 : vector<4x16xf32> to vector<4x16x1xf32>
    %209 = tpu.reciprocal %208 {approx = true} : vector<4x16x1xf32> -> vector<4x16x1xf32>
    %210 = vector.broadcast %209 : vector<4x16x1xf32> to vector<4x16x8xf32>
    %211 = arith.mulf %206, %210 : vector<4x16x8xf32>
    %212 = arith.truncf %211 : vector<4x16x8xf32> to vector<4x16x8xbf16>
    %cst_88 = arith.constant dense<0.000000e+00> : vector<4x16x8xf32>
    %213 = tpu.matmul %212, %200, %cst_88 {dimension_numbers = #tpu.dot_dimension_numbers<[2], [1], [1], [2], [0, 0, 0, 1, 1, 2], [0], [0]>} : vector<4x16x8xbf16>, vector<4x8x8xbf16>, vector<4x16x8xf32> -> vector<4x16x8xf32>
    %214 = vector.extract_strided_slice %163 {offsets = [0, 0, 24], sizes = [4, 16, 8], strides = [1, 1, 1]} : vector<4x16x32xbf16> to vector<4x16x8xbf16>
    %215 = vector.extract_strided_slice %164 {offsets = [0, 0, 24], sizes = [4, 8, 8], strides = [1, 1, 1]} : vector<4x8x32xbf16> to vector<4x8x8xbf16>
    %216 = vector.extract_strided_slice %165 {offsets = [0, 0, 24], sizes = [4, 8, 8], strides = [1, 1, 1]} : vector<4x8x32xbf16> to vector<4x8x8xbf16>
    %cst_89 = arith.constant dense<0.000000e+00> : vector<4x16x8xf32>
    %217 = tpu.matmul %214, %215, %cst_89 {dimension_numbers = #tpu.dot_dimension_numbers<[2], [2], [1], [1], [0, 0, 0, 1, 1, 1], [0], [0]>} : vector<4x16x8xbf16>, vector<4x8x8xbf16>, vector<4x16x8xf32> -> vector<4x16x8xf32>
    %cst_90 = arith.constant dense<0xFF800000> : vector<4x16xf32>
    %218 = vector.multi_reduction <maximumf>, %217, %cst_90 [2] : vector<4x16x8xf32> to vector<4x16xf32>
    %219 = vector.shape_cast %218 : vector<4x16xf32> to vector<4x16x1xf32>
    %220 = vector.broadcast %219 : vector<4x16x1xf32> to vector<4x16x8xf32>
    %221 = arith.subf %217, %220 : vector<4x16x8xf32>
    %222 = math.exp %221 : vector<4x16x8xf32>
    %cst_91 = arith.constant dense<0.000000e+00> : vector<4x16xf32>
    %223 = vector.multi_reduction <add>, %222, %cst_91 [2] : vector<4x16x8xf32> to vector<4x16xf32>
    %224 = vector.shape_cast %223 : vector<4x16xf32> to vector<4x16x1xf32>
    %225 = tpu.reciprocal %224 {approx = true} : vector<4x16x1xf32> -> vector<4x16x1xf32>
    %226 = vector.broadcast %225 : vector<4x16x1xf32> to vector<4x16x8xf32>
    %227 = arith.mulf %222, %226 : vector<4x16x8xf32>
    %228 = arith.truncf %227 : vector<4x16x8xf32> to vector<4x16x8xbf16>
    %cst_92 = arith.constant dense<0.000000e+00> : vector<4x16x8xf32>
    %229 = tpu.matmul %228, %216, %cst_92 {dimension_numbers = #tpu.dot_dimension_numbers<[2], [1], [1], [2], [0, 0, 0, 1, 1, 2], [0], [0]>} : vector<4x16x8xbf16>, vector<4x8x8xbf16>, vector<4x16x8xf32> -> vector<4x16x8xf32>
    %230 = tpu.concatenate %181, %197, %213, %229 in 2 : vector<4x16x8xf32>, vector<4x16x8xf32>, vector<4x16x8xf32>, vector<4x16x8xf32> -> vector<4x16x32xf32>
    %231 = vector.shape_cast %230 : vector<4x16x32xf32> to vector<64x32xf32>
    %c0_93 = arith.constant 0 : index
    %c5_94 = arith.constant 5 : index
    %c0_95 = arith.constant 0 : index
    %c0_96 = arith.constant 0 : index
    %232 = vector.load %arg5[%c0_93, %c5_94, %c0_95, %c0_96] : memref<1x6x32x32xbf16, #tpu.memory_space<vmem>>, vector<1x1x32x32xbf16>
    %233 = vector.shape_cast %232 : vector<1x1x32x32xbf16> to vector<32x32xbf16>
    %c0_97 = arith.constant 0 : index
    %c9 = arith.constant 9 : index
    %c0_98 = arith.constant 0 : index
    %234 = vector.load %arg7[%c0_97, %c9, %c0_98] : memref<1x12x32xf32, #tpu.memory_space<vmem>>, vector<1x1x32xf32>
    %235 = vector.shape_cast %234 : vector<1x1x32xf32> to vector<1x32xf32>
    %236 = arith.truncf %231 : vector<64x32xf32> to vector<64x32xbf16>
    %cst_99 = arith.constant dense<0.000000e+00> : vector<64x32xf32>
    %237 = tpu.matmul %236, %233, %cst_99 {dimension_numbers = #tpu.dot_dimension_numbers<[1], [0], [0], [1], [0, 0, 1, 1], [], []>} : vector<64x32xbf16>, vector<32x32xbf16>, vector<64x32xf32> -> vector<64x32xf32>
    %238 = vector.broadcast %235 : vector<1x32xf32> to vector<64x32xf32>
    %239 = arith.addf %237, %238 : vector<64x32xf32>
    %240 = arith.addf %6, %239 : vector<64x32xf32>
    %c0_100 = arith.constant 0 : index
    %c10 = arith.constant 10 : index
    %c0_101 = arith.constant 0 : index
    %241 = vector.load %arg7[%c0_100, %c10, %c0_101] : memref<1x12x32xf32, #tpu.memory_space<vmem>>, vector<1x1x32xf32>
    %242 = vector.shape_cast %241 : vector<1x1x32xf32> to vector<1x32xf32>
    %c0_102 = arith.constant 0 : index
    %c11 = arith.constant 11 : index
    %c0_103 = arith.constant 0 : index
    %243 = vector.load %arg7[%c0_102, %c11, %c0_103] : memref<1x12x32xf32, #tpu.memory_space<vmem>>, vector<1x1x32xf32>
    %244 = vector.shape_cast %243 : vector<1x1x32xf32> to vector<1x32xf32>
    %cst_104 = arith.constant dense<0.000000e+00> : vector<64xf32>
    %245 = vector.multi_reduction <add>, %240, %cst_104 [1] : vector<64x32xf32> to vector<64xf32>
    %246 = vector.shape_cast %245 : vector<64xf32> to vector<64x1xf32>
    %cst_105 = arith.constant 3.200000e+01 : f32
    %247 = vector.broadcast %cst_105 : f32 to vector<64x1xf32>
    %248 = arith.divf %246, %247 : vector<64x1xf32>
    %249 = vector.broadcast %248 : vector<64x1xf32> to vector<64x32xf32>
    %250 = arith.subf %240, %249 : vector<64x32xf32>
    %251 = arith.mulf %250, %250 : vector<64x32xf32>
    %cst_106 = arith.constant dense<0.000000e+00> : vector<64xf32>
    %252 = vector.multi_reduction <add>, %251, %cst_106 [1] : vector<64x32xf32> to vector<64xf32>
    %253 = vector.shape_cast %252 : vector<64xf32> to vector<64x1xf32>
    %cst_107 = arith.constant 3.200000e+01 : f32
    %254 = vector.broadcast %cst_107 : f32 to vector<64x1xf32>
    %255 = arith.divf %253, %254 : vector<64x1xf32>
    %cst_108 = arith.constant 9.99999974E-6 : f32
    %256 = vector.broadcast %cst_108 : f32 to vector<64x1xf32>
    %257 = arith.addf %255, %256 : vector<64x1xf32>
    %258 = math.rsqrt %257 : vector<64x1xf32>
    %259 = vector.broadcast %258 : vector<64x1xf32> to vector<64x32xf32>
    %260 = arith.mulf %250, %259 : vector<64x32xf32>
    %261 = vector.broadcast %242 : vector<1x32xf32> to vector<64x32xf32>
    %262 = arith.mulf %260, %261 : vector<64x32xf32>
    %263 = vector.broadcast %244 : vector<1x32xf32> to vector<64x32xf32>
    %264 = arith.addf %262, %263 : vector<64x32xf32>
    %265 = vector.shape_cast %137 : vector<32x32xf32> to vector<4x8x32xf32>
    %c0_109 = arith.constant 0 : index
    %c0_110 = arith.constant 0 : index
    %c0_111 = arith.constant 0 : index
    %266 = vector.load %arg10[%c0_109, %c0_110, %c0_111] : memref<4x8x32xf32, #tpu.memory_space<vmem>>, vector<4x8x32xf32>
    tpu.vector_store %arg10[%c0_109, %c0_110, %c0_111], %265 {strides = array<i32>} : memref<4x8x32xf32, #tpu.memory_space<vmem>>, vector<4x8x32xf32>,
    %267 = vector.shape_cast %264 : vector<64x32xf32> to vector<4x16x32xf32>
    %c0_112 = arith.constant 0 : index
    %c0_113 = arith.constant 0 : index
    %c0_114 = arith.constant 0 : index
    %268 = vector.load %arg11[%c0_112, %c0_113, %c0_114] : memref<4x16x32xf32, #tpu.memory_space<vmem>>, vector<4x16x32xf32>
    tpu.vector_store %arg11[%c0_112, %c0_113, %c0_114], %267 {strides = array<i32>} : memref<4x16x32xf32, #tpu.memory_space<vmem>>, vector<4x16x32xf32>,
    %c1_i32 = arith.constant 1 : i32
    %269 = arith.cmpi eq, %arg1, %c1_i32 : i32
    %270 = arith.extui %269 : i1 to i32
    %c0_i32_115 = arith.constant 0 : i32
    %271 = arith.cmpi ne, %270, %c0_i32_115 : i32
    scf.if %271 {
      %272 = vector.shape_cast %137 : vector<32x32xf32> to vector<4x8x32xf32>
      %c0_116 = arith.constant 0 : index
      %c0_117 = arith.constant 0 : index
      %c0_118 = arith.constant 0 : index
      %273 = vector.load %arg8[%c0_116, %c0_117, %c0_118] : memref<4x8x32xf32, #tpu.memory_space<vmem>>, vector<4x8x32xf32>
      tpu.vector_store %arg8[%c0_116, %c0_117, %c0_118], %272 {strides = array<i32>} : memref<4x8x32xf32, #tpu.memory_space<vmem>>, vector<4x8x32xf32>,
      %274 = vector.shape_cast %264 : vector<64x32xf32> to vector<4x16x32xf32>
      %c0_119 = arith.constant 0 : index
      %c0_120 = arith.constant 0 : index
      %c0_121 = arith.constant 0 : index
      %275 = vector.load %arg9[%c0_119, %c0_120, %c0_121] : memref<4x16x32xf32, #tpu.memory_space<vmem>>, vector<4x16x32xf32>
      tpu.vector_store %arg9[%c0_119, %c0_120, %c0_121], %274 {strides = array<i32>} : memref<4x16x32xf32, #tpu.memory_space<vmem>>, vector<4x16x32xf32>,
    } else {
    }
    return
  }
  func.func @transform_0(%arg0: i32, %arg1: i32) -> (i32, i32, i32) {
    %c0_i32 = arith.constant 0 : i32
    %c0_i32_0 = arith.constant 0 : i32
    %c0_i32_1 = arith.constant 0 : i32
    return %arg0, %c0_i32, %c0_i32_0 : i32, i32, i32
  }
  func.func @transform_1(%arg0: i32, %arg1: i32) -> (i32, i32, i32) {
    %c0_i32 = arith.constant 0 : i32
    %c0_i32_0 = arith.constant 0 : i32
    %c0_i32_1 = arith.constant 0 : i32
    return %arg0, %c0_i32, %c0_i32_0 : i32, i32, i32
  }
  func.func @transform_2(%arg0: i32, %arg1: i32) -> (i32, i32, i32) {
    %c0_i32 = arith.constant 0 : i32
    %c0_i32_0 = arith.constant 0 : i32
    %c0_i32_1 = arith.constant 0 : i32
    return %arg0, %c0_i32, %c0_i32_0 : i32, i32, i32
  }
  func.func @transform_3(%arg0: i32, %arg1: i32) -> (i32, i32, i32, i32) {
    %c0_i32 = arith.constant 0 : i32
    %c0_i32_0 = arith.constant 0 : i32
    %c0_i32_1 = arith.constant 0 : i32
    %c0_i32_2 = arith.constant 0 : i32
    return %arg1, %c0_i32, %c0_i32_0, %c0_i32_1 : i32, i32, i32, i32
  }
  func.func @transform_4(%arg0: i32, %arg1: i32) -> (i32, i32, i32) {
    %c0_i32 = arith.constant 0 : i32
    %c0_i32_0 = arith.constant 0 : i32
    %c0_i32_1 = arith.constant 0 : i32
    return %arg1, %c0_i32, %c0_i32_0 : i32, i32, i32
  }
  func.func @transform_5(%arg0: i32, %arg1: i32) -> (i32, i32, i32) {
    %c0_i32 = arith.constant 0 : i32
    %c0_i32_0 = arith.constant 0 : i32
    %c0_i32_1 = arith.constant 0 : i32
    return %arg1, %c0_i32, %c0_i32_0 : i32, i32, i32
  }
  func.func @transform_6(%arg0: i32, %arg1: i32) -> (i32, i32, i32) {
    %c0_i32 = arith.constant 0 : i32
    %c0_i32_0 = arith.constant 0 : i32
    %c0_i32_1 = arith.constant 0 : i32
    return %arg0, %c0_i32, %c0_i32_0 : i32, i32, i32
  }
  func.func @transform_7(%arg0: i32, %arg1: i32) -> (i32, i32, i32) {
    %c0_i32 = arith.constant 0 : i32
    %c0_i32_0 = arith.constant 0 : i32
    %c0_i32_1 = arith.constant 0 : i32
    return %arg0, %c0_i32, %c0_i32_0 : i32, i32, i32
  }
}

</mosaic_0001>

<llo_original>
// kernel: tpu_custom_call.1
$region0: #{tpu_custom_call.1}
  #allocation0 [shape = 'u32[]', space=smem, size = 0x4, offset = 0x4, fixed_abs, tag = 'smem constant byte address 0x4 - core index']
  #allocation1 [shape = 'u32[144,128]{1,0:T(1,128)}', space=vmem, size = 0x12000, scoped, tag = 'internal scratch']
  #allocation2 [shape = 'f32[4,8,32]{2,1,0:T(8,128)}', space=vmem, size = 0x4000, scoped, tag = 'scratch operand']
  #allocation3 [shape = 'f32[4,16,32]{2,1,0:T(8,128)}', space=vmem, size = 0x8000, scoped, tag = 'scratch operand']
  %s0 = inlined_call_operand.hbm [shape: f32[8,8,32], index: 0, kind: input, shape index: {}]
  %s1 = inlined_call_operand.hbm [shape: f32[8,16,32], index: 1, kind: input, shape index: {}]
  %s2 = inlined_call_operand.hbm [shape: f32[8,16,32], index: 2, kind: input, shape index: {}]
  %s3 = inlined_call_operand.hbm [shape: bf16[2,6,32,32], index: 3, kind: input, shape index: {}]
  %s4 = inlined_call_operand.vmem [shape: bf16[2,32,64], index: 4, kind: input, shape index: {}]
  %s5 = inlined_call_operand.vmem [shape: f32[2,12,32], index: 5, kind: input, shape index: {}]
  %s6 = inlined_call_operand.hbm [shape: f32[8,8,32], index: 6, kind: output, shape index: {0}]
  %s7 = inlined_call_operand.hbm [shape: f32[8,16,32], index: 7, kind: output, shape index: {1}]
  %8 = xla_tuple %s6, %s7
  %s9 = sld [smem:[#allocation0]]
  $region89: #{tpu_custom_call.1} parent=0
    _
  %s11 = ssub.s32 1, %s9
  %s12 = scalar_select 0, %s11, %s9
  $region1: #{tpu_custom_call.1} parent=0
    #allocation4 [shape = 'u8[32768]{0}', space=vmem, size = 0x8000, scoped, tag = 'input window, operand 0']
    #allocation5 [shape = 's32[2]{0}', space=sflag, size = 0x8, scoped, tag = 'scoped memory for tpu_custom_call.1']
    #allocation6 [shape = 's32[2]{0}', space=sflag, size = 0x8, scoped, tag = 'scoped memory for tpu_custom_call.1']
    #allocation7 [shape = 'u8[65536]{0}', space=vmem, size = 0x10000, scoped, tag = 'input window, operand 1']
    #allocation8 [shape = 's32[2]{0}', space=sflag, size = 0x8, scoped, tag = 'scoped memory for tpu_custom_call.1']
    #allocation9 [shape = 'u8[65536]{0}', space=vmem, size = 0x10000, scoped, tag = 'input window, operand 2']
    #allocation10 [shape = 'u8[98304]{0}', space=vmem, size = 0x18000, scoped, tag = 'input window, operand 3']
    #allocation11 [shape = 's32[2]{0}', space=sflag, size = 0x8, scoped, tag = 'scoped memory for tpu_custom_call.1']
    #allocation12 [shape = 'u8[32768]{0}', space=vmem, size = 0x8000, scoped, tag = 'output window, operand 0']
    #allocation13 [shape = 'u8[65536]{0}', space=vmem, size = 0x10000, scoped, tag = 'output window, operand 1']
    #allocation14 [shape = 's32[2]{0}', space=sflag, size = 0x8, scoped, tag = 'scoped memory for tpu_custom_call.1']
    %13 = vsyncpa [#allocation5], 0
    %s14 = scalar_lea.sflag [#allocation5], 1
    %15 = vsyncpa %s14, 0
    %16 = vsyncpa [#allocation8], 0
    %s17 = scalar_lea.sflag [#allocation8], 1
    %18 = vsyncpa %s17, 0
    %19 = vsyncpa [#allocation11], 0
    %s20 = scalar_lea.sflag [#allocation11], 1
    %21 = vsyncpa %s20, 0
    %22 = vsyncpa [#allocation6], 0
    %s23 = scalar_lea.sflag [#allocation6], 1
    %24 = vsyncpa %s23, 0
    %25 = vsyncpa [#allocation14], 0
    %s26 = scalar_lea.sflag [#allocation14], 1
    %27 = vsyncpa %s26, 0
    loop: start=0, step=1, limit=6
    $region2: #{tpu_custom_call.1} parent=1 // loop_pre_header
      _
    $region3: #{tpu_custom_call.1} parent=1 // loop_header
      %s29 = sphi 0, %s33
      %p30 = scmp.ge.s32.totalorder %s29, 6
      %s36 = sphi 0, %s48
      %s37 = sphi 0, %s44
      %s38 = sphi 0, %s36
      %s39 = sphi 0, %s37
      %s40 = sphi 0, %s38
      %s41 = sphi 0, %s39
      %s51 = sphi 0, %s53
      %s54 = sphi 0, %s51
      %s55 = sphi 0, %s54
      %s71 = sphi 0, %s55
      %s77 = sphi 0, %s79
      %s80 = sphi 0, %s77
      %s81 = sphi 0, %s80
      %s97 = sphi 0, %s81
      %s103 = sphi 0, %s105
      %s106 = sphi 0, %s103
      %s107 = sphi 0, %s106
      %s123 = sphi 0, %s107
      %s129 = sphi 0, %s131
      %s132 = sphi 0, %s129
      %s133 = sphi 0, %s132
      %s149 = sphi 0, %s133
      %s155 = sphi 0, %s157
      %s158 = sphi 0, %s155
      %s159 = sphi 0, %s158
      %s175 = sphi 0, %s159
      %s181 = sphi 0, %s183
      %s184 = sphi 0, %s181
      %s185 = sphi 0, %s184
      %s201 = sphi 0, %s185
      %s207 = sphi 0, %s209
      %s210 = sphi 0, %s207
      %s211 = sphi 0, %s210
      %s227 = sphi 0, %s211
      %s233 = sphi 0, %s235
      %s236 = sphi 0, %s233
      %s237 = sphi 0, %s236
      %s253 = sphi 0, %s237
    $region4: #{tpu_custom_call.1} parent=1 // loop_header_branch
      %32 = sbr.rel (%p30) target = $region8
    $region5: #{tpu_custom_call.1} parent=1 // loop_body
      %s34 = ssub.s32 %s29, 1
      %s35 = ssub.s32 %s29, 2
      %s42 = sadd.s32 1, %s37
      %p43 = scmp.ge.s32.totalorder %s42, 2
      %s44 = scalar_select %p43, 0, %s42
      %s45 = sadd.s32 1, %s36
      %s46 = scalar_select %p43, %s45, %s36
      %p47 = scmp.ge.s32.totalorder %s46, 2
      %s48 = scalar_select %p47, 0, %s46
      %s49 = ssub.s32 %s36, %s48
      %p50 = scmp.eq.s32.totalorder %s49, 0
      %s52 = sadd.s32 %s51, 1
      %s53 = scalar_select %p50, %s51, %s52
      %p56 = pneg %p50
      %p57 = scmp.eq.s32.totalorder %s29, 3
      %p58 = por %p56, %p57
      %p59 = scmp.ne.s32.totalorder %s51, %s54
      %p60 = scmp.eq.s32.totalorder %s29, 0
      %p61 = por %p59, %p60
      %p62 = scmp.ne.s32.totalorder %s51, %s54
      %p63 = scmp.eq.s32.totalorder %s34, 3
      %p64 = por %p62, %p63
      %p65 = scmp.ne.s32.totalorder %s54, %s55
      %p66 = scmp.eq.s32.totalorder %s34, 0
      %p67 = por %p65, %p66
      %p68 = scmp.ne.s32.totalorder %s54, %s55
      %p69 = scmp.eq.s32.totalorder %s35, 3
      %p70 = por %p68, %p69
      %p72 = scmp.ne.s32.totalorder %s55, %s71
      %p73 = scmp.eq.s32.totalorder %s35, 0
      %p74 = por %p72, %p73
      %s75 = ssub.s32 %s36, %s48
      %p76 = scmp.eq.s32.totalorder %s75, 0
      %s78 = sadd.s32 %s77, 1
      %s79 = scalar_select %p76, %s77, %s78
      %p82 = pneg %p76
      %p83 = scmp.eq.s32.totalorder %s29, 3
      %p84 = por %p82, %p83
      %p85 = scmp.ne.s32.totalorder %s77, %s80
      %p86 = scmp.eq.s32.totalorder %s29, 0
      %p87 = por %p85, %p86
      %p88 = scmp.ne.s32.totalorder %s77, %s80
      %p89 = scmp.eq.s32.totalorder %s34, 3
      %p90 = por %p88, %p89
      %p91 = scmp.ne.s32.totalorder %s80, %s81
      %p92 = scmp.eq.s32.totalorder %s34, 0
      %p93 = por %p91, %p92
      %p94 = scmp.ne.s32.totalorder %s80, %s81
      %p95 = scmp.eq.s32.totalorder %s35, 3
      %p96 = por %p94, %p95
      %p98 = scmp.ne.s32.totalorder %s81, %s97
      %p99 = scmp.eq.s32.totalorder %s35, 0
      %p100 = por %p98, %p99
      %s101 = ssub.s32 %s36, %s48
      %p102 = scmp.eq.s32.totalorder %s101, 0
      %s104 = sadd.s32 %s103, 1
      %s105 = scalar_select %p102, %s103, %s104
      %p108 = pneg %p102
      %p109 = scmp.eq.s32.totalorder %s29, 3
      %p110 = por %p108, %p109
      %p111 = scmp.ne.s32.totalorder %s103, %s106
      %p112 = scmp.eq.s32.totalorder %s29, 0
      %p113 = por %p111, %p112
      %p114 = scmp.ne.s32.totalorder %s103, %s106
      %p115 = scmp.eq.s32.totalorder %s34, 3
      %p116 = por %p114, %p115
      %p117 = scmp.ne.s32.totalorder %s106, %s107
      %p118 = scmp.eq.s32.totalorder %s34, 0
      %p119 = por %p117, %p118
      %p120 = scmp.ne.s32.totalorder %s106, %s107
      %p121 = scmp.eq.s32.totalorder %s35, 3
      %p122 = por %p120, %p121
      %p124 = scmp.ne.s32.totalorder %s107, %s123
      %p125 = scmp.eq.s32.totalorder %s35, 0
      %p126 = por %p124, %p125
      %s127 = ssub.s32 %s37, %s44
      %p128 = scmp.eq.s32.totalorder %s127, 0
      %s130 = sadd.s32 %s129, 1
      %s131 = scalar_select %p128, %s129, %s130
      %p134 = pneg %p128
      %p135 = scmp.eq.s32.totalorder %s29, 3
      %p136 = por %p134, %p135
      %p137 = scmp.ne.s32.totalorder %s129, %s132
      %p138 = scmp.eq.s32.totalorder %s29, 0
      %p139 = por %p137, %p138
      %p140 = scmp.ne.s32.totalorder %s129, %s132
      %p141 = scmp.eq.s32.totalorder %s34, 3
      %p142 = por %p140, %p141
      %p143 = scmp.ne.s32.totalorder %s132, %s133
      %p144 = scmp.eq.s32.totalorder %s34, 0
      %p145 = por %p143, %p144
      %p146 = scmp.ne.s32.totalorder %s132, %s133
      %p147 = scmp.eq.s32.totalorder %s35, 3
      %p148 = por %p146, %p147
      %p150 = scmp.ne.s32.totalorder %s133, %s149
      %p151 = scmp.eq.s32.totalorder %s35, 0
      %p152 = por %p150, %p151
      %s153 = ssub.s32 %s37, %s44
      %p154 = scmp.eq.s32.totalorder %s153, 0
      %s156 = sadd.s32 %s155, 1
      %s157 = scalar_select %p154, %s155, %s156
      %p160 = pneg %p154
      %p161 = scmp.eq.s32.totalorder %s29, 3
      %p162 = por %p160, %p161
      %p163 = scmp.ne.s32.totalorder %s155, %s158
      %p164 = scmp.eq.s32.totalorder %s29, 0
      %p165 = por %p163, %p164
      %p166 = scmp.ne.s32.totalorder %s155, %s158
      %p167 = scmp.eq.s32.totalorder %s34, 3
      %p168 = por %p166, %p167
      %p169 = scmp.ne.s32.totalorder %s158, %s159
      %p170 = scmp.eq.s32.totalorder %s34, 0
      %p171 = por %p169, %p170
      %p172 = scmp.ne.s32.totalorder %s158, %s159
      %p173 = scmp.eq.s32.totalorder %s35, 3
      %p174 = por %p172, %p173
      %p176 = scmp.ne.s32.totalorder %s159, %s175
      %p177 = scmp.eq.s32.totalorder %s35, 0
      %p178 = por %p176, %p177
      %s179 = ssub.s32 %s37, %s44
      %p180 = scmp.eq.s32.totalorder %s179, 0
      %s182 = sadd.s32 %s181, 1
      %s183 = scalar_select %p180, %s181, %s182
      %p186 = pneg %p180
      %p187 = scmp.eq.s32.totalorder %s29, 3
      %p188 = por %p186, %p187
      %p189 = scmp.ne.s32.totalorder %s181, %s184
      %p190 = scmp.eq.s32.totalorder %s29, 0
      %p191 = por %p189, %p190
      %p192 = scmp.ne.s32.totalorder %s181, %s184
      %p193 = scmp.eq.s32.totalorder %s34, 3
      %p194 = por %p192, %p193
      %p195 = scmp.ne.s32.totalorder %s184, %s185
      %p196 = scmp.eq.s32.totalorder %s34, 0
      %p197 = por %p195, %p196
      %p198 = scmp.ne.s32.totalorder %s184, %s185
      %p199 = scmp.eq.s32.totalorder %s35, 3
      %p200 = por %p198, %p199
      %p202 = scmp.ne.s32.totalorder %s185, %s201
      %p203 = scmp.eq.s32.totalorder %s35, 0
      %p204 = por %p202, %p203
      %s205 = ssub.s32 %s36, %s48
      %p206 = scmp.eq.s32.totalorder %s205, 0
      %s208 = sadd.s32 %s207, 1
      %s209 = scalar_select %p206, %s207, %s208
      %p212 = pneg %p206
      %p213 = scmp.eq.s32.totalorder %s29, 3
      %p214 = por %p212, %p213
      %p215 = scmp.ne.s32.totalorder %s207, %s210
      %p216 = scmp.eq.s32.totalorder %s29, 0
      %p217 = por %p215, %p216
      %p218 = scmp.ne.s32.totalorder %s207, %s210
      %p219 = scmp.eq.s32.totalorder %s34, 3
      %p220 = por %p218, %p219
      %p221 = scmp.ne.s32.totalorder %s210, %s211
      %p222 = scmp.eq.s32.totalorder %s34, 0
      %p223 = por %p221, %p222
      %p224 = scmp.ne.s32.totalorder %s210, %s211
      %p225 = scmp.eq.s32.totalorder %s35, 3
      %p226 = por %p224, %p225
      %p228 = scmp.ne.s32.totalorder %s211, %s227
      %p229 = scmp.eq.s32.totalorder %s35, 0
      %p230 = por %p228, %p229
      %s231 = ssub.s32 %s36, %s48
      %p232 = scmp.eq.s32.totalorder %s231, 0
      %s234 = sadd.s32 %s233, 1
      %s235 = scalar_select %p232, %s233, %s234
      %p238 = pneg %p232
      %p239 = scmp.eq.s32.totalorder %s29, 3
      %p240 = por %p238, %p239
      %p241 = scmp.ne.s32.totalorder %s233, %s236
      %p242 = scmp.eq.s32.totalorder %s29, 0
      %p243 = por %p241, %p242
      %p244 = scmp.ne.s32.totalorder %s233, %s236
      %p245 = scmp.eq.s32.totalorder %s34, 3
      %p246 = por %p244, %p245
      %p247 = scmp.ne.s32.totalorder %s236, %s237
      %p248 = scmp.eq.s32.totalorder %s34, 0
      %p249 = por %p247, %p248
      %p250 = scmp.ne.s32.totalorder %s236, %s237
      %p251 = scmp.eq.s32.totalorder %s35, 3
      %p252 = por %p250, %p251
      %p254 = scmp.ne.s32.totalorder %s237, %s253
      %p255 = scmp.eq.s32.totalorder %s35, 0
      %p256 = por %p254, %p255
      %p257 = scmp.le.s32.totalorder 1, %s29
      %p258 = scmp.lt.s32.totalorder %s29, 5
      %p259 = pnand %p257, %p258
      %p260 = pneg %p259
      // Predicated region
      $region9: #{tpu_custom_call.1} parent=5 // pred_check
        _
      $region10: #{tpu_custom_call.1} parent=5 // pred_check_branch
        %262 = sbr.rel (%p259) target = $region12
      $region11: #{tpu_custom_call.1} parent=5 // pred_region
        %s263 = ssub.s32 %s29, 1
      $region12: #{tpu_custom_call.1} parent=5 // pred_fallthru
        _
      %p264 = scmp.lt.s32.totalorder %s29, 4
      // Predicated region
      $region13: #{tpu_custom_call.1} parent=5 // pred_check
        %p265 = pneg %p264
      $region14: #{tpu_custom_call.1} parent=5 // pred_check_branch
        %267 = sbr.rel (%p265) target = $region16
      $region15: #{tpu_custom_call.1} parent=5 // pred_region
        // Predicated region
        $region17: #{tpu_custom_call.1} parent=15 // pred_check
          %p268 = pneg %p61
        $region18: #{tpu_custom_call.1} parent=15 // pred_check_branch
          %270 = sbr.rel (%p268) target = $region20
        $region19: #{tpu_custom_call.1} parent=15 // pred_region
          %s271 = sand.u32 %s51, 1
          %s272 = scalar_lea.sflag [#allocation5], %s271
          %s273 = sand.u32 %s51, 1
          %s274 = smul.addr %s273, 32
          %s275 = scalar_lea.vmem [#allocation4], %s274
          %s276 = smul.u32 4, %s36
          %s278 = ssub.s32 512, 512
          %279 = vsyncadd %s272, %s278
          %s280 = smul.addr %s276, 128
          %s281 = scalar_lea.hbm %s0, %s280
          %s282 = sshll.u32 %s275, 4
          %s283 = int_to_ptr.vmem [resolvable:$true] %s282
          %288 = dma.hbm_to_vmem [thread:$0]  %s281, 512, %s283, %s272, 128, 128, 8
        $region20: #{tpu_custom_call.1} parent=15 // pred_fallthru
          _
        // Predicated region
        $region21: #{tpu_custom_call.1} parent=15 // pred_check
          %p289 = pneg %p87
        $region22: #{tpu_custom_call.1} parent=15 // pred_check_branch
          %291 = sbr.rel (%p289) target = $region24
        $region23: #{tpu_custom_call.1} parent=15 // pred_region
          %s292 = sand.u32 %s29, 1
          %s293 = scalar_lea.sflag [#allocation8], %s292
          %s294 = sand.u32 %s77, 1
          %s295 = smul.addr %s294, 64
          %s296 = scalar_lea.vmem [#allocation7], %s295
          %s297 = smul.u32 4, %s36
          %s299 = ssub.s32 1024, 1024
          %300 = vsyncadd %s293, %s299
          %s301 = smul.addr %s297, 2
          %s302 = smul.addr %s301, 128
          %s303 = scalar_lea.hbm %s1, %s302
          %s304 = sshll.u32 %s296, 4
          %s305 = int_to_ptr.vmem [resolvable:$true] %s304
          %310 = dma.hbm_to_vmem [thread:$0]  %s303, 1024, %s305, %s293, 128, 128, 8
        $region24: #{tpu_custom_call.1} parent=15 // pred_fallthru
          _
        // Predicated region
        $region25: #{tpu_custom_call.1} parent=15 // pred_check
          %p311 = pneg %p113
        $region26: #{tpu_custom_call.1} parent=15 // pred_check_branch
          %313 = sbr.rel (%p311) target = $region28
        $region27: #{tpu_custom_call.1} parent=15 // pred_region
          %s314 = sand.u32 %s29, 1
          %s315 = scalar_lea.sflag [#allocation8], %s314
          %s316 = sand.u32 %s103, 1
          %s317 = smul.addr %s316, 64
          %s318 = scalar_lea.vmem [#allocation9], %s317
          %s319 = smul.u32 4, %s36
          %s321 = ssub.s32 1024, 1024
          %322 = vsyncadd %s315, %s321
          %s323 = smul.addr %s319, 2
          %s324 = smul.addr %s323, 128
          %s325 = scalar_lea.hbm %s2, %s324
          %s326 = sshll.u32 %s318, 4
          %s327 = int_to_ptr.vmem [resolvable:$true] %s326
          %332 = dma.hbm_to_vmem [thread:$0]  %s325, 1024, %s327, %s315, 128, 128, 8
        $region28: #{tpu_custom_call.1} parent=15 // pred_fallthru
          _
        // Predicated region
        $region29: #{tpu_custom_call.1} parent=15 // pred_check
          %p333 = pneg %p139
        $region30: #{tpu_custom_call.1} parent=15 // pred_check_branch
          %335 = sbr.rel (%p333) target = $region32
        $region31: #{tpu_custom_call.1} parent=15 // pred_region
          %s336 = sand.u32 %s129, 1
          %s337 = scalar_lea.sflag [#allocation11], %s336
          %s338 = sand.u32 %s129, 1
          %s339 = smul.addr %s338, 96
          %s340 = scalar_lea.vmem [#allocation10], %s339
          %s342 = ssub.s32 1536, 1536
          %343 = vsyncadd %s337, %s342
          %s344 = smul.addr %s37, 24
          %s345 = smul.addr %s344, 64
          %s346 = scalar_lea.hbm %s3, %s345
          %s347 = sshll.u32 %s340, 4
          %s348 = int_to_ptr.vmem [resolvable:$true] %s347
          %353 = dma.hbm_to_vmem [thread:$0]  %s346, 1536, %s348, %s337, 64, 64, 4
        $region32: #{tpu_custom_call.1} parent=15 // pred_fallthru
          _
        // Predicated region
        $region33: #{tpu_custom_call.1} parent=15 // pred_check
          %p354 = pneg %p165
        $region34: #{tpu_custom_call.1} parent=15 // pred_check_branch
          %356 = sbr.rel (%p354) target = $region36
        $region35: #{tpu_custom_call.1} parent=15 // pred_region
          %p357 = scmp.lt.s32.totalorder %s37, 1
          %s358 = scalar_select %p357, %s37, 1
          %s359 = smul.addr %s358, 4
          %s360 = smul.addr %s359, 4
          %s361 = scalar_lea.vmem %s4, %s360
        $region36: #{tpu_custom_call.1} parent=15 // pred_fallthru
          _
        // Predicated region
        $region37: #{tpu_custom_call.1} parent=15 // pred_check
          %p362 = pneg %p191
        $region38: #{tpu_custom_call.1} parent=15 // pred_check_branch
          %364 = sbr.rel (%p362) target = $region40
        $region39: #{tpu_custom_call.1} parent=15 // pred_region
          %p365 = scmp.lt.s32.totalorder %s37, 1
          %s366 = scalar_select %p365, %s37, 1
          %s367 = smul.addr %s366, 2
          %s368 = smul.addr %s367, 8
          %s369 = scalar_lea.vmem %s5, %s368
        $region40: #{tpu_custom_call.1} parent=15 // pred_fallthru
          _
      $region16: #{tpu_custom_call.1} parent=5 // pred_fallthru
        _
      %p370 = scmp.le.s32.totalorder 1, %s29
      %p371 = scmp.lt.s32.totalorder %s29, 5
      %p372 = pnand %p370, %p371
      %p373 = pneg %p372
      // Predicated region
      $region41: #{tpu_custom_call.1} parent=5 // pred_check
        _
      $region42: #{tpu_custom_call.1} parent=5 // pred_check_branch
        %375 = sbr.rel (%p372) target = $region44
      $region43: #{tpu_custom_call.1} parent=5 // pred_region
        %s376 = ssub.s32 %s29, 1
        %s377 = sand.u32 %s54, 1
        %s378 = scalar_lea.sflag [#allocation5], %s377
        %s379 = sand.u32 %s54, 1
        %s380 = smul.addr %s379, 32
        %s381 = scalar_lea.vmem [#allocation4], %s380
        // Predicated region
        $region45: #{tpu_custom_call.1} parent=43 // pred_check
          %p382 = pneg %p67
        $region46: #{tpu_custom_call.1} parent=43 // pred_check_branch
          %384 = sbr.rel (%p382) target = $region48
        $region47: #{tpu_custom_call.1} parent=43 // pred_region
          %385 = dma.done %s378, 512
        $region48: #{tpu_custom_call.1} parent=43 // pred_fallthru
          _
        %s386 = sand.u32 %s34, 1
        %s387 = scalar_lea.sflag [#allocation8], %s386
        %s388 = sand.u32 %s80, 1
        %s389 = smul.addr %s388, 64
        %s390 = scalar_lea.vmem [#allocation7], %s389
        // Predicated region
        $region49: #{tpu_custom_call.1} parent=43 // pred_check
          %p391 = pneg %p93
        $region50: #{tpu_custom_call.1} parent=43 // pred_check_branch
          %393 = sbr.rel (%p391) target = $region52
        $region51: #{tpu_custom_call.1} parent=43 // pred_region
          %394 = dma.done %s387, 1024
        $region52: #{tpu_custom_call.1} parent=43 // pred_fallthru
          _
        %s395 = sand.u32 %s34, 1
        %s396 = scalar_lea.sflag [#allocation8], %s395
        %s397 = sand.u32 %s106, 1
        %s398 = smul.addr %s397, 64
        %s399 = scalar_lea.vmem [#allocation9], %s398
        // Predicated region
        $region53: #{tpu_custom_call.1} parent=43 // pred_check
          %p400 = pneg %p119
        $region54: #{tpu_custom_call.1} parent=43 // pred_check_branch
          %402 = sbr.rel (%p400) target = $region56
        $region55: #{tpu_custom_call.1} parent=43 // pred_region
          %403 = dma.done %s396, 1024
        $region56: #{tpu_custom_call.1} parent=43 // pred_fallthru
          _
        %s404 = sand.u32 %s132, 1
        %s405 = scalar_lea.sflag [#allocation11], %s404
        %s406 = sand.u32 %s132, 1
        %s407 = smul.addr %s406, 96
        %s408 = scalar_lea.vmem [#allocation10], %s407
        // Predicated region
        $region57: #{tpu_custom_call.1} parent=43 // pred_check
          %p409 = pneg %p145
        $region58: #{tpu_custom_call.1} parent=43 // pred_check_branch
          %411 = sbr.rel (%p409) target = $region60
        $region59: #{tpu_custom_call.1} parent=43 // pred_region
          %412 = dma.done %s405, 1536
        $region60: #{tpu_custom_call.1} parent=43 // pred_fallthru
          _
        %s413 = sand.u32 %s54, 1
        %s414 = scalar_lea.sflag [#allocation5], %s413
        %s415 = sand.u32 %s54, 1
        %s416 = smul.addr %s415, 32
        %s417 = scalar_lea.vmem [#allocation4], %s416
        %p418 = pneg %p67
        %p419 = pneg %p64
        %s420 = sand.u32 %s34, 1
        %s421 = scalar_lea.sflag [#allocation8], %s420
        %s422 = sand.u32 %s80, 1
        %s423 = smul.addr %s422, 64
        %s424 = scalar_lea.vmem [#allocation7], %s423
        %p425 = pneg %p93
        %p426 = pneg %p90
        %s427 = sand.u32 %s34, 1
        %s428 = scalar_lea.sflag [#allocation8], %s427
        %s429 = sand.u32 %s106, 1
        %s430 = smul.addr %s429, 64
        %s431 = scalar_lea.vmem [#allocation9], %s430
        %p432 = pneg %p119
        %p433 = pneg %p116
        %s434 = sand.u32 %s132, 1
        %s435 = scalar_lea.sflag [#allocation11], %s434
        %s436 = sand.u32 %s132, 1
        %s437 = smul.addr %s436, 96
        %s438 = scalar_lea.vmem [#allocation10], %s437
        %p439 = pneg %p145
        %p440 = pneg %p142
        %p441 = scmp.lt.s32.totalorder %s39, 1
        %s442 = scalar_select %p441, %s39, 1
        %s443 = smul.addr %s442, 4
        %s444 = smul.addr %s443, 4
        %s445 = scalar_lea.vmem %s4, %s444
        %p446 = pneg %p171
        %p447 = pneg %p168
        %p448 = scmp.lt.s32.totalorder %s39, 1
        %s449 = scalar_select %p448, %s39, 1
        %s450 = smul.addr %s449, 2
        %s451 = smul.addr %s450, 8
        %s452 = scalar_lea.vmem %s5, %s451
        %p453 = pneg %p197
        %p454 = pneg %p194
        %p455 = pneg %p223
        %p456 = pneg %p220
        %s457 = sand.u32 %s210, 1
        %s458 = scalar_lea.sflag [#allocation6], %s457
        %s459 = sand.u32 %s210, 1
        %s460 = smul.addr %s459, 32
        %s461 = scalar_lea.vmem [#allocation12], %s460
        %p462 = pneg %p249
        %p463 = pneg %p246
        %s464 = sand.u32 %s236, 1
        %s465 = scalar_lea.sflag [#allocation14], %s464
        %s466 = sand.u32 %s236, 1
        %s467 = smul.addr %s466, 64
        %s468 = scalar_lea.vmem [#allocation13], %s467
        %s469 = smul.u32 4, %s38
        %s470 = smul.u32 4, %s38
        %s471 = smul.u32 4, %s38
        %p472 = scmp.lt.s32.totalorder %s39, 1
        %s473 = scalar_select %p472, %s39, 1
        %s474 = smul.addr %s473, 4
        %s475 = smul.addr %s474, 4
        %s476 = scalar_lea.vmem %s4, %s475
        %p477 = scmp.lt.s32.totalorder %s39, 1
        %s478 = scalar_select %p477, %s39, 1
        %s479 = smul.addr %s478, 2
        %s480 = smul.addr %s479, 8
        %s481 = scalar_lea.vmem %s5, %s480
        %s482 = smul.u32 4, %s38
        %s483 = smul.u32 4, %s38
        %p485 = scmp.eq.s32.totalorder %s39, 0
        // Predicated region
        $region61: #{tpu_custom_call.1} parent=43 // pred_check
          %p486 = pneg %p485
        $region62: #{tpu_custom_call.1} parent=43 // pred_check_branch
          %488 = sbr.rel (%p486) target = $region64
        $region63: #{tpu_custom_call.1} parent=43 // pred_region
          %v489 = vld [vmem:[%s381] sm:$0xff]
          %v490 = vld [vmem:[%s381 + $0x8] sm:$0xff]
          %v491 = vld [vmem:[%s381 + $0x10] sm:$0xff]
          %v492 = vld [vmem:[%s381 + $0x18] sm:$0xff]
          %vm493 = vcmask 261120
          %494 = vst.msk [vmem:[#allocation2] sm:$0xff] %vm493, %v489
          %495 = vst.msk [vmem:[#allocation2 + $0x8] sm:$0xff] %vm493, %v490
          %496 = vst.msk [vmem:[#allocation2 + $0x10] sm:$0xff] %vm493, %v491
          %497 = vst.msk [vmem:[#allocation2 + $0x18] sm:$0xff] %vm493, %v492
          %v498 = vld [vmem:[%s390] sm:$0xff]
          %v499 = vld [vmem:[%s390 + $0x8] sm:$0xff]
          %v500 = vld [vmem:[%s390 + $0x10] sm:$0xff]
          %v501 = vld [vmem:[%s390 + $0x18] sm:$0xff]
          %v502 = vld [vmem:[%s390 + $0x20] sm:$0xff]
          %v503 = vld [vmem:[%s390 + $0x28] sm:$0xff]
          %v504 = vld [vmem:[%s390 + $0x30] sm:$0xff]
          %v505 = vld [vmem:[%s390 + $0x38] sm:$0xff]
          %506 = vst.msk [vmem:[#allocation3] sm:$0xff] %vm493, %v498
          %507 = vst.msk [vmem:[#allocation3 + $0x8] sm:$0xff] %vm493, %v499
          %508 = vst.msk [vmem:[#allocation3 + $0x10] sm:$0xff] %vm493, %v500
          %509 = vst.msk [vmem:[#allocation3 + $0x18] sm:$0xff] %vm493, %v501
          %510 = vst.msk [vmem:[#allocation3 + $0x20] sm:$0xff] %vm493, %v502
          %511 = vst.msk [vmem:[#allocation3 + $0x28] sm:$0xff] %vm493, %v503
          %512 = vst.msk [vmem:[#allocation3 + $0x30] sm:$0xff] %vm493, %v504
          %513 = vst.msk [vmem:[#allocation3 + $0x38] sm:$0xff] %vm493, %v505
        $region64: #{tpu_custom_call.1} parent=43 // pred_fallthru
          _
        %v514 = vld [vmem:[#allocation2] sm:$0xff]
        %v515 = vld [vmem:[#allocation2 + $0x8] sm:$0xff]
        %v516 = vld [vmem:[#allocation2 + $0x10] sm:$0xff]
        %v517 = vld [vmem:[#allocation2 + $0x18] sm:$0xff]
        %v518 = vld [vmem:[#allocation3] sm:$0xff]
        %v519 = vld [vmem:[#allocation3 + $0x8] sm:$0xff]
        %v520 = vld [vmem:[#allocation3 + $0x10] sm:$0xff]
        %v521 = vld [vmem:[#allocation3 + $0x18] sm:$0xff]
        %v522 = vld [vmem:[#allocation3 + $0x20] sm:$0xff]
        %v523 = vld [vmem:[#allocation3 + $0x28] sm:$0xff]
        %v524 = vld [vmem:[#allocation3 + $0x30] sm:$0xff]
        %v525 = vld [vmem:[#allocation3 + $0x38] sm:$0xff]
        %v526 = vld [vmem:[%s399] sm:$0xff]
        %v527 = vld [vmem:[%s399 + $0x8] sm:$0xff]
        %v528 = vld [vmem:[%s399 + $0x10] sm:$0xff]
        %v529 = vld [vmem:[%s399 + $0x18] sm:$0xff]
        %v530 = vld [vmem:[%s399 + $0x20] sm:$0xff]
        %v531 = vld [vmem:[%s399 + $0x28] sm:$0xff]
        %v532 = vld [vmem:[%s399 + $0x30] sm:$0xff]
        %v533 = vld [vmem:[%s399 + $0x38] sm:$0xff]
        %v534 = vld [vmem:[%s408] sm:$0xf]
        %v535 = vld [vmem:[%s408 + $0x4] sm:$0xf]
        %v536 = vld [vmem:[%s408 + $0x8] sm:$0xf]
        %v537 = vld [vmem:[%s408 + $0xc] sm:$0xf]
        %v538 = vld [vmem:[%s481] sm:$0x1]
        %v539 = vpack.c.bf16 %v515, %v514
        %v540 = vpack.c.bf16 %v517, %v516
        %v541 = vlaneseq
        %v542 = vshrl.u32 %v541, 7
        %v543 = vsub.s32 0, %v542
        %v544 = vrot.slane %v538, %v543
        %v549 = vunpack.c.l.b16 %v534
        %v550 = vunpack.c.l.b16 %v535
        %v551 = vunpack.c.l.b16 %v536
        %v552 = vunpack.c.l.b16 %v537
        %v553 = vpack.c.b16 %v550, %v549
        %v554 = vpack.c.b16 %v552, %v551
        %vm557 = vcmask 261120
        %v559 = vsel %vm557, %v539, 0
        %v562 = vsel %vm557, %v540, 0
        %564 = vmatprep.subr.bf16.mxu0 0
        %565 = vmatpush1.bf16.msra.mxu0 %v553
        %566 = vmatprep.subr.bf16.mxu0 0
        %567 = vmatpush1.bf16.msra.mxu0 %v554
        %568 = vmatprep.subr.bf16.mxu0 0
        %569 = vmatpush1.bf16.msra.mxu0 0
        %570 = vmatprep.subr.bf16.mxu0 0
        %571 = vmatpush1.bf16.msra.mxu0 0
        %572 = vmatprep.subr.bf16.mxu0 0
        %573 = vmatpush1.bf16.msra.mxu0 0
        %574 = vmatprep.subr.bf16.mxu0 0
        %575 = vmatpush1.bf16.msra.mxu0 0
        %576 = vmatprep.subr.bf16.mxu0 0
        %577 = vmatpush1.bf16.msra.mxu0 0
        %578 = vmatprep.subr.bf16.mxu0 0
        %579 = vmatpush1.bf16.msra.mxu0 0
        %580 = vmatprep.subr.bf16.mxu0 0
        %581 = vmatpush1.bf16.msra.mxu0 0
        %582 = vmatprep.subr.bf16.mxu0 0
        %583 = vmatpush1.bf16.msra.mxu0 0
        %584 = vmatprep.subr.bf16.mxu0 0
        %585 = vmatpush1.bf16.msra.mxu0 0
        %586 = vmatprep.subr.bf16.mxu0 0
        %587 = vmatpush1.bf16.msra.mxu0 0
        %588 = vmatprep.subr.bf16.mxu0 0
        %589 = vmatpush1.bf16.msra.mxu0 0
        %590 = vmatprep.subr.bf16.mxu0 0
        %591 = vmatpush1.bf16.msra.mxu0 0
        %592 = vmatprep.subr.bf16.mxu0 0
        %593 = vmatpush1.bf16.msra.mxu0 0
        %594 = vmatprep.subr.bf16.mxu0 0
        %595 = vmatpush1.bf16.msra.mxu0 0
        %596 = vmatprep.mubr.bf16.mxu0 0
        %597 = vmatmul.mubr.bf16.gmra.mrb[0].mxu0 %v559
        %v598 = vpop.f32.mrb[0].mxu0
        %v599 = vadd.f32 %v544, %v598
        %v600 = vpop.f32.mrb[0].mxu0
        %v601 = vpop.f32.mrb[0].mxu0
        %v602 = vadd.f32 %v544, %v601
        %v603 = vpop.f32.mrb[0].mxu0
        %604 = vmatprep.mubr.bf16.mxu0 0
        %605 = vmatmul.mubr.bf16.gmra.mrb[0].mxu0 %v562
        %v606 = vpop.f32.mrb[0].mxu0
        %v607 = vadd.f32 %v544, %v606
        %v608 = vpop.f32.mrb[0].mxu0
        %v609 = vpop.f32.mrb[0].mxu0
        %v610 = vadd.f32 %v544, %v609
        %v611 = vpop.f32.mrb[0].mxu0
        %612 = vdwg.mxu0
        %s613 = scalar_lea.vmem %s408, 16 [#allocation10]
        %v614 = vld [vmem:[%s613] sm:$0xf]
        %v615 = vld [vmem:[%s613 + $0x4] sm:$0xf]
        %v616 = vld [vmem:[%s613 + $0x8] sm:$0xf]
        %v617 = vld [vmem:[%s613 + $0xc] sm:$0xf]
        %v618 = vld [vmem:[%s481 + $0x1] sm:$0x1]
        %v619 = vpack.c.bf16 %v519, %v518
        %v620 = vpack.c.bf16 %v521, %v520
        %v621 = vpack.c.bf16 %v523, %v522
        %v622 = vpack.c.bf16 %v525, %v524
        %v623 = vlaneseq
        %v624 = vshrl.u32 %v623, 7
        %v625 = vsub.s32 0, %v624
        %v626 = vrot.slane %v618, %v625
        %v631 = vunpack.c.l.b16 %v614
        %v632 = vunpack.c.l.b16 %v615
        %v633 = vunpack.c.l.b16 %v616
        %v634 = vunpack.c.l.b16 %v617
        %v635 = vpack.c.b16 %v632, %v631
        %v636 = vpack.c.b16 %v634, %v633
        %v640 = vsel %vm557, %v619, 0
        %v643 = vsel %vm557, %v620, 0
        %v646 = vsel %vm557, %v621, 0
        %v649 = vsel %vm557, %v622, 0
        %651 = vmatprep.subr.bf16.mxu0 0
        %652 = vmatpush1.bf16.msra.mxu0 %v635
        %653 = vmatprep.subr.bf16.mxu0 0
        %654 = vmatpush1.bf16.msra.mxu0 %v636
        %655 = vmatprep.subr.bf16.mxu0 0
        %656 = vmatpush1.bf16.msra.mxu0 0
        %657 = vmatprep.subr.bf16.mxu0 0
        %658 = vmatpush1.bf16.msra.mxu0 0
        %659 = vmatprep.subr.bf16.mxu0 0
        %660 = vmatpush1.bf16.msra.mxu0 0
        %661 = vmatprep.subr.bf16.mxu0 0
        %662 = vmatpush1.bf16.msra.mxu0 0
        %663 = vmatprep.subr.bf16.mxu0 0
        %664 = vmatpush1.bf16.msra.mxu0 0
        %665 = vmatprep.subr.bf16.mxu0 0
        %666 = vmatpush1.bf16.msra.mxu0 0
        %667 = vmatprep.subr.bf16.mxu0 0
        %668 = vmatpush1.bf16.msra.mxu0 0
        %669 = vmatprep.subr.bf16.mxu0 0
        %670 = vmatpush1.bf16.msra.mxu0 0
        %671 = vmatprep.subr.bf16.mxu0 0
        %672 = vmatpush1.bf16.msra.mxu0 0
        %673 = vmatprep.subr.bf16.mxu0 0
        %674 = vmatpush1.bf16.msra.mxu0 0
        %675 = vmatprep.subr.bf16.mxu0 0
        %676 = vmatpush1.bf16.msra.mxu0 0
        %677 = vmatprep.subr.bf16.mxu0 0
        %678 = vmatpush1.bf16.msra.mxu0 0
        %679 = vmatprep.subr.bf16.mxu0 0
        %680 = vmatpush1.bf16.msra.mxu0 0
        %681 = vmatprep.subr.bf16.mxu0 0
        %682 = vmatpush1.bf16.msra.mxu0 0
        %683 = vmatprep.mubr.bf16.mxu0 0
        %684 = vmatmul.mubr.bf16.gmra.mrb[0].mxu0 %v640
        %v685 = vpop.f32.mrb[0].mxu0
        %v686 = vadd.f32 %v626, %v685
        %v687 = vpop.f32.mrb[0].mxu0
        %v688 = vpop.f32.mrb[0].mxu0
        %v689 = vadd.f32 %v626, %v688
        %v690 = vpop.f32.mrb[0].mxu0
        %691 = vmatprep.mubr.bf16.mxu0 0
        %692 = vmatmul.mubr.bf16.gmra.mrb[0].mxu0 %v643
        %v693 = vpop.f32.mrb[0].mxu0
        %v694 = vadd.f32 %v626, %v693
        %v695 = vpop.f32.mrb[0].mxu0
        %v696 = vpop.f32.mrb[0].mxu0
        %v697 = vadd.f32 %v626, %v696
        %v698 = vpop.f32.mrb[0].mxu0
        %699 = vmatprep.mubr.bf16.mxu0 0
        %700 = vmatmul.mubr.bf16.gmra.mrb[0].mxu0 %v646
        %v701 = vpop.f32.mrb[0].mxu0
        %v702 = vadd.f32 %v626, %v701
        %v703 = vpop.f32.mrb[0].mxu0
        %v704 = vpop.f32.mrb[0].mxu0
        %v705 = vadd.f32 %v626, %v704
        %v706 = vpop.f32.mrb[0].mxu0
        %707 = vmatprep.mubr.bf16.mxu0 0
        %708 = vmatmul.mubr.bf16.gmra.mrb[0].mxu0 %v649
        %v709 = vpop.f32.mrb[0].mxu0
        %v710 = vadd.f32 %v626, %v709
        %v711 = vpop.f32.mrb[0].mxu0
        %v712 = vpop.f32.mrb[0].mxu0
        %v713 = vadd.f32 %v626, %v712
        %v714 = vpop.f32.mrb[0].mxu0
        %715 = vdwg.mxu0
        %s716 = scalar_lea.vmem %s408, 32 [#allocation10]
        %v717 = vld [vmem:[%s716] sm:$0xf]
        %v718 = vld [vmem:[%s716 + $0x4] sm:$0xf]
        %v719 = vld [vmem:[%s716 + $0x8] sm:$0xf]
        %v720 = vld [vmem:[%s716 + $0xc] sm:$0xf]
        %v721 = vld [vmem:[%s481 + $0x2] sm:$0x1]
        %v722 = vpack.c.bf16 %v527, %v526
        %v723 = vpack.c.bf16 %v529, %v528
        %v724 = vpack.c.bf16 %v531, %v530
        %v725 = vpack.c.bf16 %v533, %v532
        %v726 = vlaneseq
        %v727 = vshrl.u32 %v726, 7
        %v728 = vsub.s32 0, %v727
        %v729 = vrot.slane %v721, %v728
        %v734 = vunpack.c.l.b16 %v717
        %v735 = vunpack.c.l.b16 %v718
        %v736 = vunpack.c.l.b16 %v719
        %v737 = vunpack.c.l.b16 %v720
        %v738 = vpack.c.b16 %v735, %v734
        %v739 = vpack.c.b16 %v737, %v736
        %v743 = vsel %vm557, %v722, 0
        %v746 = vsel %vm557, %v723, 0
        %v749 = vsel %vm557, %v724, 0
        %v752 = vsel %vm557, %v725, 0
        %754 = vmatprep.subr.bf16.mxu0 0
        %755 = vmatpush1.bf16.msra.mxu0 %v738
        %756 = vmatprep.subr.bf16.mxu0 0
        %757 = vmatpush1.bf16.msra.mxu0 %v739
        %758 = vmatprep.subr.bf16.mxu0 0
        %759 = vmatpush1.bf16.msra.mxu0 0
        %760 = vmatprep.subr.bf16.mxu0 0
        %761 = vmatpush1.bf16.msra.mxu0 0
        %762 = vmatprep.subr.bf16.mxu0 0
        %763 = vmatpush1.bf16.msra.mxu0 0
        %764 = vmatprep.subr.bf16.mxu0 0
        %765 = vmatpush1.bf16.msra.mxu0 0
        %766 = vmatprep.subr.bf16.mxu0 0
        %767 = vmatpush1.bf16.msra.mxu0 0
        %768 = vmatprep.subr.bf16.mxu0 0
        %769 = vmatpush1.bf16.msra.mxu0 0
        %770 = vmatprep.subr.bf16.mxu0 0
        %771 = vmatpush1.bf16.msra.mxu0 0
        %772 = vmatprep.subr.bf16.mxu0 0
        %773 = vmatpush1.bf16.msra.mxu0 0
        %774 = vmatprep.subr.bf16.mxu0 0
        %775 = vmatpush1.bf16.msra.mxu0 0
        %776 = vmatprep.subr.bf16.mxu0 0
        %777 = vmatpush1.bf16.msra.mxu0 0
        %778 = vmatprep.subr.bf16.mxu0 0
        %779 = vmatpush1.bf16.msra.mxu0 0
        %780 = vmatprep.subr.bf16.mxu0 0
        %781 = vmatpush1.bf16.msra.mxu0 0
        %782 = vmatprep.subr.bf16.mxu0 0
        %783 = vmatpush1.bf16.msra.mxu0 0
        %784 = vmatprep.subr.bf16.mxu0 0
        %785 = vmatpush1.bf16.msra.mxu0 0
        %786 = vmatprep.mubr.bf16.mxu0 0
        %787 = vmatmul.mubr.bf16.gmra.mrb[0].mxu0 %v743
        %v788 = vpop.f32.mrb[0].mxu0
        %v789 = vadd.f32 %v729, %v788
        %v790 = vpop.f32.mrb[0].mxu0
        %v791 = vpop.f32.mrb[0].mxu0
        %v792 = vadd.f32 %v729, %v791
        %v793 = vpop.f32.mrb[0].mxu0
        %794 = vmatprep.mubr.bf16.mxu0 0
        %795 = vmatmul.mubr.bf16.gmra.mrb[0].mxu0 %v746
        %v796 = vpop.f32.mrb[0].mxu0
        %v797 = vadd.f32 %v729, %v796
        %v798 = vpop.f32.mrb[0].mxu0
        %v799 = vpop.f32.mrb[0].mxu0
        %v800 = vadd.f32 %v729, %v799
        %v801 = vpop.f32.mrb[0].mxu0
        %802 = vmatprep.mubr.bf16.mxu0 0
        %803 = vmatmul.mubr.bf16.gmra.mrb[0].mxu0 %v749
        %v804 = vpop.f32.mrb[0].mxu0
        %v805 = vadd.f32 %v729, %v804
        %v806 = vpop.f32.mrb[0].mxu0
        %v807 = vpop.f32.mrb[0].mxu0
        %v808 = vadd.f32 %v729, %v807
        %v809 = vpop.f32.mrb[0].mxu0
        %810 = vmatprep.mubr.bf16.mxu0 0
        %811 = vmatmul.mubr.bf16.gmra.mrb[0].mxu0 %v752
        %v812 = vpop.f32.mrb[0].mxu0
        %v813 = vadd.f32 %v729, %v812
        %v814 = vpop.f32.mrb[0].mxu0
        %v815 = vpop.f32.mrb[0].mxu0
        %v816 = vadd.f32 %v729, %v815
        %v817 = vpop.f32.mrb[0].mxu0
        %818 = vdwg.mxu0
        %v819 = vpack.c.bf16 %v599, %v599
        %v820 = vpack.c.bf16 %v602, %v602
        %v821 = vpack.c.bf16 %v607, %v607
        %v822 = vpack.c.bf16 %v610, %v610
        %v823 = vpack.c.bf16 %v689, %v686
        %v824 = vpack.c.bf16 %v697, %v694
        %v825 = vpack.c.bf16 %v705, %v702
        %v826 = vpack.c.bf16 %v713, %v710
        %v827 = vpack.c.bf16 %v792, %v789
        %v828 = vpack.c.bf16 %v800, %v797
        %v829 = vpack.c.bf16 %v808, %v805
        %v830 = vpack.c.bf16 %v816, %v813
        %vm831 = vcmask 64512
        %v833 = vsel %vm831, %v819, 0
        %v836 = vsel %vm831, %v823, 0
        %838 = vmatprep.subr.bf16.mxu0 0
        %839 = vmatpush1.bf16.xpose.msra.mxu0 %v836
        %840 = vmatprep.subr.bf16.mxu0 0
        %841 = vmatpush1.bf16.xpose.msra.mxu0 0
        %842 = vmatprep.subr.bf16.mxu0 0
        %843 = vmatpush1.bf16.xpose.msra.mxu0 0
        %844 = vmatprep.subr.bf16.mxu0 0
        %845 = vmatpush1.bf16.xpose.msra.mxu0 0
        %846 = vmatprep.subr.bf16.mxu0 0
        %847 = vmatpush1.bf16.xpose.msra.mxu0 0
        %848 = vmatprep.subr.bf16.mxu0 0
        %849 = vmatpush1.bf16.xpose.msra.mxu0 0
        %850 = vmatprep.subr.bf16.mxu0 0
        %851 = vmatpush1.bf16.xpose.msra.mxu0 0
        %852 = vmatprep.subr.bf16.mxu0 0
        %853 = vmatpush1.bf16.xpose.msra.mxu0 0
        %854 = vmatprep.subr.bf16.mxu0 0
        %855 = vmatpush1.bf16.xpose.msra.mxu0 0
        %856 = vmatprep.subr.bf16.mxu0 0
        %857 = vmatpush1.bf16.xpose.msra.mxu0 0
        %858 = vmatprep.subr.bf16.mxu0 0
        %859 = vmatpush1.bf16.xpose.msra.mxu0 0
        %860 = vmatprep.subr.bf16.mxu0 0
        %861 = vmatpush1.bf16.xpose.msra.mxu0 0
        %862 = vmatprep.subr.bf16.mxu0 0
        %863 = vmatpush1.bf16.xpose.msra.mxu0 0
        %864 = vmatprep.subr.bf16.mxu0 0
        %865 = vmatpush1.bf16.xpose.msra.mxu0 0
        %866 = vmatprep.subr.bf16.mxu0 0
        %867 = vmatpush1.bf16.xpose.msra.mxu0 0
        %868 = vmatprep.subr.bf16.mxu0 0
        %869 = vmatpush1.bf16.xpose.msra.mxu0 0
        %870 = vmatprep.mubr.bf16.mxu0 0
        %871 = vmatmul.mubr.bf16.gmra.mrb[0].mxu0 %v833
        %v872 = vpop.f32.mrb[0].mxu0
        %v873 = vadd.f32 0.0, %v872
        %v874 = vpop.f32.mrb[0].mxu0
        %v875 = vpop.f32.mrb[0].mxu0
        %v876 = vpop.f32.mrb[0].mxu0
        %877 = vdwg.mxu0
        %v879 = vsel %vm831, %v820, 0
        %v882 = vsel %vm831, %v824, 0
        %884 = vmatprep.subr.bf16.mxu0 0
        %885 = vmatpush1.bf16.xpose.msra.mxu0 %v882
        %886 = vmatprep.subr.bf16.mxu0 0
        %887 = vmatpush1.bf16.xpose.msra.mxu0 0
        %888 = vmatprep.subr.bf16.mxu0 0
        %889 = vmatpush1.bf16.xpose.msra.mxu0 0
        %890 = vmatprep.subr.bf16.mxu0 0
        %891 = vmatpush1.bf16.xpose.msra.mxu0 0
        %892 = vmatprep.subr.bf16.mxu0 0
        %893 = vmatpush1.bf16.xpose.msra.mxu0 0
        %894 = vmatprep.subr.bf16.mxu0 0
        %895 = vmatpush1.bf16.xpose.msra.mxu0 0
        %896 = vmatprep.subr.bf16.mxu0 0
        %897 = vmatpush1.bf16.xpose.msra.mxu0 0
        %898 = vmatprep.subr.bf16.mxu0 0
        %899 = vmatpush1.bf16.xpose.msra.mxu0 0
        %900 = vmatprep.subr.bf16.mxu0 0
        %901 = vmatpush1.bf16.xpose.msra.mxu0 0
        %902 = vmatprep.subr.bf16.mxu0 0
        %903 = vmatpush1.bf16.xpose.msra.mxu0 0
        %904 = vmatprep.subr.bf16.mxu0 0
        %905 = vmatpush1.bf16.xpose.msra.mxu0 0
        %906 = vmatprep.subr.bf16.mxu0 0
        %907 = vmatpush1.bf16.xpose.msra.mxu0 0
        %908 = vmatprep.subr.bf16.mxu0 0
        %909 = vmatpush1.bf16.xpose.msra.mxu0 0
        %910 = vmatprep.subr.bf16.mxu0 0
        %911 = vmatpush1.bf16.xpose.msra.mxu0 0
        %912 = vmatprep.subr.bf16.mxu0 0
        %913 = vmatpush1.bf16.xpose.msra.mxu0 0
        %914 = vmatprep.subr.bf16.mxu0 0
        %915 = vmatpush1.bf16.xpose.msra.mxu0 0
        %916 = vmatprep.mubr.bf16.mxu0 0
        %917 = vmatmul.mubr.bf16.gmra.mrb[0].mxu0 %v879
        %v918 = vpop.f32.mrb[0].mxu0
        %v919 = vadd.f32 0.0, %v918
        %v920 = vpop.f32.mrb[0].mxu0
        %v921 = vpop.f32.mrb[0].mxu0
        %v922 = vpop.f32.mrb[0].mxu0
        %923 = vdwg.mxu0
        %v925 = vsel %vm831, %v821, 0
        %v928 = vsel %vm831, %v825, 0
        %930 = vmatprep.subr.bf16.mxu0 0
        %931 = vmatpush1.bf16.xpose.msra.mxu0 %v928
        %932 = vmatprep.subr.bf16.mxu0 0
        %933 = vmatpush1.bf16.xpose.msra.mxu0 0
        %934 = vmatprep.subr.bf16.mxu0 0
        %935 = vmatpush1.bf16.xpose.msra.mxu0 0
        %936 = vmatprep.subr.bf16.mxu0 0
        %937 = vmatpush1.bf16.xpose.msra.mxu0 0
        %938 = vmatprep.subr.bf16.mxu0 0
        %939 = vmatpush1.bf16.xpose.msra.mxu0 0
        %940 = vmatprep.subr.bf16.mxu0 0
        %941 = vmatpush1.bf16.xpose.msra.mxu0 0
        %942 = vmatprep.subr.bf16.mxu0 0
        %943 = vmatpush1.bf16.xpose.msra.mxu0 0
        %944 = vmatprep.subr.bf16.mxu0 0
        %945 = vmatpush1.bf16.xpose.msra.mxu0 0
        %946 = vmatprep.subr.bf16.mxu0 0
        %947 = vmatpush1.bf16.xpose.msra.mxu0 0
        %948 = vmatprep.subr.bf16.mxu0 0
        %949 = vmatpush1.bf16.xpose.msra.mxu0 0
        %950 = vmatprep.subr.bf16.mxu0 0
        %951 = vmatpush1.bf16.xpose.msra.mxu0 0
        %952 = vmatprep.subr.bf16.mxu0 0
        %953 = vmatpush1.bf16.xpose.msra.mxu0 0
        %954 = vmatprep.subr.bf16.mxu0 0
        %955 = vmatpush1.bf16.xpose.msra.mxu0 0
        %956 = vmatprep.subr.bf16.mxu0 0
        %957 = vmatpush1.bf16.xpose.msra.mxu0 0
        %958 = vmatprep.subr.bf16.mxu0 0
        %959 = vmatpush1.bf16.xpose.msra.mxu0 0
        %960 = vmatprep.subr.bf16.mxu0 0
        %961 = vmatpush1.bf16.xpose.msra.mxu0 0
        %962 = vmatprep.mubr.bf16.mxu0 0
        %963 = vmatmul.mubr.bf16.gmra.mrb[0].mxu0 %v925
        %v964 = vpop.f32.mrb[0].mxu0
        %v965 = vadd.f32 0.0, %v964
        %v966 = vpop.f32.mrb[0].mxu0
        %v967 = vpop.f32.mrb[0].mxu0
        %v968 = vpop.f32.mrb[0].mxu0
        %969 = vdwg.mxu0
        %v971 = vsel %vm831, %v822, 0
        %v974 = vsel %vm831, %v826, 0
        %976 = vmatprep.subr.bf16.mxu0 0
        %977 = vmatpush1.bf16.xpose.msra.mxu0 %v974
        %978 = vmatprep.subr.bf16.mxu0 0
        %979 = vmatpush1.bf16.xpose.msra.mxu0 0
        %980 = vmatprep.subr.bf16.mxu0 0
        %981 = vmatpush1.bf16.xpose.msra.mxu0 0
        %982 = vmatprep.subr.bf16.mxu0 0
        %983 = vmatpush1.bf16.xpose.msra.mxu0 0
        %984 = vmatprep.subr.bf16.mxu0 0
        %985 = vmatpush1.bf16.xpose.msra.mxu0 0
        %986 = vmatprep.subr.bf16.mxu0 0
        %987 = vmatpush1.bf16.xpose.msra.mxu0 0
        %988 = vmatprep.subr.bf16.mxu0 0
        %989 = vmatpush1.bf16.xpose.msra.mxu0 0
        %990 = vmatprep.subr.bf16.mxu0 0
        %991 = vmatpush1.bf16.xpose.msra.mxu0 0
        %992 = vmatprep.subr.bf16.mxu0 0
        %993 = vmatpush1.bf16.xpose.msra.mxu0 0
        %994 = vmatprep.subr.bf16.mxu0 0
        %995 = vmatpush1.bf16.xpose.msra.mxu0 0
        %996 = vmatprep.subr.bf16.mxu0 0
        %997 = vmatpush1.bf16.xpose.msra.mxu0 0
        %998 = vmatprep.subr.bf16.mxu0 0
        %999 = vmatpush1.bf16.xpose.msra.mxu0 0
        %1000 = vmatprep.subr.bf16.mxu0 0
        %1001 = vmatpush1.bf16.xpose.msra.mxu0 0
        %1002 = vmatprep.subr.bf16.mxu0 0
        %1003 = vmatpush1.bf16.xpose.msra.mxu0 0
        %1004 = vmatprep.subr.bf16.mxu0 0
        %1005 = vmatpush1.bf16.xpose.msra.mxu0 0
        %1006 = vmatprep.subr.bf16.mxu0 0
        %1007 = vmatpush1.bf16.xpose.msra.mxu0 0
        %1008 = vmatprep.mubr.bf16.mxu0 0
        %1009 = vmatmul.mubr.bf16.gmra.mrb[0].mxu0 %v971
        %v1010 = vpop.f32.mrb[0].mxu0
        %v1011 = vadd.f32 0.0, %v1010
        %v1012 = vpop.f32.mrb[0].mxu0
        %v1013 = vpop.f32.mrb[0].mxu0
        %v1014 = vpop.f32.mrb[0].mxu0
        %1015 = vdwg.mxu0
        %vm1016 = vcmask 130048
        %v1017 = vsel %vm1016, %v873, -inf
        %1018 = vmax.xlane.f32.xlu0 %v1017
        %v1019 = vpop.xlane.xlu0 %1018
        %v1020 = vsel %vm1016, %v919, -inf
        %1021 = vmax.xlane.f32.xlu0 %v1020
        %v1022 = vpop.xlane.xlu0 %1021
        %v1023 = vsel %vm1016, %v965, -inf
        %1024 = vmax.xlane.f32.xlu0 %v1023
        %v1025 = vpop.xlane.xlu0 %1024
        %v1026 = vsel %vm1016, %v1011, -inf
        %1027 = vmax.xlane.f32.xlu0 %v1026
        %v1028 = vpop.xlane.xlu0 %1027
        %v1029 = vsub.f32 %v873, %v1019
        %v1030 = vsub.f32 %v919, %v1022
        %v1031 = vsub.f32 %v965, %v1025
        %v1032 = vsub.f32 %v1011, %v1028
        %v1033 = vmul.f32 %v1029, 1.442695
        %v1034 = vpow.pop %v1033
        %v1035 = vmul.f32 %v1030, 1.442695
        %v1036 = vpow.pop %v1035
        %v1037 = vmul.f32 %v1031, 1.442695
        %v1038 = vpow.pop %v1037
        %v1039 = vmul.f32 %v1032, 1.442695
        %v1040 = vpow.pop %v1039
        %v1041 = vsel %vm1016, %v1034, 0.0
        %1042 = vadd.xlane.f32.xlu0 %v1041
        %v1043 = vpop.xlane.xlu0 %1042
        %v1044 = vsel %vm1016, %v1036, 0.0
        %1045 = vadd.xlane.f32.xlu0 %v1044
        %v1046 = vpop.xlane.xlu0 %1045
        %v1047 = vsel %vm1016, %v1038, 0.0
        %1048 = vadd.xlane.f32.xlu0 %v1047
        %v1049 = vpop.xlane.xlu0 %1048
        %v1050 = vsel %vm1016, %v1040, 0.0
        %1051 = vadd.xlane.f32.xlu0 %v1050
        %v1052 = vpop.xlane.xlu0 %1051
        %v1053 = vrcp.pop %v1043
        %v1054 = vrcp.pop %v1046
        %v1055 = vrcp.pop %v1049
        %v1056 = vrcp.pop %v1052
        %v1057 = vmul.f32 %v1034, %v1053
        %v1058 = vmul.f32 %v1036, %v1054
        %v1059 = vmul.f32 %v1038, %v1055
        %v1060 = vmul.f32 %v1040, %v1056
        %v1061 = vpack.c.bf16 %v1057, %v1057
        %v1062 = vpack.c.bf16 %v1058, %v1058
        %v1063 = vpack.c.bf16 %v1059, %v1059
        %v1064 = vpack.c.bf16 %v1060, %v1060
        %v1066 = vsel %vm1016, %v1061, 0
        %1068 = vmatprep.subr.bf16.mxu0 0
        %1069 = vmatpush1.bf16.msra.mxu0 %v827
        %1070 = vmatprep.subr.bf16.mxu0 0
        %1071 = vmatpush1.bf16.msra.mxu0 0
        %1072 = vmatprep.subr.bf16.mxu0 0
        %1073 = vmatpush1.bf16.msra.mxu0 0
        %1074 = vmatprep.subr.bf16.mxu0 0
        %1075 = vmatpush1.bf16.msra.mxu0 0
        %1076 = vmatprep.subr.bf16.mxu0 0
        %1077 = vmatpush1.bf16.msra.mxu0 0
        %1078 = vmatprep.subr.bf16.mxu0 0
        %1079 = vmatpush1.bf16.msra.mxu0 0
        %1080 = vmatprep.subr.bf16.mxu0 0
        %1081 = vmatpush1.bf16.msra.mxu0 0
        %1082 = vmatprep.subr.bf16.mxu0 0
        %1083 = vmatpush1.bf16.msra.mxu0 0
        %1084 = vmatprep.subr.bf16.mxu0 0
        %1085 = vmatpush1.bf16.msra.mxu0 0
        %1086 = vmatprep.subr.bf16.mxu0 0
        %1087 = vmatpush1.bf16.msra.mxu0 0
        %1088 = vmatprep.subr.bf16.mxu0 0
        %1089 = vmatpush1.bf16.msra.mxu0 0
        %1090 = vmatprep.subr.bf16.mxu0 0
        %1091 = vmatpush1.bf16.msra.mxu0 0
        %1092 = vmatprep.subr.bf16.mxu0 0
        %1093 = vmatpush1.bf16.msra.mxu0 0
        %1094 = vmatprep.subr.bf16.mxu0 0
        %1095 = vmatpush1.bf16.msra.mxu0 0
        %1096 = vmatprep.subr.bf16.mxu0 0
        %1097 = vmatpush1.bf16.msra.mxu0 0
        %1098 = vmatprep.subr.bf16.mxu0 0
        %1099 = vmatpush1.bf16.msra.mxu0 0
        %1100 = vmatprep.mubr.bf16.mxu0 0
        %1101 = vmatmul.mubr.bf16.gmra.mrb[0].mxu0 %v1066
        %v1102 = vpop.f32.mrb[0].mxu0
        %v1103 = vadd.f32 0.0, %v1102
        %v1104 = vpop.f32.mrb[0].mxu0
        %v1105 = vpop.f32.mrb[0].mxu0
        %v1106 = vpop.f32.mrb[0].mxu0
        %1107 = vdwg.mxu0
        %v1109 = vsel %vm1016, %v1062, 0
        %1111 = vmatprep.subr.bf16.mxu0 0
        %1112 = vmatpush1.bf16.msra.mxu0 %v828
        %1113 = vmatprep.subr.bf16.mxu0 0
        %1114 = vmatpush1.bf16.msra.mxu0 0
        %1115 = vmatprep.subr.bf16.mxu0 0
        %1116 = vmatpush1.bf16.msra.mxu0 0
        %1117 = vmatprep.subr.bf16.mxu0 0
        %1118 = vmatpush1.bf16.msra.mxu0 0
        %1119 = vmatprep.subr.bf16.mxu0 0
        %1120 = vmatpush1.bf16.msra.mxu0 0
        %1121 = vmatprep.subr.bf16.mxu0 0
        %1122 = vmatpush1.bf16.msra.mxu0 0
        %1123 = vmatprep.subr.bf16.mxu0 0
        %1124 = vmatpush1.bf16.msra.mxu0 0
        %1125 = vmatprep.subr.bf16.mxu0 0
        %1126 = vmatpush1.bf16.msra.mxu0 0
        %1127 = vmatprep.subr.bf16.mxu0 0
        %1128 = vmatpush1.bf16.msra.mxu0 0
        %1129 = vmatprep.subr.bf16.mxu0 0
        %1130 = vmatpush1.bf16.msra.mxu0 0
        %1131 = vmatprep.subr.bf16.mxu0 0
        %1132 = vmatpush1.bf16.msra.mxu0 0
        %1133 = vmatprep.subr.bf16.mxu0 0
        %1134 = vmatpush1.bf16.msra.mxu0 0
        %1135 = vmatprep.subr.bf16.mxu0 0
        %1136 = vmatpush1.bf16.msra.mxu0 0
        %1137 = vmatprep.subr.bf16.mxu0 0
        %1138 = vmatpush1.bf16.msra.mxu0 0
        %1139 = vmatprep.subr.bf16.mxu0 0
        %1140 = vmatpush1.bf16.msra.mxu0 0
        %1141 = vmatprep.subr.bf16.mxu0 0
        %1142 = vmatpush1.bf16.msra.mxu0 0
        %1143 = vmatprep.mubr.bf16.mxu0 0
        %1144 = vmatmul.mubr.bf16.gmra.mrb[0].mxu0 %v1109
        %v1145 = vpop.f32.mrb[0].mxu0
        %v1146 = vadd.f32 0.0, %v1145
        %v1147 = vpop.f32.mrb[0].mxu0
        %v1148 = vpop.f32.mrb[0].mxu0
        %v1149 = vpop.f32.mrb[0].mxu0
        %1150 = vdwg.mxu0
        %v1152 = vsel %vm1016, %v1063, 0
        %1154 = vmatprep.subr.bf16.mxu0 0
        %1155 = vmatpush1.bf16.msra.mxu0 %v829
        %1156 = vmatprep.subr.bf16.mxu0 0
        %1157 = vmatpush1.bf16.msra.mxu0 0
        %1158 = vmatprep.subr.bf16.mxu0 0
        %1159 = vmatpush1.bf16.msra.mxu0 0
        %1160 = vmatprep.subr.bf16.mxu0 0
        %1161 = vmatpush1.bf16.msra.mxu0 0
        %1162 = vmatprep.subr.bf16.mxu0 0
        %1163 = vmatpush1.bf16.msra.mxu0 0
        %1164 = vmatprep.subr.bf16.mxu0 0
        %1165 = vmatpush1.bf16.msra.mxu0 0
        %1166 = vmatprep.subr.bf16.mxu0 0
        %1167 = vmatpush1.bf16.msra.mxu0 0
        %1168 = vmatprep.subr.bf16.mxu0 0
        %1169 = vmatpush1.bf16.msra.mxu0 0
        %1170 = vmatprep.subr.bf16.mxu0 0
        %1171 = vmatpush1.bf16.msra.mxu0 0
        %1172 = vmatprep.subr.bf16.mxu0 0
        %1173 = vmatpush1.bf16.msra.mxu0 0
        %1174 = vmatprep.subr.bf16.mxu0 0
        %1175 = vmatpush1.bf16.msra.mxu0 0
        %1176 = vmatprep.subr.bf16.mxu0 0
        %1177 = vmatpush1.bf16.msra.mxu0 0
        %1178 = vmatprep.subr.bf16.mxu0 0
        %1179 = vmatpush1.bf16.msra.mxu0 0
        %1180 = vmatprep.subr.bf16.mxu0 0
        %1181 = vmatpush1.bf16.msra.mxu0 0
        %1182 = vmatprep.subr.bf16.mxu0 0
        %1183 = vmatpush1.bf16.msra.mxu0 0
        %1184 = vmatprep.subr.bf16.mxu0 0
        %1185 = vmatpush1.bf16.msra.mxu0 0
        %1186 = vmatprep.mubr.bf16.mxu0 0
        %1187 = vmatmul.mubr.bf16.gmra.mrb[0].mxu0 %v1152
        %v1188 = vpop.f32.mrb[0].mxu0
        %v1189 = vadd.f32 0.0, %v1188
        %v1190 = vpop.f32.mrb[0].mxu0
        %v1191 = vpop.f32.mrb[0].mxu0
        %v1192 = vpop.f32.mrb[0].mxu0
        %1193 = vdwg.mxu0
        %v1195 = vsel %vm1016, %v1064, 0
        %1197 = vmatprep.subr.bf16.mxu0 0
        %1198 = vmatpush1.bf16.msra.mxu0 %v830
        %1199 = vmatprep.subr.bf16.mxu0 0
        %1200 = vmatpush1.bf16.msra.mxu0 0
        %1201 = vmatprep.subr.bf16.mxu0 0
        %1202 = vmatpush1.bf16.msra.mxu0 0
        %1203 = vmatprep.subr.bf16.mxu0 0
        %1204 = vmatpush1.bf16.msra.mxu0 0
        %1205 = vmatprep.subr.bf16.mxu0 0
        %1206 = vmatpush1.bf16.msra.mxu0 0
        %1207 = vmatprep.subr.bf16.mxu0 0
        %1208 = vmatpush1.bf16.msra.mxu0 0
        %1209 = vmatprep.subr.bf16.mxu0 0
        %1210 = vmatpush1.bf16.msra.mxu0 0
        %1211 = vmatprep.subr.bf16.mxu0 0
        %1212 = vmatpush1.bf16.msra.mxu0 0
        %1213 = vmatprep.subr.bf16.mxu0 0
        %1214 = vmatpush1.bf16.msra.mxu0 0
        %1215 = vmatprep.subr.bf16.mxu0 0
        %1216 = vmatpush1.bf16.msra.mxu0 0
        %1217 = vmatprep.subr.bf16.mxu0 0
        %1218 = vmatpush1.bf16.msra.mxu0 0
        %1219 = vmatprep.subr.bf16.mxu0 0
        %1220 = vmatpush1.bf16.msra.mxu0 0
        %1221 = vmatprep.subr.bf16.mxu0 0
        %1222 = vmatpush1.bf16.msra.mxu0 0
        %1223 = vmatprep.subr.bf16.mxu0 0
        %1224 = vmatpush1.bf16.msra.mxu0 0
        %1225 = vmatprep.subr.bf16.mxu0 0
        %1226 = vmatpush1.bf16.msra.mxu0 0
        %1227 = vmatprep.subr.bf16.mxu0 0
        %1228 = vmatpush1.bf16.msra.mxu0 0
        %1229 = vmatprep.mubr.bf16.mxu0 0
        %1230 = vmatmul.mubr.bf16.gmra.mrb[0].mxu0 %v1195
        %v1231 = vpop.f32.mrb[0].mxu0
        %v1232 = vadd.f32 0.0, %v1231
        %v1233 = vpop.f32.mrb[0].mxu0
        %v1234 = vpop.f32.mrb[0].mxu0
        %v1235 = vpop.f32.mrb[0].mxu0
        %1236 = vdwg.mxu0
        %1238 = vrot.lane.b32.xlu0 %v819, 120
        %v1239 = vpop.permute.xlu0 %1238
        %1241 = vrot.lane.b32.xlu0 %v823, 120
        %v1242 = vpop.permute.xlu0 %1241
        %v1244 = vsel %vm831, %v1239, 0
        %v1247 = vsel %vm831, %v1242, 0
        %1249 = vmatprep.subr.bf16.mxu0 0
        %1250 = vmatpush1.bf16.xpose.msra.mxu0 %v1247
        %1251 = vmatprep.subr.bf16.mxu0 0
        %1252 = vmatpush1.bf16.xpose.msra.mxu0 0
        %1253 = vmatprep.subr.bf16.mxu0 0
        %1254 = vmatpush1.bf16.xpose.msra.mxu0 0
        %1255 = vmatprep.subr.bf16.mxu0 0
        %1256 = vmatpush1.bf16.xpose.msra.mxu0 0
        %1257 = vmatprep.subr.bf16.mxu0 0
        %1258 = vmatpush1.bf16.xpose.msra.mxu0 0
        %1259 = vmatprep.subr.bf16.mxu0 0
        %1260 = vmatpush1.bf16.xpose.msra.mxu0 0
        %1261 = vmatprep.subr.bf16.mxu0 0
        %1262 = vmatpush1.bf16.xpose.msra.mxu0 0
        %1263 = vmatprep.subr.bf16.mxu0 0
        %1264 = vmatpush1.bf16.xpose.msra.mxu0 0
        %1265 = vmatprep.subr.bf16.mxu0 0
        %1266 = vmatpush1.bf16.xpose.msra.mxu0 0
        %1267 = vmatprep.subr.bf16.mxu0 0
        %1268 = vmatpush1.bf16.xpose.msra.mxu0 0
        %1269 = vmatprep.subr.bf16.mxu0 0
        %1270 = vmatpush1.bf16.xpose.msra.mxu0 0
        %1271 = vmatprep.subr.bf16.mxu0 0
        %1272 = vmatpush1.bf16.xpose.msra.mxu0 0
        %1273 = vmatprep.subr.bf16.mxu0 0
        %1274 = vmatpush1.bf16.xpose.msra.mxu0 0
        %1275 = vmatprep.subr.bf16.mxu0 0
        %1276 = vmatpush1.bf16.xpose.msra.mxu0 0
        %1277 = vmatprep.subr.bf16.mxu0 0
        %1278 = vmatpush1.bf16.xpose.msra.mxu0 0
        %1279 = vmatprep.subr.bf16.mxu0 0
        %1280 = vmatpush1.bf16.xpose.msra.mxu0 0
        %1281 = vmatprep.mubr.bf16.mxu0 0
        %1282 = vmatmul.mubr.bf16.gmra.mrb[0].mxu0 %v1244
        %v1283 = vpop.f32.mrb[0].mxu0
        %v1284 = vadd.f32 0.0, %v1283
        %v1285 = vpop.f32.mrb[0].mxu0
        %v1286 = vpop.f32.mrb[0].mxu0
        %v1287 = vpop.f32.mrb[0].mxu0
        %1288 = vdwg.mxu0
        %1290 = vrot.lane.b32.xlu0 %v820, 120
        %v1291 = vpop.permute.xlu0 %1290
        %1293 = vrot.lane.b32.xlu0 %v824, 120
        %v1294 = vpop.permute.xlu0 %1293
        %v1296 = vsel %vm831, %v1291, 0
        %v1299 = vsel %vm831, %v1294, 0
        %1301 = vmatprep.subr.bf16.mxu0 0
        %1302 = vmatpush1.bf16.xpose.msra.mxu0 %v1299
        %1303 = vmatprep.subr.bf16.mxu0 0
        %1304 = vmatpush1.bf16.xpose.msra.mxu0 0
        %1305 = vmatprep.subr.bf16.mxu0 0
        %1306 = vmatpush1.bf16.xpose.msra.mxu0 0
        %1307 = vmatprep.subr.bf16.mxu0 0
        %1308 = vmatpush1.bf16.xpose.msra.mxu0 0
        %1309 = vmatprep.subr.bf16.mxu0 0
        %1310 = vmatpush1.bf16.xpose.msra.mxu0 0
        %1311 = vmatprep.subr.bf16.mxu0 0
        %1312 = vmatpush1.bf16.xpose.msra.mxu0 0
        %1313 = vmatprep.subr.bf16.mxu0 0
        %1314 = vmatpush1.bf16.xpose.msra.mxu0 0
        %1315 = vmatprep.subr.bf16.mxu0 0
        %1316 = vmatpush1.bf16.xpose.msra.mxu0 0
        %1317 = vmatprep.subr.bf16.mxu0 0
        %1318 = vmatpush1.bf16.xpose.msra.mxu0 0
        %1319 = vmatprep.subr.bf16.mxu0 0
        %1320 = vmatpush1.bf16.xpose.msra.mxu0 0
        %1321 = vmatprep.subr.bf16.mxu0 0
        %1322 = vmatpush1.bf16.xpose.msra.mxu0 0
        %1323 = vmatprep.subr.bf16.mxu0 0
        %1324 = vmatpush1.bf16.xpose.msra.mxu0 0
        %1325 = vmatprep.subr.bf16.mxu0 0
        %1326 = vmatpush1.bf16.xpose.msra.mxu0 0
        %1327 = vmatprep.subr.bf16.mxu0 0
        %1328 = vmatpush1.bf16.xpose.msra.mxu0 0
        %1329 = vmatprep.subr.bf16.mxu0 0
        %1330 = vmatpush1.bf16.xpose.msra.mxu0 0
        %1331 = vmatprep.subr.bf16.mxu0 0
        %1332 = vmatpush1.bf16.xpose.msra.mxu0 0
        %1333 = vmatprep.mubr.bf16.mxu0 0
        %1334 = vmatmul.mubr.bf16.gmra.mrb[0].mxu0 %v1296
        %v1335 = vpop.f32.mrb[0].mxu0
        %v1336 = vadd.f32 0.0, %v1335
        %v1337 = vpop.f32.mrb[0].mxu0
        %v1338 = vpop.f32.mrb[0].mxu0
        %v1339 = vpop.f32.mrb[0].mxu0
        %1340 = vdwg.mxu0
        %1342 = vrot.lane.b32.xlu0 %v821, 120
        %v1343 = vpop.permute.xlu0 %1342
        %1345 = vrot.lane.b32.xlu0 %v825, 120
        %v1346 = vpop.permute.xlu0 %1345
        %v1348 = vsel %vm831, %v1343, 0
        %v1351 = vsel %vm831, %v1346, 0
        %1353 = vmatprep.subr.bf16.mxu0 0
        %1354 = vmatpush1.bf16.xpose.msra.mxu0 %v1351
        %1355 = vmatprep.subr.bf16.mxu0 0
        %1356 = vmatpush1.bf16.xpose.msra.mxu0 0
        %1357 = vmatprep.subr.bf16.mxu0 0
        %1358 = vmatpush1.bf16.xpose.msra.mxu0 0
        %1359 = vmatprep.subr.bf16.mxu0 0
        %1360 = vmatpush1.bf16.xpose.msra.mxu0 0
        %1361 = vmatprep.subr.bf16.mxu0 0
        %1362 = vmatpush1.bf16.xpose.msra.mxu0 0
        %1363 = vmatprep.subr.bf16.mxu0 0
        %1364 = vmatpush1.bf16.xpose.msra.mxu0 0
        %1365 = vmatprep.subr.bf16.mxu0 0
        %1366 = vmatpush1.bf16.xpose.msra.mxu0 0
        %1367 = vmatprep.subr.bf16.mxu0 0
        %1368 = vmatpush1.bf16.xpose.msra.mxu0 0
        %1369 = vmatprep.subr.bf16.mxu0 0
        %1370 = vmatpush1.bf16.xpose.msra.mxu0 0
        %1371 = vmatprep.subr.bf16.mxu0 0
        %1372 = vmatpush1.bf16.xpose.msra.mxu0 0
        %1373 = vmatprep.subr.bf16.mxu0 0
        %1374 = vmatpush1.bf16.xpose.msra.mxu0 0
        %1375 = vmatprep.subr.bf16.mxu0 0
        %1376 = vmatpush1.bf16.xpose.msra.mxu0 0
        %1377 = vmatprep.subr.bf16.mxu0 0
        %1378 = vmatpush1.bf16.xpose.msra.mxu0 0
        %1379 = vmatprep.subr.bf16.mxu0 0
        %1380 = vmatpush1.bf16.xpose.msra.mxu0 0
        %1381 = vmatprep.subr.bf16.mxu0 0
        %1382 = vmatpush1.bf16.xpose.msra.mxu0 0
        %1383 = vmatprep.subr.bf16.mxu0 0
        %1384 = vmatpush1.bf16.xpose.msra.mxu0 0
        %1385 = vmatprep.mubr.bf16.mxu0 0
        %1386 = vmatmul.mubr.bf16.gmra.mrb[0].mxu0 %v1348
        %v1387 = vpop.f32.mrb[0].mxu0
        %v1388 = vadd.f32 0.0, %v1387
        %v1389 = vpop.f32.mrb[0].mxu0
        %v1390 = vpop.f32.mrb[0].mxu0
        %v1391 = vpop.f32.mrb[0].mxu0
        %1392 = vdwg.mxu0
        %1394 = vrot.lane.b32.xlu0 %v822, 120
        %v1395 = vpop.permute.xlu0 %1394
        %1397 = vrot.lane.b32.xlu0 %v826, 120
        %v1398 = vpop.permute.xlu0 %1397
        %v1400 = vsel %vm831, %v1395, 0
        %v1403 = vsel %vm831, %v1398, 0
        %1405 = vmatprep.subr.bf16.mxu0 0
        %1406 = vmatpush1.bf16.xpose.msra.mxu0 %v1403
        %1407 = vmatprep.subr.bf16.mxu0 0
        %1408 = vmatpush1.bf16.xpose.msra.mxu0 0
        %1409 = vmatprep.subr.bf16.mxu0 0
        %1410 = vmatpush1.bf16.xpose.msra.mxu0 0
        %1411 = vmatprep.subr.bf16.mxu0 0
        %1412 = vmatpush1.bf16.xpose.msra.mxu0 0
        %1413 = vmatprep.subr.bf16.mxu0 0
        %1414 = vmatpush1.bf16.xpose.msra.mxu0 0
        %1415 = vmatprep.subr.bf16.mxu0 0
        %1416 = vmatpush1.bf16.xpose.msra.mxu0 0
        %1417 = vmatprep.subr.bf16.mxu0 0
        %1418 = vmatpush1.bf16.xpose.msra.mxu0 0
        %1419 = vmatprep.subr.bf16.mxu0 0
        %1420 = vmatpush1.bf16.xpose.msra.mxu0 0
        %1421 = vmatprep.subr.bf16.mxu0 0
        %1422 = vmatpush1.bf16.xpose.msra.mxu0 0
        %1423 = vmatprep.subr.bf16.mxu0 0
        %1424 = vmatpush1.bf16.xpose.msra.mxu0 0
        %1425 = vmatprep.subr.bf16.mxu0 0
        %1426 = vmatpush1.bf16.xpose.msra.mxu0 0
        %1427 = vmatprep.subr.bf16.mxu0 0
        %1428 = vmatpush1.bf16.xpose.msra.mxu0 0
        %1429 = vmatprep.subr.bf16.mxu0 0
        %1430 = vmatpush1.bf16.xpose.msra.mxu0 0
        %1431 = vmatprep.subr.bf16.mxu0 0
        %1432 = vmatpush1.bf16.xpose.msra.mxu0 0
        %1433 = vmatprep.subr.bf16.mxu0 0
        %1434 = vmatpush1.bf16.xpose.msra.mxu0 0
        %1435 = vmatprep.subr.bf16.mxu0 0
        %1436 = vmatpush1.bf16.xpose.msra.mxu0 0
        %1437 = vmatprep.mubr.bf16.mxu0 0
        %1438 = vmatmul.mubr.bf16.gmra.mrb[0].mxu0 %v1400
        %v1439 = vpop.f32.mrb[0].mxu0
        %v1440 = vadd.f32 0.0, %v1439
        %v1441 = vpop.f32.mrb[0].mxu0
        %v1442 = vpop.f32.mrb[0].mxu0
        %v1443 = vpop.f32.mrb[0].mxu0
        %1444 = vdwg.mxu0
        %v1445 = vsel %vm1016, %v1284, -inf
        %1446 = vmax.xlane.f32.xlu0 %v1445
        %v1447 = vpop.xlane.xlu0 %1446
        %v1448 = vsel %vm1016, %v1336, -inf
        %1449 = vmax.xlane.f32.xlu0 %v1448
        %v1450 = vpop.xlane.xlu0 %1449
        %v1451 = vsel %vm1016, %v1388, -inf
        %1452 = vmax.xlane.f32.xlu0 %v1451
        %v1453 = vpop.xlane.xlu0 %1452
        %v1454 = vsel %vm1016, %v1440, -inf
        %1455 = vmax.xlane.f32.xlu0 %v1454
        %v1456 = vpop.xlane.xlu0 %1455
        %v1457 = vsub.f32 %v1284, %v1447
        %v1458 = vsub.f32 %v1336, %v1450
        %v1459 = vsub.f32 %v1388, %v1453
        %v1460 = vsub.f32 %v1440, %v1456
        %v1461 = vmul.f32 %v1457, 1.442695
        %v1462 = vpow.pop %v1461
        %v1463 = vmul.f32 %v1458, 1.442695
        %v1464 = vpow.pop %v1463
        %v1465 = vmul.f32 %v1459, 1.442695
        %v1466 = vpow.pop %v1465
        %v1467 = vmul.f32 %v1460, 1.442695
        %v1468 = vpow.pop %v1467
        %v1469 = vsel %vm1016, %v1462, 0.0
        %1470 = vadd.xlane.f32.xlu0 %v1469
        %v1471 = vpop.xlane.xlu0 %1470
        %v1472 = vsel %vm1016, %v1464, 0.0
        %1473 = vadd.xlane.f32.xlu0 %v1472
        %v1474 = vpop.xlane.xlu0 %1473
        %v1475 = vsel %vm1016, %v1466, 0.0
        %1476 = vadd.xlane.f32.xlu0 %v1475
        %v1477 = vpop.xlane.xlu0 %1476
        %v1478 = vsel %vm1016, %v1468, 0.0
        %1479 = vadd.xlane.f32.xlu0 %v1478
        %v1480 = vpop.xlane.xlu0 %1479
        %v1481 = vrcp.pop %v1471
        %v1482 = vrcp.pop %v1474
        %v1483 = vrcp.pop %v1477
        %v1484 = vrcp.pop %v1480
        %v1485 = vmul.f32 %v1462, %v1481
        %v1486 = vmul.f32 %v1464, %v1482
        %v1487 = vmul.f32 %v1466, %v1483
        %v1488 = vmul.f32 %v1468, %v1484
        %v1489 = vpack.c.bf16 %v1485, %v1485
        %v1490 = vpack.c.bf16 %v1486, %v1486
        %v1491 = vpack.c.bf16 %v1487, %v1487
        %v1492 = vpack.c.bf16 %v1488, %v1488
        %1494 = vrot.lane.b32.xlu0 %v827, 120
        %v1495 = vpop.permute.xlu0 %1494
        %v1498 = vsel %vm1016, %v1489, 0
        %1500 = vmatprep.subr.bf16.mxu0 0
        %1501 = vmatpush1.bf16.msra.mxu0 %v1495
        %1502 = vmatprep.subr.bf16.mxu0 0
        %1503 = vmatpush1.bf16.msra.mxu0 0
        %1504 = vmatprep.subr.bf16.mxu0 0
        %1505 = vmatpush1.bf16.msra.mxu0 0
        %1506 = vmatprep.subr.bf16.mxu0 0
        %1507 = vmatpush1.bf16.msra.mxu0 0
        %1508 = vmatprep.subr.bf16.mxu0 0
        %1509 = vmatpush1.bf16.msra.mxu0 0
        %1510 = vmatprep.subr.bf16.mxu0 0
        %1511 = vmatpush1.bf16.msra.mxu0 0
        %1512 = vmatprep.subr.bf16.mxu0 0
        %1513 = vmatpush1.bf16.msra.mxu0 0
        %1514 = vmatprep.subr.bf16.mxu0 0
        %1515 = vmatpush1.bf16.msra.mxu0 0
        %1516 = vmatprep.subr.bf16.mxu0 0
        %1517 = vmatpush1.bf16.msra.mxu0 0
        %1518 = vmatprep.subr.bf16.mxu0 0
        %1519 = vmatpush1.bf16.msra.mxu0 0
        %1520 = vmatprep.subr.bf16.mxu0 0
        %1521 = vmatpush1.bf16.msra.mxu0 0
        %1522 = vmatprep.subr.bf16.mxu0 0
        %1523 = vmatpush1.bf16.msra.mxu0 0
        %1524 = vmatprep.subr.bf16.mxu0 0
        %1525 = vmatpush1.bf16.msra.mxu0 0
        %1526 = vmatprep.subr.bf16.mxu0 0
        %1527 = vmatpush1.bf16.msra.mxu0 0
        %1528 = vmatprep.subr.bf16.mxu0 0
        %1529 = vmatpush1.bf16.msra.mxu0 0
        %1530 = vmatprep.subr.bf16.mxu0 0
        %1531 = vmatpush1.bf16.msra.mxu0 0
        %1532 = vmatprep.mubr.bf16.mxu0 0
        %1533 = vmatmul.mubr.bf16.gmra.mrb[0].mxu0 %v1498
        %v1534 = vpop.f32.mrb[0].mxu0
        %v1535 = vadd.f32 0.0, %v1534
        %v1536 = vpop.f32.mrb[0].mxu0
        %v1537 = vpop.f32.mrb[0].mxu0
        %v1538 = vpop.f32.mrb[0].mxu0
        %1539 = vdwg.mxu0
        %1541 = vrot.lane.b32.xlu0 %v828, 120
        %v1542 = vpop.permute.xlu0 %1541
        %v1545 = vsel %vm1016, %v1490, 0
        %1547 = vmatprep.subr.bf16.mxu0 0
        %1548 = vmatpush1.bf16.msra.mxu0 %v1542
        %1549 = vmatprep.subr.bf16.mxu0 0
        %1550 = vmatpush1.bf16.msra.mxu0 0
        %1551 = vmatprep.subr.bf16.mxu0 0
        %1552 = vmatpush1.bf16.msra.mxu0 0
        %1553 = vmatprep.subr.bf16.mxu0 0
        %1554 = vmatpush1.bf16.msra.mxu0 0
        %1555 = vmatprep.subr.bf16.mxu0 0
        %1556 = vmatpush1.bf16.msra.mxu0 0
        %1557 = vmatprep.subr.bf16.mxu0 0
        %1558 = vmatpush1.bf16.msra.mxu0 0
        %1559 = vmatprep.subr.bf16.mxu0 0
        %1560 = vmatpush1.bf16.msra.mxu0 0
        %1561 = vmatprep.subr.bf16.mxu0 0
        %1562 = vmatpush1.bf16.msra.mxu0 0
        %1563 = vmatprep.subr.bf16.mxu0 0
        %1564 = vmatpush1.bf16.msra.mxu0 0
        %1565 = vmatprep.subr.bf16.mxu0 0
        %1566 = vmatpush1.bf16.msra.mxu0 0
        %1567 = vmatprep.subr.bf16.mxu0 0
        %1568 = vmatpush1.bf16.msra.mxu0 0
        %1569 = vmatprep.subr.bf16.mxu0 0
        %1570 = vmatpush1.bf16.msra.mxu0 0
        %1571 = vmatprep.subr.bf16.mxu0 0
        %1572 = vmatpush1.bf16.msra.mxu0 0
        %1573 = vmatprep.subr.bf16.mxu0 0
        %1574 = vmatpush1.bf16.msra.mxu0 0
        %1575 = vmatprep.subr.bf16.mxu0 0
        %1576 = vmatpush1.bf16.msra.mxu0 0
        %1577 = vmatprep.subr.bf16.mxu0 0
        %1578 = vmatpush1.bf16.msra.mxu0 0
        %1579 = vmatprep.mubr.bf16.mxu0 0
        %1580 = vmatmul.mubr.bf16.gmra.mrb[0].mxu0 %v1545
        %v1581 = vpop.f32.mrb[0].mxu0
        %v1582 = vadd.f32 0.0, %v1581
        %v1583 = vpop.f32.mrb[0].mxu0
        %v1584 = vpop.f32.mrb[0].mxu0
        %v1585 = vpop.f32.mrb[0].mxu0
        %1586 = vdwg.mxu0
        %1588 = vrot.lane.b32.xlu0 %v829, 120
        %v1589 = vpop.permute.xlu0 %1588
        %v1592 = vsel %vm1016, %v1491, 0
        %1594 = vmatprep.subr.bf16.mxu0 0
        %1595 = vmatpush1.bf16.msra.mxu0 %v1589
        %1596 = vmatprep.subr.bf16.mxu0 0
        %1597 = vmatpush1.bf16.msra.mxu0 0
        %1598 = vmatprep.subr.bf16.mxu0 0
        %1599 = vmatpush1.bf16.msra.mxu0 0
        %1600 = vmatprep.subr.bf16.mxu0 0
        %1601 = vmatpush1.bf16.msra.mxu0 0
        %1602 = vmatprep.subr.bf16.mxu0 0
        %1603 = vmatpush1.bf16.msra.mxu0 0
        %1604 = vmatprep.subr.bf16.mxu0 0
        %1605 = vmatpush1.bf16.msra.mxu0 0
        %1606 = vmatprep.subr.bf16.mxu0 0
        %1607 = vmatpush1.bf16.msra.mxu0 0
        %1608 = vmatprep.subr.bf16.mxu0 0
        %1609 = vmatpush1.bf16.msra.mxu0 0
        %1610 = vmatprep.subr.bf16.mxu0 0
        %1611 = vmatpush1.bf16.msra.mxu0 0
        %1612 = vmatprep.subr.bf16.mxu0 0
        %1613 = vmatpush1.bf16.msra.mxu0 0
        %1614 = vmatprep.subr.bf16.mxu0 0
        %1615 = vmatpush1.bf16.msra.mxu0 0
        %1616 = vmatprep.subr.bf16.mxu0 0
        %1617 = vmatpush1.bf16.msra.mxu0 0
        %1618 = vmatprep.subr.bf16.mxu0 0
        %1619 = vmatpush1.bf16.msra.mxu0 0
        %1620 = vmatprep.subr.bf16.mxu0 0
        %1621 = vmatpush1.bf16.msra.mxu0 0
        %1622 = vmatprep.subr.bf16.mxu0 0
        %1623 = vmatpush1.bf16.msra.mxu0 0
        %1624 = vmatprep.subr.bf16.mxu0 0
        %1625 = vmatpush1.bf16.msra.mxu0 0
        %1626 = vmatprep.mubr.bf16.mxu0 0
        %1627 = vmatmul.mubr.bf16.gmra.mrb[0].mxu0 %v1592
        %v1628 = vpop.f32.mrb[0].mxu0
        %v1629 = vadd.f32 0.0, %v1628
        %v1630 = vpop.f32.mrb[0].mxu0
        %v1631 = vpop.f32.mrb[0].mxu0
        %v1632 = vpop.f32.mrb[0].mxu0
        %1633 = vdwg.mxu0
        %1635 = vrot.lane.b32.xlu0 %v830, 120
        %v1636 = vpop.permute.xlu0 %1635
        %v1639 = vsel %vm1016, %v1492, 0
        %1641 = vmatprep.subr.bf16.mxu0 0
        %1642 = vmatpush1.bf16.msra.mxu0 %v1636
        %1643 = vmatprep.subr.bf16.mxu0 0
        %1644 = vmatpush1.bf16.msra.mxu0 0
        %1645 = vmatprep.subr.bf16.mxu0 0
        %1646 = vmatpush1.bf16.msra.mxu0 0
        %1647 = vmatprep.subr.bf16.mxu0 0
        %1648 = vmatpush1.bf16.msra.mxu0 0
        %1649 = vmatprep.subr.bf16.mxu0 0
        %1650 = vmatpush1.bf16.msra.mxu0 0
        %1651 = vmatprep.subr.bf16.mxu0 0
        %1652 = vmatpush1.bf16.msra.mxu0 0
        %1653 = vmatprep.subr.bf16.mxu0 0
        %1654 = vmatpush1.bf16.msra.mxu0 0
        %1655 = vmatprep.subr.bf16.mxu0 0
        %1656 = vmatpush1.bf16.msra.mxu0 0
        %1657 = vmatprep.subr.bf16.mxu0 0
        %1658 = vmatpush1.bf16.msra.mxu0 0
        %1659 = vmatprep.subr.bf16.mxu0 0
        %1660 = vmatpush1.bf16.msra.mxu0 0
        %1661 = vmatprep.subr.bf16.mxu0 0
        %1662 = vmatpush1.bf16.msra.mxu0 0
        %1663 = vmatprep.subr.bf16.mxu0 0
        %1664 = vmatpush1.bf16.msra.mxu0 0
        %1665 = vmatprep.subr.bf16.mxu0 0
        %1666 = vmatpush1.bf16.msra.mxu0 0
        %1667 = vmatprep.subr.bf16.mxu0 0
        %1668 = vmatpush1.bf16.msra.mxu0 0
        %1669 = vmatprep.subr.bf16.mxu0 0
        %1670 = vmatpush1.bf16.msra.mxu0 0
        %1671 = vmatprep.subr.bf16.mxu0 0
        %1672 = vmatpush1.bf16.msra.mxu0 0
        %1673 = vmatprep.mubr.bf16.mxu0 0
        %1674 = vmatmul.mubr.bf16.gmra.mrb[0].mxu0 %v1639
        %v1675 = vpop.f32.mrb[0].mxu0
        %v1676 = vadd.f32 0.0, %v1675
        %v1677 = vpop.f32.mrb[0].mxu0
        %v1678 = vpop.f32.mrb[0].mxu0
        %v1679 = vpop.f32.mrb[0].mxu0
        %1680 = vdwg.mxu0
        %1681 = vrot.lane.b32.xlu0 %v819, 112
        %v1682 = vpop.permute.xlu0 %1681
        %1683 = vrot.lane.b32.xlu0 %v823, 112
        %v1684 = vpop.permute.xlu0 %1683
        %v1686 = vsel %vm831, %v1682, 0
        %v1689 = vsel %vm831, %v1684, 0
        %1691 = vmatprep.subr.bf16.mxu0 0
        %1692 = vmatpush1.bf16.xpose.msra.mxu0 %v1689
        %1693 = vmatprep.subr.bf16.mxu0 0
        %1694 = vmatpush1.bf16.xpose.msra.mxu0 0
        %1695 = vmatprep.subr.bf16.mxu0 0
        %1696 = vmatpush1.bf16.xpose.msra.mxu0 0
        %1697 = vmatprep.subr.bf16.mxu0 0
        %1698 = vmatpush1.bf16.xpose.msra.mxu0 0
        %1699 = vmatprep.subr.bf16.mxu0 0
        %1700 = vmatpush1.bf16.xpose.msra.mxu0 0
        %1701 = vmatprep.subr.bf16.mxu0 0
        %1702 = vmatpush1.bf16.xpose.msra.mxu0 0
        %1703 = vmatprep.subr.bf16.mxu0 0
        %1704 = vmatpush1.bf16.xpose.msra.mxu0 0
        %1705 = vmatprep.subr.bf16.mxu0 0
        %1706 = vmatpush1.bf16.xpose.msra.mxu0 0
        %1707 = vmatprep.subr.bf16.mxu0 0
        %1708 = vmatpush1.bf16.xpose.msra.mxu0 0
        %1709 = vmatprep.subr.bf16.mxu0 0
        %1710 = vmatpush1.bf16.xpose.msra.mxu0 0
        %1711 = vmatprep.subr.bf16.mxu0 0
        %1712 = vmatpush1.bf16.xpose.msra.mxu0 0
        %1713 = vmatprep.subr.bf16.mxu0 0
        %1714 = vmatpush1.bf16.xpose.msra.mxu0 0
        %1715 = vmatprep.subr.bf16.mxu0 0
        %1716 = vmatpush1.bf16.xpose.msra.mxu0 0
        %1717 = vmatprep.subr.bf16.mxu0 0
        %1718 = vmatpush1.bf16.xpose.msra.mxu0 0
        %1719 = vmatprep.subr.bf16.mxu0 0
        %1720 = vmatpush1.bf16.xpose.msra.mxu0 0
        %1721 = vmatprep.subr.bf16.mxu0 0
        %1722 = vmatpush1.bf16.xpose.msra.mxu0 0
        %1723 = vmatprep.mubr.bf16.mxu0 0
        %1724 = vmatmul.mubr.bf16.gmra.mrb[0].mxu0 %v1686
        %v1725 = vpop.f32.mrb[0].mxu0
        %v1726 = vadd.f32 0.0, %v1725
        %v1727 = vpop.f32.mrb[0].mxu0
        %v1728 = vpop.f32.mrb[0].mxu0
        %v1729 = vpop.f32.mrb[0].mxu0
        %1730 = vdwg.mxu0
        %1731 = vrot.lane.b32.xlu0 %v820, 112
        %v1732 = vpop.permute.xlu0 %1731
        %1733 = vrot.lane.b32.xlu0 %v824, 112
        %v1734 = vpop.permute.xlu0 %1733
        %v1736 = vsel %vm831, %v1732, 0
        %v1739 = vsel %vm831, %v1734, 0
        %1741 = vmatprep.subr.bf16.mxu0 0
        %1742 = vmatpush1.bf16.xpose.msra.mxu0 %v1739
        %1743 = vmatprep.subr.bf16.mxu0 0
        %1744 = vmatpush1.bf16.xpose.msra.mxu0 0
        %1745 = vmatprep.subr.bf16.mxu0 0
        %1746 = vmatpush1.bf16.xpose.msra.mxu0 0
        %1747 = vmatprep.subr.bf16.mxu0 0
        %1748 = vmatpush1.bf16.xpose.msra.mxu0 0
        %1749 = vmatprep.subr.bf16.mxu0 0
        %1750 = vmatpush1.bf16.xpose.msra.mxu0 0
        %1751 = vmatprep.subr.bf16.mxu0 0
        %1752 = vmatpush1.bf16.xpose.msra.mxu0 0
        %1753 = vmatprep.subr.bf16.mxu0 0
        %1754 = vmatpush1.bf16.xpose.msra.mxu0 0
        %1755 = vmatprep.subr.bf16.mxu0 0
        %1756 = vmatpush1.bf16.xpose.msra.mxu0 0
        %1757 = vmatprep.subr.bf16.mxu0 0
        %1758 = vmatpush1.bf16.xpose.msra.mxu0 0
        %1759 = vmatprep.subr.bf16.mxu0 0
        %1760 = vmatpush1.bf16.xpose.msra.mxu0 0
        %1761 = vmatprep.subr.bf16.mxu0 0
        %1762 = vmatpush1.bf16.xpose.msra.mxu0 0
        %1763 = vmatprep.subr.bf16.mxu0 0
        %1764 = vmatpush1.bf16.xpose.msra.mxu0 0
        %1765 = vmatprep.subr.bf16.mxu0 0
        %1766 = vmatpush1.bf16.xpose.msra.mxu0 0
        %1767 = vmatprep.subr.bf16.mxu0 0
        %1768 = vmatpush1.bf16.xpose.msra.mxu0 0
        %1769 = vmatprep.subr.bf16.mxu0 0
        %1770 = vmatpush1.bf16.xpose.msra.mxu0 0
        %1771 = vmatprep.subr.bf16.mxu0 0
        %1772 = vmatpush1.bf16.xpose.msra.mxu0 0
        %1773 = vmatprep.mubr.bf16.mxu0 0
        %1774 = vmatmul.mubr.bf16.gmra.mrb[0].mxu0 %v1736
        %v1775 = vpop.f32.mrb[0].mxu0
        %v1776 = vadd.f32 0.0, %v1775
        %v1777 = vpop.f32.mrb[0].mxu0
        %v1778 = vpop.f32.mrb[0].mxu0
        %v1779 = vpop.f32.mrb[0].mxu0
        %1780 = vdwg.mxu0
        %1781 = vrot.lane.b32.xlu0 %v821, 112
        %v1782 = vpop.permute.xlu0 %1781
        %1783 = vrot.lane.b32.xlu0 %v825, 112
        %v1784 = vpop.permute.xlu0 %1783
        %v1786 = vsel %vm831, %v1782, 0
        %v1789 = vsel %vm831, %v1784, 0
        %1791 = vmatprep.subr.bf16.mxu0 0
        %1792 = vmatpush1.bf16.xpose.msra.mxu0 %v1789
        %1793 = vmatprep.subr.bf16.mxu0 0
        %1794 = vmatpush1.bf16.xpose.msra.mxu0 0
        %1795 = vmatprep.subr.bf16.mxu0 0
        %1796 = vmatpush1.bf16.xpose.msra.mxu0 0
        %1797 = vmatprep.subr.bf16.mxu0 0
        %1798 = vmatpush1.bf16.xpose.msra.mxu0 0
        %1799 = vmatprep.subr.bf16.mxu0 0
        %1800 = vmatpush1.bf16.xpose.msra.mxu0 0
        %1801 = vmatprep.subr.bf16.mxu0 0
        %1802 = vmatpush1.bf16.xpose.msra.mxu0 0
        %1803 = vmatprep.subr.bf16.mxu0 0
        %1804 = vmatpush1.bf16.xpose.msra.mxu0 0
        %1805 = vmatprep.subr.bf16.mxu0 0
        %1806 = vmatpush1.bf16.xpose.msra.mxu0 0
        %1807 = vmatprep.subr.bf16.mxu0 0
        %1808 = vmatpush1.bf16.xpose.msra.mxu0 0
        %1809 = vmatprep.subr.bf16.mxu0 0
        %1810 = vmatpush1.bf16.xpose.msra.mxu0 0
        %1811 = vmatprep.subr.bf16.mxu0 0
        %1812 = vmatpush1.bf16.xpose.msra.mxu0 0
        %1813 = vmatprep.subr.bf16.mxu0 0
        %1814 = vmatpush1.bf16.xpose.msra.mxu0 0
        %1815 = vmatprep.subr.bf16.mxu0 0
        %1816 = vmatpush1.bf16.xpose.msra.mxu0 0
        %1817 = vmatprep.subr.bf16.mxu0 0
        %1818 = vmatpush1.bf16.xpose.msra.mxu0 0
        %1819 = vmatprep.subr.bf16.mxu0 0
        %1820 = vmatpush1.bf16.xpose.msra.mxu0 0
        %1821 = vmatprep.subr.bf16.mxu0 0
        %1822 = vmatpush1.bf16.xpose.msra.mxu0 0
        %1823 = vmatprep.mubr.bf16.mxu0 0
        %1824 = vmatmul.mubr.bf16.gmra.mrb[0].mxu0 %v1786
        %v1825 = vpop.f32.mrb[0].mxu0
        %v1826 = vadd.f32 0.0, %v1825
        %v1827 = vpop.f32.mrb[0].mxu0
        %v1828 = vpop.f32.mrb[0].mxu0
        %v1829 = vpop.f32.mrb[0].mxu0
        %1830 = vdwg.mxu0
        %1831 = vrot.lane.b32.xlu0 %v822, 112
        %v1832 = vpop.permute.xlu0 %1831
        %1833 = vrot.lane.b32.xlu0 %v826, 112
        %v1834 = vpop.permute.xlu0 %1833
        %v1836 = vsel %vm831, %v1832, 0
        %v1839 = vsel %vm831, %v1834, 0
        %1841 = vmatprep.subr.bf16.mxu0 0
        %1842 = vmatpush1.bf16.xpose.msra.mxu0 %v1839
        %1843 = vmatprep.subr.bf16.mxu0 0
        %1844 = vmatpush1.bf16.xpose.msra.mxu0 0
        %1845 = vmatprep.subr.bf16.mxu0 0
        %1846 = vmatpush1.bf16.xpose.msra.mxu0 0
        %1847 = vmatprep.subr.bf16.mxu0 0
        %1848 = vmatpush1.bf16.xpose.msra.mxu0 0
        %1849 = vmatprep.subr.bf16.mxu0 0
        %1850 = vmatpush1.bf16.xpose.msra.mxu0 0
        %1851 = vmatprep.subr.bf16.mxu0 0
        %1852 = vmatpush1.bf16.xpose.msra.mxu0 0
        %1853 = vmatprep.subr.bf16.mxu0 0
        %1854 = vmatpush1.bf16.xpose.msra.mxu0 0
        %1855 = vmatprep.subr.bf16.mxu0 0
        %1856 = vmatpush1.bf16.xpose.msra.mxu0 0
        %1857 = vmatprep.subr.bf16.mxu0 0
        %1858 = vmatpush1.bf16.xpose.msra.mxu0 0
        %1859 = vmatprep.subr.bf16.mxu0 0
        %1860 = vmatpush1.bf16.xpose.msra.mxu0 0
        %1861 = vmatprep.subr.bf16.mxu0 0
        %1862 = vmatpush1.bf16.xpose.msra.mxu0 0
        %1863 = vmatprep.subr.bf16.mxu0 0
        %1864 = vmatpush1.bf16.xpose.msra.mxu0 0
        %1865 = vmatprep.subr.bf16.mxu0 0
        %1866 = vmatpush1.bf16.xpose.msra.mxu0 0
        %1867 = vmatprep.subr.bf16.mxu0 0
        %1868 = vmatpush1.bf16.xpose.msra.mxu0 0
        %1869 = vmatprep.subr.bf16.mxu0 0
        %1870 = vmatpush1.bf16.xpose.msra.mxu0 0
        %1871 = vmatprep.subr.bf16.mxu0 0
        %1872 = vmatpush1.bf16.xpose.msra.mxu0 0
        %1873 = vmatprep.mubr.bf16.mxu0 0
        %1874 = vmatmul.mubr.bf16.gmra.mrb[0].mxu0 %v1836
        %v1875 = vpop.f32.mrb[0].mxu0
        %v1876 = vadd.f32 0.0, %v1875
        %v1877 = vpop.f32.mrb[0].mxu0
        %v1878 = vpop.f32.mrb[0].mxu0
        %v1879 = vpop.f32.mrb[0].mxu0
        %1880 = vdwg.mxu0
        %v1881 = vsel %vm1016, %v1726, -inf
        %1882 = vmax.xlane.f32.xlu0 %v1881
        %v1883 = vpop.xlane.xlu0 %1882
        %v1884 = vsel %vm1016, %v1776, -inf
        %1885 = vmax.xlane.f32.xlu0 %v1884
        %v1886 = vpop.xlane.xlu0 %1885
        %v1887 = vsel %vm1016, %v1826, -inf
        %1888 = vmax.xlane.f32.xlu0 %v1887
        %v1889 = vpop.xlane.xlu0 %1888
        %v1890 = vsel %vm1016, %v1876, -inf
        %1891 = vmax.xlane.f32.xlu0 %v1890
        %v1892 = vpop.xlane.xlu0 %1891
        %v1893 = vsub.f32 %v1726, %v1883
        %v1894 = vsub.f32 %v1776, %v1886
        %v1895 = vsub.f32 %v1826, %v1889
        %v1896 = vsub.f32 %v1876, %v1892
        %v1897 = vmul.f32 %v1893, 1.442695
        %v1898 = vpow.pop %v1897
        %v1899 = vmul.f32 %v1894, 1.442695
        %v1900 = vpow.pop %v1899
        %v1901 = vmul.f32 %v1895, 1.442695
        %v1902 = vpow.pop %v1901
        %v1903 = vmul.f32 %v1896, 1.442695
        %v1904 = vpow.pop %v1903
        %v1905 = vsel %vm1016, %v1898, 0.0
        %1906 = vadd.xlane.f32.xlu0 %v1905
        %v1907 = vpop.xlane.xlu0 %1906
        %v1908 = vsel %vm1016, %v1900, 0.0
        %1909 = vadd.xlane.f32.xlu0 %v1908
        %v1910 = vpop.xlane.xlu0 %1909
        %v1911 = vsel %vm1016, %v1902, 0.0
        %1912 = vadd.xlane.f32.xlu0 %v1911
        %v1913 = vpop.xlane.xlu0 %1912
        %v1914 = vsel %vm1016, %v1904, 0.0
        %1915 = vadd.xlane.f32.xlu0 %v1914
        %v1916 = vpop.xlane.xlu0 %1915
        %v1917 = vrcp.pop %v1907
        %v1918 = vrcp.pop %v1910
        %v1919 = vrcp.pop %v1913
        %v1920 = vrcp.pop %v1916
        %v1921 = vmul.f32 %v1898, %v1917
        %v1922 = vmul.f32 %v1900, %v1918
        %v1923 = vmul.f32 %v1902, %v1919
        %v1924 = vmul.f32 %v1904, %v1920
        %v1925 = vpack.c.bf16 %v1921, %v1921
        %v1926 = vpack.c.bf16 %v1922, %v1922
        %v1927 = vpack.c.bf16 %v1923, %v1923
        %v1928 = vpack.c.bf16 %v1924, %v1924
        %1929 = vrot.lane.b32.xlu0 %v827, 112
        %v1930 = vpop.permute.xlu0 %1929
        %v1933 = vsel %vm1016, %v1925, 0
        %1935 = vmatprep.subr.bf16.mxu0 0
        %1936 = vmatpush1.bf16.msra.mxu0 %v1930
        %1937 = vmatprep.subr.bf16.mxu0 0
        %1938 = vmatpush1.bf16.msra.mxu0 0
        %1939 = vmatprep.subr.bf16.mxu0 0
        %1940 = vmatpush1.bf16.msra.mxu0 0
        %1941 = vmatprep.subr.bf16.mxu0 0
        %1942 = vmatpush1.bf16.msra.mxu0 0
        %1943 = vmatprep.subr.bf16.mxu0 0
        %1944 = vmatpush1.bf16.msra.mxu0 0
        %1945 = vmatprep.subr.bf16.mxu0 0
        %1946 = vmatpush1.bf16.msra.mxu0 0
        %1947 = vmatprep.subr.bf16.mxu0 0
        %1948 = vmatpush1.bf16.msra.mxu0 0
        %1949 = vmatprep.subr.bf16.mxu0 0
        %1950 = vmatpush1.bf16.msra.mxu0 0
        %1951 = vmatprep.subr.bf16.mxu0 0
        %1952 = vmatpush1.bf16.msra.mxu0 0
        %1953 = vmatprep.subr.bf16.mxu0 0
        %1954 = vmatpush1.bf16.msra.mxu0 0
        %1955 = vmatprep.subr.bf16.mxu0 0
        %1956 = vmatpush1.bf16.msra.mxu0 0
        %1957 = vmatprep.subr.bf16.mxu0 0
        %1958 = vmatpush1.bf16.msra.mxu0 0
        %1959 = vmatprep.subr.bf16.mxu0 0
        %1960 = vmatpush1.bf16.msra.mxu0 0
        %1961 = vmatprep.subr.bf16.mxu0 0
        %1962 = vmatpush1.bf16.msra.mxu0 0
        %1963 = vmatprep.subr.bf16.mxu0 0
        %1964 = vmatpush1.bf16.msra.mxu0 0
        %1965 = vmatprep.subr.bf16.mxu0 0
        %1966 = vmatpush1.bf16.msra.mxu0 0
        %1967 = vmatprep.mubr.bf16.mxu0 0
        %1968 = vmatmul.mubr.bf16.gmra.mrb[0].mxu0 %v1933
        %v1969 = vpop.f32.mrb[0].mxu0
        %v1970 = vadd.f32 0.0, %v1969
        %v1971 = vpop.f32.mrb[0].mxu0
        %v1972 = vpop.f32.mrb[0].mxu0
        %v1973 = vpop.f32.mrb[0].mxu0
        %1974 = vdwg.mxu0
        %1975 = vrot.lane.b32.xlu0 %v828, 112
        %v1976 = vpop.permute.xlu0 %1975
        %v1979 = vsel %vm1016, %v1926, 0
        %1981 = vmatprep.subr.bf16.mxu0 0
        %1982 = vmatpush1.bf16.msra.mxu0 %v1976
        %1983 = vmatprep.subr.bf16.mxu0 0
        %1984 = vmatpush1.bf16.msra.mxu0 0
        %1985 = vmatprep.subr.bf16.mxu0 0
        %1986 = vmatpush1.bf16.msra.mxu0 0
        %1987 = vmatprep.subr.bf16.mxu0 0
        %1988 = vmatpush1.bf16.msra.mxu0 0
        %1989 = vmatprep.subr.bf16.mxu0 0
        %1990 = vmatpush1.bf16.msra.mxu0 0
        %1991 = vmatprep.subr.bf16.mxu0 0
        %1992 = vmatpush1.bf16.msra.mxu0 0
        %1993 = vmatprep.subr.bf16.mxu0 0
        %1994 = vmatpush1.bf16.msra.mxu0 0
        %1995 = vmatprep.subr.bf16.mxu0 0
        %1996 = vmatpush1.bf16.msra.mxu0 0
        %1997 = vmatprep.subr.bf16.mxu0 0
        %1998 = vmatpush1.bf16.msra.mxu0 0
        %1999 = vmatprep.subr.bf16.mxu0 0
        %2000 = vmatpush1.bf16.msra.mxu0 0
        %2001 = vmatprep.subr.bf16.mxu0 0
        %2002 = vmatpush1.bf16.msra.mxu0 0
        %2003 = vmatprep.subr.bf16.mxu0 0
        %2004 = vmatpush1.bf16.msra.mxu0 0
        %2005 = vmatprep.subr.bf16.mxu0 0
        %2006 = vmatpush1.bf16.msra.mxu0 0
        %2007 = vmatprep.subr.bf16.mxu0 0
        %2008 = vmatpush1.bf16.msra.mxu0 0
        %2009 = vmatprep.subr.bf16.mxu0 0
        %2010 = vmatpush1.bf16.msra.mxu0 0
        %2011 = vmatprep.subr.bf16.mxu0 0
        %2012 = vmatpush1.bf16.msra.mxu0 0
        %2013 = vmatprep.mubr.bf16.mxu0 0
        %2014 = vmatmul.mubr.bf16.gmra.mrb[0].mxu0 %v1979
        %v2015 = vpop.f32.mrb[0].mxu0
        %v2016 = vadd.f32 0.0, %v2015
        %v2017 = vpop.f32.mrb[0].mxu0
        %v2018 = vpop.f32.mrb[0].mxu0
        %v2019 = vpop.f32.mrb[0].mxu0
        %2020 = vdwg.mxu0
        %2021 = vrot.lane.b32.xlu0 %v829, 112
        %v2022 = vpop.permute.xlu0 %2021
        %v2025 = vsel %vm1016, %v1927, 0
        %2027 = vmatprep.subr.bf16.mxu0 0
        %2028 = vmatpush1.bf16.msra.mxu0 %v2022
        %2029 = vmatprep.subr.bf16.mxu0 0
        %2030 = vmatpush1.bf16.msra.mxu0 0
        %2031 = vmatprep.subr.bf16.mxu0 0
        %2032 = vmatpush1.bf16.msra.mxu0 0
        %2033 = vmatprep.subr.bf16.mxu0 0
        %2034 = vmatpush1.bf16.msra.mxu0 0
        %2035 = vmatprep.subr.bf16.mxu0 0
        %2036 = vmatpush1.bf16.msra.mxu0 0
        %2037 = vmatprep.subr.bf16.mxu0 0
        %2038 = vmatpush1.bf16.msra.mxu0 0
        %2039 = vmatprep.subr.bf16.mxu0 0
        %2040 = vmatpush1.bf16.msra.mxu0 0
        %2041 = vmatprep.subr.bf16.mxu0 0
        %2042 = vmatpush1.bf16.msra.mxu0 0
        %2043 = vmatprep.subr.bf16.mxu0 0
        %2044 = vmatpush1.bf16.msra.mxu0 0
        %2045 = vmatprep.subr.bf16.mxu0 0
        %2046 = vmatpush1.bf16.msra.mxu0 0
        %2047 = vmatprep.subr.bf16.mxu0 0
        %2048 = vmatpush1.bf16.msra.mxu0 0
        %2049 = vmatprep.subr.bf16.mxu0 0
        %2050 = vmatpush1.bf16.msra.mxu0 0
        %2051 = vmatprep.subr.bf16.mxu0 0
        %2052 = vmatpush1.bf16.msra.mxu0 0
        %2053 = vmatprep.subr.bf16.mxu0 0
        %2054 = vmatpush1.bf16.msra.mxu0 0
        %2055 = vmatprep.subr.bf16.mxu0 0
        %2056 = vmatpush1.bf16.msra.mxu0 0
        %2057 = vmatprep.subr.bf16.mxu0 0
        %2058 = vmatpush1.bf16.msra.mxu0 0
        %2059 = vmatprep.mubr.bf16.mxu0 0
        %2060 = vmatmul.mubr.bf16.gmra.mrb[0].mxu0 %v2025
        %v2061 = vpop.f32.mrb[0].mxu0
        %v2062 = vadd.f32 0.0, %v2061
        %v2063 = vpop.f32.mrb[0].mxu0
        %v2064 = vpop.f32.mrb[0].mxu0
        %v2065 = vpop.f32.mrb[0].mxu0
        %2066 = vdwg.mxu0
        %2067 = vrot.lane.b32.xlu0 %v830, 112
        %v2068 = vpop.permute.xlu0 %2067
        %v2071 = vsel %vm1016, %v1928, 0
        %2073 = vmatprep.subr.bf16.mxu0 0
        %2074 = vmatpush1.bf16.msra.mxu0 %v2068
        %2075 = vmatprep.subr.bf16.mxu0 0
        %2076 = vmatpush1.bf16.msra.mxu0 0
        %2077 = vmatprep.subr.bf16.mxu0 0
        %2078 = vmatpush1.bf16.msra.mxu0 0
        %2079 = vmatprep.subr.bf16.mxu0 0
        %2080 = vmatpush1.bf16.msra.mxu0 0
        %2081 = vmatprep.subr.bf16.mxu0 0
        %2082 = vmatpush1.bf16.msra.mxu0 0
        %2083 = vmatprep.subr.bf16.mxu0 0
        %2084 = vmatpush1.bf16.msra.mxu0 0
        %2085 = vmatprep.subr.bf16.mxu0 0
        %2086 = vmatpush1.bf16.msra.mxu0 0
        %2087 = vmatprep.subr.bf16.mxu0 0
        %2088 = vmatpush1.bf16.msra.mxu0 0
        %2089 = vmatprep.subr.bf16.mxu0 0
        %2090 = vmatpush1.bf16.msra.mxu0 0
        %2091 = vmatprep.subr.bf16.mxu0 0
        %2092 = vmatpush1.bf16.msra.mxu0 0
        %2093 = vmatprep.subr.bf16.mxu0 0
        %2094 = vmatpush1.bf16.msra.mxu0 0
        %2095 = vmatprep.subr.bf16.mxu0 0
        %2096 = vmatpush1.bf16.msra.mxu0 0
        %2097 = vmatprep.subr.bf16.mxu0 0
        %2098 = vmatpush1.bf16.msra.mxu0 0
        %2099 = vmatprep.subr.bf16.mxu0 0
        %2100 = vmatpush1.bf16.msra.mxu0 0
        %2101 = vmatprep.subr.bf16.mxu0 0
        %2102 = vmatpush1.bf16.msra.mxu0 0
        %2103 = vmatprep.subr.bf16.mxu0 0
        %2104 = vmatpush1.bf16.msra.mxu0 0
        %2105 = vmatprep.mubr.bf16.mxu0 0
        %2106 = vmatmul.mubr.bf16.gmra.mrb[0].mxu0 %v2071
        %v2107 = vpop.f32.mrb[0].mxu0
        %v2108 = vadd.f32 0.0, %v2107
        %v2109 = vpop.f32.mrb[0].mxu0
        %v2110 = vpop.f32.mrb[0].mxu0
        %v2111 = vpop.f32.mrb[0].mxu0
        %2112 = vdwg.mxu0
        %2113 = vrot.lane.b32.xlu0 %v819, 104
        %v2114 = vpop.permute.xlu0 %2113
        %2115 = vrot.lane.b32.xlu0 %v823, 104
        %v2116 = vpop.permute.xlu0 %2115
        %v2118 = vsel %vm831, %v2114, 0
        %v2121 = vsel %vm831, %v2116, 0
        %2123 = vmatprep.subr.bf16.mxu0 0
        %2124 = vmatpush1.bf16.xpose.msra.mxu0 %v2121
        %2125 = vmatprep.subr.bf16.mxu0 0
        %2126 = vmatpush1.bf16.xpose.msra.mxu0 0
        %2127 = vmatprep.subr.bf16.mxu0 0
        %2128 = vmatpush1.bf16.xpose.msra.mxu0 0
        %2129 = vmatprep.subr.bf16.mxu0 0
        %2130 = vmatpush1.bf16.xpose.msra.mxu0 0
        %2131 = vmatprep.subr.bf16.mxu0 0
        %2132 = vmatpush1.bf16.xpose.msra.mxu0 0
        %2133 = vmatprep.subr.bf16.mxu0 0
        %2134 = vmatpush1.bf16.xpose.msra.mxu0 0
        %2135 = vmatprep.subr.bf16.mxu0 0
        %2136 = vmatpush1.bf16.xpose.msra.mxu0 0
        %2137 = vmatprep.subr.bf16.mxu0 0
        %2138 = vmatpush1.bf16.xpose.msra.mxu0 0
        %2139 = vmatprep.subr.bf16.mxu0 0
        %2140 = vmatpush1.bf16.xpose.msra.mxu0 0
        %2141 = vmatprep.subr.bf16.mxu0 0
        %2142 = vmatpush1.bf16.xpose.msra.mxu0 0
        %2143 = vmatprep.subr.bf16.mxu0 0
        %2144 = vmatpush1.bf16.xpose.msra.mxu0 0
        %2145 = vmatprep.subr.bf16.mxu0 0
        %2146 = vmatpush1.bf16.xpose.msra.mxu0 0
        %2147 = vmatprep.subr.bf16.mxu0 0
        %2148 = vmatpush1.bf16.xpose.msra.mxu0 0
        %2149 = vmatprep.subr.bf16.mxu0 0
        %2150 = vmatpush1.bf16.xpose.msra.mxu0 0
        %2151 = vmatprep.subr.bf16.mxu0 0
        %2152 = vmatpush1.bf16.xpose.msra.mxu0 0
        %2153 = vmatprep.subr.bf16.mxu0 0
        %2154 = vmatpush1.bf16.xpose.msra.mxu0 0
        %2155 = vmatprep.mubr.bf16.mxu0 0
        %2156 = vmatmul.mubr.bf16.gmra.mrb[0].mxu0 %v2118
        %v2157 = vpop.f32.mrb[0].mxu0
        %v2158 = vadd.f32 0.0, %v2157
        %v2159 = vpop.f32.mrb[0].mxu0
        %v2160 = vpop.f32.mrb[0].mxu0
        %v2161 = vpop.f32.mrb[0].mxu0
        %2162 = vdwg.mxu0
        %2163 = vrot.lane.b32.xlu0 %v820, 104
        %v2164 = vpop.permute.xlu0 %2163
        %2165 = vrot.lane.b32.xlu0 %v824, 104
        %v2166 = vpop.permute.xlu0 %2165
        %v2168 = vsel %vm831, %v2164, 0
        %v2171 = vsel %vm831, %v2166, 0
        %2173 = vmatprep.subr.bf16.mxu0 0
        %2174 = vmatpush1.bf16.xpose.msra.mxu0 %v2171
        %2175 = vmatprep.subr.bf16.mxu0 0
        %2176 = vmatpush1.bf16.xpose.msra.mxu0 0
        %2177 = vmatprep.subr.bf16.mxu0 0
        %2178 = vmatpush1.bf16.xpose.msra.mxu0 0
        %2179 = vmatprep.subr.bf16.mxu0 0
        %2180 = vmatpush1.bf16.xpose.msra.mxu0 0
        %2181 = vmatprep.subr.bf16.mxu0 0
        %2182 = vmatpush1.bf16.xpose.msra.mxu0 0
        %2183 = vmatprep.subr.bf16.mxu0 0
        %2184 = vmatpush1.bf16.xpose.msra.mxu0 0
        %2185 = vmatprep.subr.bf16.mxu0 0
        %2186 = vmatpush1.bf16.xpose.msra.mxu0 0
        %2187 = vmatprep.subr.bf16.mxu0 0
        %2188 = vmatpush1.bf16.xpose.msra.mxu0 0
        %2189 = vmatprep.subr.bf16.mxu0 0
        %2190 = vmatpush1.bf16.xpose.msra.mxu0 0
        %2191 = vmatprep.subr.bf16.mxu0 0
        %2192 = vmatpush1.bf16.xpose.msra.mxu0 0
        %2193 = vmatprep.subr.bf16.mxu0 0
        %2194 = vmatpush1.bf16.xpose.msra.mxu0 0
        %2195 = vmatprep.subr.bf16.mxu0 0
        %2196 = vmatpush1.bf16.xpose.msra.mxu0 0
        %2197 = vmatprep.subr.bf16.mxu0 0
        %2198 = vmatpush1.bf16.xpose.msra.mxu0 0
        %2199 = vmatprep.subr.bf16.mxu0 0
        %2200 = vmatpush1.bf16.xpose.msra.mxu0 0
        %2201 = vmatprep.subr.bf16.mxu0 0
        %2202 = vmatpush1.bf16.xpose.msra.mxu0 0
        %2203 = vmatprep.subr.bf16.mxu0 0
        %2204 = vmatpush1.bf16.xpose.msra.mxu0 0
        %2205 = vmatprep.mubr.bf16.mxu0 0
        %2206 = vmatmul.mubr.bf16.gmra.mrb[0].mxu0 %v2168
        %v2207 = vpop.f32.mrb[0].mxu0
        %v2208 = vadd.f32 0.0, %v2207
        %v2209 = vpop.f32.mrb[0].mxu0
        %v2210 = vpop.f32.mrb[0].mxu0
        %v2211 = vpop.f32.mrb[0].mxu0
        %2212 = vdwg.mxu0
        %2213 = vrot.lane.b32.xlu0 %v821, 104
        %v2214 = vpop.permute.xlu0 %2213
        %2215 = vrot.lane.b32.xlu0 %v825, 104
        %v2216 = vpop.permute.xlu0 %2215
        %v2218 = vsel %vm831, %v2214, 0
        %v2221 = vsel %vm831, %v2216, 0
        %2223 = vmatprep.subr.bf16.mxu0 0
        %2224 = vmatpush1.bf16.xpose.msra.mxu0 %v2221
        %2225 = vmatprep.subr.bf16.mxu0 0
        %2226 = vmatpush1.bf16.xpose.msra.mxu0 0
        %2227 = vmatprep.subr.bf16.mxu0 0
        %2228 = vmatpush1.bf16.xpose.msra.mxu0 0
        %2229 = vmatprep.subr.bf16.mxu0 0
        %2230 = vmatpush1.bf16.xpose.msra.mxu0 0
        %2231 = vmatprep.subr.bf16.mxu0 0
        %2232 = vmatpush1.bf16.xpose.msra.mxu0 0
        %2233 = vmatprep.subr.bf16.mxu0 0
        %2234 = vmatpush1.bf16.xpose.msra.mxu0 0
        %2235 = vmatprep.subr.bf16.mxu0 0
        %2236 = vmatpush1.bf16.xpose.msra.mxu0 0
        %2237 = vmatprep.subr.bf16.mxu0 0
        %2238 = vmatpush1.bf16.xpose.msra.mxu0 0
        %2239 = vmatprep.subr.bf16.mxu0 0
        %2240 = vmatpush1.bf16.xpose.msra.mxu0 0
        %2241 = vmatprep.subr.bf16.mxu0 0
        %2242 = vmatpush1.bf16.xpose.msra.mxu0 0
        %2243 = vmatprep.subr.bf16.mxu0 0
        %2244 = vmatpush1.bf16.xpose.msra.mxu0 0
        %2245 = vmatprep.subr.bf16.mxu0 0
        %2246 = vmatpush1.bf16.xpose.msra.mxu0 0
        %2247 = vmatprep.subr.bf16.mxu0 0
        %2248 = vmatpush1.bf16.xpose.msra.mxu0 0
        %2249 = vmatprep.subr.bf16.mxu0 0
        %2250 = vmatpush1.bf16.xpose.msra.mxu0 0
        %2251 = vmatprep.subr.bf16.mxu0 0
        %2252 = vmatpush1.bf16.xpose.msra.mxu0 0
        %2253 = vmatprep.subr.bf16.mxu0 0
        %2254 = vmatpush1.bf16.xpose.msra.mxu0 0
        %2255 = vmatprep.mubr.bf16.mxu0 0
        %2256 = vmatmul.mubr.bf16.gmra.mrb[0].mxu0 %v2218
        %v2257 = vpop.f32.mrb[0].mxu0
        %v2258 = vadd.f32 0.0, %v2257
        %v2259 = vpop.f32.mrb[0].mxu0
        %v2260 = vpop.f32.mrb[0].mxu0
        %v2261 = vpop.f32.mrb[0].mxu0
        %2262 = vdwg.mxu0
        %2263 = vrot.lane.b32.xlu0 %v822, 104
        %v2264 = vpop.permute.xlu0 %2263
        %2265 = vrot.lane.b32.xlu0 %v826, 104
        %v2266 = vpop.permute.xlu0 %2265
        %v2268 = vsel %vm831, %v2264, 0
        %v2271 = vsel %vm831, %v2266, 0
        %2273 = vmatprep.subr.bf16.mxu0 0
        %2274 = vmatpush1.bf16.xpose.msra.mxu0 %v2271
        %2275 = vmatprep.subr.bf16.mxu0 0
        %2276 = vmatpush1.bf16.xpose.msra.mxu0 0
        %2277 = vmatprep.subr.bf16.mxu0 0
        %2278 = vmatpush1.bf16.xpose.msra.mxu0 0
        %2279 = vmatprep.subr.bf16.mxu0 0
        %2280 = vmatpush1.bf16.xpose.msra.mxu0 0
        %2281 = vmatprep.subr.bf16.mxu0 0
        %2282 = vmatpush1.bf16.xpose.msra.mxu0 0
        %2283 = vmatprep.subr.bf16.mxu0 0
        %2284 = vmatpush1.bf16.xpose.msra.mxu0 0
        %2285 = vmatprep.subr.bf16.mxu0 0
        %2286 = vmatpush1.bf16.xpose.msra.mxu0 0
        %2287 = vmatprep.subr.bf16.mxu0 0
        %2288 = vmatpush1.bf16.xpose.msra.mxu0 0
        %2289 = vmatprep.subr.bf16.mxu0 0
        %2290 = vmatpush1.bf16.xpose.msra.mxu0 0
        %2291 = vmatprep.subr.bf16.mxu0 0
        %2292 = vmatpush1.bf16.xpose.msra.mxu0 0
        %2293 = vmatprep.subr.bf16.mxu0 0
        %2294 = vmatpush1.bf16.xpose.msra.mxu0 0
        %2295 = vmatprep.subr.bf16.mxu0 0
        %2296 = vmatpush1.bf16.xpose.msra.mxu0 0
        %2297 = vmatprep.subr.bf16.mxu0 0
        %2298 = vmatpush1.bf16.xpose.msra.mxu0 0
        %2299 = vmatprep.subr.bf16.mxu0 0
        %2300 = vmatpush1.bf16.xpose.msra.mxu0 0
        %2301 = vmatprep.subr.bf16.mxu0 0
        %2302 = vmatpush1.bf16.xpose.msra.mxu0 0
        %2303 = vmatprep.subr.bf16.mxu0 0
        %2304 = vmatpush1.bf16.xpose.msra.mxu0 0
        %2305 = vmatprep.mubr.bf16.mxu0 0
        %2306 = vmatmul.mubr.bf16.gmra.mrb[0].mxu0 %v2268
        %v2307 = vpop.f32.mrb[0].mxu0
        %v2308 = vadd.f32 0.0, %v2307
        %v2309 = vpop.f32.mrb[0].mxu0
        %v2310 = vpop.f32.mrb[0].mxu0
        %v2311 = vpop.f32.mrb[0].mxu0
        %2312 = vdwg.mxu0
        %v2313 = vsel %vm1016, %v2158, -inf
        %2314 = vmax.xlane.f32.xlu0 %v2313
        %v2315 = vpop.xlane.xlu0 %2314
        %v2316 = vsel %vm1016, %v2208, -inf
        %2317 = vmax.xlane.f32.xlu0 %v2316
        %v2318 = vpop.xlane.xlu0 %2317
        %v2319 = vsel %vm1016, %v2258, -inf
        %2320 = vmax.xlane.f32.xlu0 %v2319
        %v2321 = vpop.xlane.xlu0 %2320
        %v2322 = vsel %vm1016, %v2308, -inf
        %2323 = vmax.xlane.f32.xlu0 %v2322
        %v2324 = vpop.xlane.xlu0 %2323
        %v2325 = vsub.f32 %v2158, %v2315
        %v2326 = vsub.f32 %v2208, %v2318
        %v2327 = vsub.f32 %v2258, %v2321
        %v2328 = vsub.f32 %v2308, %v2324
        %v2329 = vmul.f32 %v2325, 1.442695
        %v2330 = vpow.pop %v2329
        %v2331 = vmul.f32 %v2326, 1.442695
        %v2332 = vpow.pop %v2331
        %v2333 = vmul.f32 %v2327, 1.442695
        %v2334 = vpow.pop %v2333
        %v2335 = vmul.f32 %v2328, 1.442695
        %v2336 = vpow.pop %v2335
        %v2337 = vsel %vm1016, %v2330, 0.0
        %2338 = vadd.xlane.f32.xlu0 %v2337
        %v2339 = vpop.xlane.xlu0 %2338
        %v2340 = vsel %vm1016, %v2332, 0.0
        %2341 = vadd.xlane.f32.xlu0 %v2340
        %v2342 = vpop.xlane.xlu0 %2341
        %v2343 = vsel %vm1016, %v2334, 0.0
        %2344 = vadd.xlane.f32.xlu0 %v2343
        %v2345 = vpop.xlane.xlu0 %2344
        %v2346 = vsel %vm1016, %v2336, 0.0
        %2347 = vadd.xlane.f32.xlu0 %v2346
        %v2348 = vpop.xlane.xlu0 %2347
        %v2349 = vrcp.pop %v2339
        %v2350 = vrcp.pop %v2342
        %v2351 = vrcp.pop %v2345
        %v2352 = vrcp.pop %v2348
        %v2353 = vmul.f32 %v2330, %v2349
        %v2354 = vmul.f32 %v2332, %v2350
        %v2355 = vmul.f32 %v2334, %v2351
        %v2356 = vmul.f32 %v2336, %v2352
        %v2357 = vpack.c.bf16 %v2353, %v2353
        %v2358 = vpack.c.bf16 %v2354, %v2354
        %v2359 = vpack.c.bf16 %v2355, %v2355
        %v2360 = vpack.c.bf16 %v2356, %v2356
        %2361 = vrot.lane.b32.xlu0 %v827, 104
        %v2362 = vpop.permute.xlu0 %2361
        %v2365 = vsel %vm1016, %v2357, 0
        %2367 = vmatprep.subr.bf16.mxu0 0
        %2368 = vmatpush1.bf16.msra.mxu0 %v2362
        %2369 = vmatprep.subr.bf16.mxu0 0
        %2370 = vmatpush1.bf16.msra.mxu0 0
        %2371 = vmatprep.subr.bf16.mxu0 0
        %2372 = vmatpush1.bf16.msra.mxu0 0
        %2373 = vmatprep.subr.bf16.mxu0 0
        %2374 = vmatpush1.bf16.msra.mxu0 0
        %2375 = vmatprep.subr.bf16.mxu0 0
        %2376 = vmatpush1.bf16.msra.mxu0 0
        %2377 = vmatprep.subr.bf16.mxu0 0
        %2378 = vmatpush1.bf16.msra.mxu0 0
        %2379 = vmatprep.subr.bf16.mxu0 0
        %2380 = vmatpush1.bf16.msra.mxu0 0
        %2381 = vmatprep.subr.bf16.mxu0 0
        %2382 = vmatpush1.bf16.msra.mxu0 0
        %2383 = vmatprep.subr.bf16.mxu0 0
        %2384 = vmatpush1.bf16.msra.mxu0 0
        %2385 = vmatprep.subr.bf16.mxu0 0
        %2386 = vmatpush1.bf16.msra.mxu0 0
        %2387 = vmatprep.subr.bf16.mxu0 0
        %2388 = vmatpush1.bf16.msra.mxu0 0
        %2389 = vmatprep.subr.bf16.mxu0 0
        %2390 = vmatpush1.bf16.msra.mxu0 0
        %2391 = vmatprep.subr.bf16.mxu0 0
        %2392 = vmatpush1.bf16.msra.mxu0 0
        %2393 = vmatprep.subr.bf16.mxu0 0
        %2394 = vmatpush1.bf16.msra.mxu0 0
        %2395 = vmatprep.subr.bf16.mxu0 0
        %2396 = vmatpush1.bf16.msra.mxu0 0
        %2397 = vmatprep.subr.bf16.mxu0 0
        %2398 = vmatpush1.bf16.msra.mxu0 0
        %2399 = vmatprep.mubr.bf16.mxu0 0
        %2400 = vmatmul.mubr.bf16.gmra.mrb[0].mxu0 %v2365
        %v2401 = vpop.f32.mrb[0].mxu0
        %v2402 = vadd.f32 0.0, %v2401
        %v2403 = vpop.f32.mrb[0].mxu0
        %v2404 = vpop.f32.mrb[0].mxu0
        %v2405 = vpop.f32.mrb[0].mxu0
        %2406 = vdwg.mxu0
        %2407 = vrot.lane.b32.xlu0 %v828, 104
        %v2408 = vpop.permute.xlu0 %2407
        %v2411 = vsel %vm1016, %v2358, 0
        %2413 = vmatprep.subr.bf16.mxu0 0
        %2414 = vmatpush1.bf16.msra.mxu0 %v2408
        %2415 = vmatprep.subr.bf16.mxu0 0
        %2416 = vmatpush1.bf16.msra.mxu0 0
        %2417 = vmatprep.subr.bf16.mxu0 0
        %2418 = vmatpush1.bf16.msra.mxu0 0
        %2419 = vmatprep.subr.bf16.mxu0 0
        %2420 = vmatpush1.bf16.msra.mxu0 0
        %2421 = vmatprep.subr.bf16.mxu0 0
        %2422 = vmatpush1.bf16.msra.mxu0 0
        %2423 = vmatprep.subr.bf16.mxu0 0
        %2424 = vmatpush1.bf16.msra.mxu0 0
        %2425 = vmatprep.subr.bf16.mxu0 0
        %2426 = vmatpush1.bf16.msra.mxu0 0
        %2427 = vmatprep.subr.bf16.mxu0 0
        %2428 = vmatpush1.bf16.msra.mxu0 0
        %2429 = vmatprep.subr.bf16.mxu0 0
        %2430 = vmatpush1.bf16.msra.mxu0 0
        %2431 = vmatprep.subr.bf16.mxu0 0
        %2432 = vmatpush1.bf16.msra.mxu0 0
        %2433 = vmatprep.subr.bf16.mxu0 0
        %2434 = vmatpush1.bf16.msra.mxu0 0
        %2435 = vmatprep.subr.bf16.mxu0 0
        %2436 = vmatpush1.bf16.msra.mxu0 0
        %2437 = vmatprep.subr.bf16.mxu0 0
        %2438 = vmatpush1.bf16.msra.mxu0 0
        %2439 = vmatprep.subr.bf16.mxu0 0
        %2440 = vmatpush1.bf16.msra.mxu0 0
        %2441 = vmatprep.subr.bf16.mxu0 0
        %2442 = vmatpush1.bf16.msra.mxu0 0
        %2443 = vmatprep.subr.bf16.mxu0 0
        %2444 = vmatpush1.bf16.msra.mxu0 0
        %2445 = vmatprep.mubr.bf16.mxu0 0
        %2446 = vmatmul.mubr.bf16.gmra.mrb[0].mxu0 %v2411
        %v2447 = vpop.f32.mrb[0].mxu0
        %v2448 = vadd.f32 0.0, %v2447
        %v2449 = vpop.f32.mrb[0].mxu0
        %v2450 = vpop.f32.mrb[0].mxu0
        %v2451 = vpop.f32.mrb[0].mxu0
        %2452 = vdwg.mxu0
        %2453 = vrot.lane.b32.xlu0 %v829, 104
        %v2454 = vpop.permute.xlu0 %2453
        %v2457 = vsel %vm1016, %v2359, 0
        %2459 = vmatprep.subr.bf16.mxu0 0
        %2460 = vmatpush1.bf16.msra.mxu0 %v2454
        %2461 = vmatprep.subr.bf16.mxu0 0
        %2462 = vmatpush1.bf16.msra.mxu0 0
        %2463 = vmatprep.subr.bf16.mxu0 0
        %2464 = vmatpush1.bf16.msra.mxu0 0
        %2465 = vmatprep.subr.bf16.mxu0 0
        %2466 = vmatpush1.bf16.msra.mxu0 0
        %2467 = vmatprep.subr.bf16.mxu0 0
        %2468 = vmatpush1.bf16.msra.mxu0 0
        %2469 = vmatprep.subr.bf16.mxu0 0
        %2470 = vmatpush1.bf16.msra.mxu0 0
        %2471 = vmatprep.subr.bf16.mxu0 0
        %2472 = vmatpush1.bf16.msra.mxu0 0
        %2473 = vmatprep.subr.bf16.mxu0 0
        %2474 = vmatpush1.bf16.msra.mxu0 0
        %2475 = vmatprep.subr.bf16.mxu0 0
        %2476 = vmatpush1.bf16.msra.mxu0 0
        %2477 = vmatprep.subr.bf16.mxu0 0
        %2478 = vmatpush1.bf16.msra.mxu0 0
        %2479 = vmatprep.subr.bf16.mxu0 0
        %2480 = vmatpush1.bf16.msra.mxu0 0
        %2481 = vmatprep.subr.bf16.mxu0 0
        %2482 = vmatpush1.bf16.msra.mxu0 0
        %2483 = vmatprep.subr.bf16.mxu0 0
        %2484 = vmatpush1.bf16.msra.mxu0 0
        %2485 = vmatprep.subr.bf16.mxu0 0
        %2486 = vmatpush1.bf16.msra.mxu0 0
        %2487 = vmatprep.subr.bf16.mxu0 0
        %2488 = vmatpush1.bf16.msra.mxu0 0
        %2489 = vmatprep.subr.bf16.mxu0 0
        %2490 = vmatpush1.bf16.msra.mxu0 0
        %2491 = vmatprep.mubr.bf16.mxu0 0
        %2492 = vmatmul.mubr.bf16.gmra.mrb[0].mxu0 %v2457
        %v2493 = vpop.f32.mrb[0].mxu0
        %v2494 = vadd.f32 0.0, %v2493
        %v2495 = vpop.f32.mrb[0].mxu0
        %v2496 = vpop.f32.mrb[0].mxu0
        %v2497 = vpop.f32.mrb[0].mxu0
        %2498 = vdwg.mxu0
        %2499 = vrot.lane.b32.xlu0 %v830, 104
        %v2500 = vpop.permute.xlu0 %2499
        %v2503 = vsel %vm1016, %v2360, 0
        %2505 = vmatprep.subr.bf16.mxu0 0
        %2506 = vmatpush1.bf16.msra.mxu0 %v2500
        %2507 = vmatprep.subr.bf16.mxu0 0
        %2508 = vmatpush1.bf16.msra.mxu0 0
        %2509 = vmatprep.subr.bf16.mxu0 0
        %2510 = vmatpush1.bf16.msra.mxu0 0
        %2511 = vmatprep.subr.bf16.mxu0 0
        %2512 = vmatpush1.bf16.msra.mxu0 0
        %2513 = vmatprep.subr.bf16.mxu0 0
        %2514 = vmatpush1.bf16.msra.mxu0 0
        %2515 = vmatprep.subr.bf16.mxu0 0
        %2516 = vmatpush1.bf16.msra.mxu0 0
        %2517 = vmatprep.subr.bf16.mxu0 0
        %2518 = vmatpush1.bf16.msra.mxu0 0
        %2519 = vmatprep.subr.bf16.mxu0 0
        %2520 = vmatpush1.bf16.msra.mxu0 0
        %2521 = vmatprep.subr.bf16.mxu0 0
        %2522 = vmatpush1.bf16.msra.mxu0 0
        %2523 = vmatprep.subr.bf16.mxu0 0
        %2524 = vmatpush1.bf16.msra.mxu0 0
        %2525 = vmatprep.subr.bf16.mxu0 0
        %2526 = vmatpush1.bf16.msra.mxu0 0
        %2527 = vmatprep.subr.bf16.mxu0 0
        %2528 = vmatpush1.bf16.msra.mxu0 0
        %2529 = vmatprep.subr.bf16.mxu0 0
        %2530 = vmatpush1.bf16.msra.mxu0 0
        %2531 = vmatprep.subr.bf16.mxu0 0
        %2532 = vmatpush1.bf16.msra.mxu0 0
        %2533 = vmatprep.subr.bf16.mxu0 0
        %2534 = vmatpush1.bf16.msra.mxu0 0
        %2535 = vmatprep.subr.bf16.mxu0 0
        %2536 = vmatpush1.bf16.msra.mxu0 0
        %2537 = vmatprep.mubr.bf16.mxu0 0
        %2538 = vmatmul.mubr.bf16.gmra.mrb[0].mxu0 %v2503
        %v2539 = vpop.f32.mrb[0].mxu0
        %v2540 = vadd.f32 0.0, %v2539
        %v2541 = vpop.f32.mrb[0].mxu0
        %v2542 = vpop.f32.mrb[0].mxu0
        %v2543 = vpop.f32.mrb[0].mxu0
        %2544 = vdwg.mxu0
        %2549 = vrot.lane.b32.xlu0 %v1535, 8
        %v2550 = vpop.permute.xlu0 %2549
        %2551 = vrot.lane.b32.xlu0 %v1582, 8
        %v2552 = vpop.permute.xlu0 %2551
        %2553 = vrot.lane.b32.xlu0 %v1629, 8
        %v2554 = vpop.permute.xlu0 %2553
        %2555 = vrot.lane.b32.xlu0 %v1676, 8
        %v2556 = vpop.permute.xlu0 %2555
        %2565 = vrot.lane.b32.xlu0 %v1970, 16
        %v2566 = vpop.permute.xlu0 %2565
        %2567 = vrot.lane.b32.xlu0 %v2016, 16
        %v2568 = vpop.permute.xlu0 %2567
        %2569 = vrot.lane.b32.xlu0 %v2062, 16
        %v2570 = vpop.permute.xlu0 %2569
        %2571 = vrot.lane.b32.xlu0 %v2108, 16
        %v2572 = vpop.permute.xlu0 %2571
        %2581 = vrot.lane.b32.xlu0 %v2402, 24
        %v2582 = vpop.permute.xlu0 %2581
        %2583 = vrot.lane.b32.xlu0 %v2448, 24
        %v2584 = vpop.permute.xlu0 %2583
        %2585 = vrot.lane.b32.xlu0 %v2494, 24
        %v2586 = vpop.permute.xlu0 %2585
        %2587 = vrot.lane.b32.xlu0 %v2540, 24
        %v2588 = vpop.permute.xlu0 %2587
        %v2593 = vsel %vm831, %v1103, %v2550
        %v2594 = vsel %vm831, %v1146, %v2552
        %v2595 = vsel %vm831, %v1189, %v2554
        %v2596 = vsel %vm831, %v1232, %v2556
        %v2597 = vsel %vm1016, %v2593, %v2566
        %v2598 = vsel %vm1016, %v2594, %v2568
        %v2599 = vsel %vm1016, %v2595, %v2570
        %v2600 = vsel %vm1016, %v2596, %v2572
        %vm2601 = vcmask 195584
        %v2602 = vsel %vm2601, %v2597, %v2582
        %v2603 = vsel %vm2601, %v2598, %v2584
        %v2604 = vsel %vm2601, %v2599, %v2586
        %v2605 = vsel %vm2601, %v2600, %v2588
        %s2606 = scalar_lea.vmem %s408, 48 [#allocation10]
        %v2607 = vld [vmem:[%s2606] sm:$0xf]
        %v2608 = vld [vmem:[%s2606 + $0x4] sm:$0xf]
        %v2609 = vld [vmem:[%s2606 + $0x8] sm:$0xf]
        %v2610 = vld [vmem:[%s2606 + $0xc] sm:$0xf]
        %v2611 = vld [vmem:[%s481 + $0x3] sm:$0x1]
        %v2612 = vpack.c.bf16 %v2603, %v2602
        %v2613 = vpack.c.bf16 %v2605, %v2604
        %v2614 = vlaneseq
        %v2615 = vshrl.u32 %v2614, 7
        %v2616 = vsub.s32 0, %v2615
        %v2617 = vrot.slane %v2611, %v2616
        %v2622 = vunpack.c.l.b16 %v2607
        %v2623 = vunpack.c.l.b16 %v2608
        %v2624 = vunpack.c.l.b16 %v2609
        %v2625 = vunpack.c.l.b16 %v2610
        %v2626 = vpack.c.b16 %v2623, %v2622
        %v2627 = vpack.c.b16 %v2625, %v2624
        %v2631 = vsel %vm557, %v2612, 0
        %v2634 = vsel %vm557, %v2613, 0
        %2636 = vmatprep.subr.bf16.mxu0 0
        %2637 = vmatpush1.bf16.msra.mxu0 %v2626
        %2638 = vmatprep.subr.bf16.mxu0 0
        %2639 = vmatpush1.bf16.msra.mxu0 %v2627
        %2640 = vmatprep.subr.bf16.mxu0 0
        %2641 = vmatpush1.bf16.msra.mxu0 0
        %2642 = vmatprep.subr.bf16.mxu0 0
        %2643 = vmatpush1.bf16.msra.mxu0 0
        %2644 = vmatprep.subr.bf16.mxu0 0
        %2645 = vmatpush1.bf16.msra.mxu0 0
        %2646 = vmatprep.subr.bf16.mxu0 0
        %2647 = vmatpush1.bf16.msra.mxu0 0
        %2648 = vmatprep.subr.bf16.mxu0 0
        %2649 = vmatpush1.bf16.msra.mxu0 0
        %2650 = vmatprep.subr.bf16.mxu0 0
        %2651 = vmatpush1.bf16.msra.mxu0 0
        %2652 = vmatprep.subr.bf16.mxu0 0
        %2653 = vmatpush1.bf16.msra.mxu0 0
        %2654 = vmatprep.subr.bf16.mxu0 0
        %2655 = vmatpush1.bf16.msra.mxu0 0
        %2656 = vmatprep.subr.bf16.mxu0 0
        %2657 = vmatpush1.bf16.msra.mxu0 0
        %2658 = vmatprep.subr.bf16.mxu0 0
        %2659 = vmatpush1.bf16.msra.mxu0 0
        %2660 = vmatprep.subr.bf16.mxu0 0
        %2661 = vmatpush1.bf16.msra.mxu0 0
        %2662 = vmatprep.subr.bf16.mxu0 0
        %2663 = vmatpush1.bf16.msra.mxu0 0
        %2664 = vmatprep.subr.bf16.mxu0 0
        %2665 = vmatpush1.bf16.msra.mxu0 0
        %2666 = vmatprep.subr.bf16.mxu0 0
        %2667 = vmatpush1.bf16.msra.mxu0 0
        %2668 = vmatprep.mubr.bf16.mxu0 0
        %2669 = vmatmul.mubr.bf16.gmra.mrb[0].mxu0 %v2631
        %v2670 = vpop.f32.mrb[0].mxu0
        %v2671 = vadd.f32 %v2617, %v2670
        %v2672 = vpop.f32.mrb[0].mxu0
        %v2673 = vpop.f32.mrb[0].mxu0
        %v2674 = vadd.f32 %v2617, %v2673
        %v2675 = vpop.f32.mrb[0].mxu0
        %2676 = vmatprep.mubr.bf16.mxu0 0
        %2677 = vmatmul.mubr.bf16.gmra.mrb[0].mxu0 %v2634
        %v2678 = vpop.f32.mrb[0].mxu0
        %v2679 = vadd.f32 %v2617, %v2678
        %v2680 = vpop.f32.mrb[0].mxu0
        %v2681 = vpop.f32.mrb[0].mxu0
        %v2682 = vadd.f32 %v2617, %v2681
        %v2683 = vpop.f32.mrb[0].mxu0
        %2684 = vdwg.mxu0
        %v2685 = vadd.f32 %v514, %v2671
        %v2686 = vadd.f32 %v515, %v2674
        %v2687 = vadd.f32 %v516, %v2679
        %v2688 = vadd.f32 %v517, %v2682
        %v2689 = vld [vmem:[%s481 + $0x4] sm:$0x1]
        %v2690 = vld [vmem:[%s481 + $0x5] sm:$0x1]
        %v2691 = vsel %vm557, %v2685, 0.0
        %2692 = vadd.xlane.f32.xlu0 %v2691
        %v2693 = vpop.xlane.xlu0 %2692
        %v2694 = vsel %vm557, %v2686, 0.0
        %2695 = vadd.xlane.f32.xlu0 %v2694
        %v2696 = vpop.xlane.xlu0 %2695
        %v2697 = vsel %vm557, %v2687, 0.0
        %2698 = vadd.xlane.f32.xlu0 %v2697
        %v2699 = vpop.xlane.xlu0 %2698
        %v2700 = vsel %vm557, %v2688, 0.0
        %2701 = vadd.xlane.f32.xlu0 %v2700
        %v2702 = vpop.xlane.xlu0 %2701
        %v2703 = vrcp.pop 32.0
        %v2704 = vmul.f32 %v2693, %v2703
        %v2705 = vmul.f32 %v2696, %v2703
        %v2706 = vmul.f32 %v2699, %v2703
        %v2707 = vmul.f32 %v2702, %v2703
        %v2708 = vsub.f32 %v2685, %v2704
        %v2709 = vsub.f32 %v2686, %v2705
        %v2710 = vsub.f32 %v2687, %v2706
        %v2711 = vsub.f32 %v2688, %v2707
        %v2712 = vmul.f32 %v2708, %v2708
        %v2713 = vmul.f32 %v2709, %v2709
        %v2714 = vmul.f32 %v2710, %v2710
        %v2715 = vmul.f32 %v2711, %v2711
        %v2716 = vsel %vm557, %v2712, 0.0
        %2717 = vadd.xlane.f32.xlu0 %v2716
        %v2718 = vpop.xlane.xlu0 %2717
        %v2719 = vsel %vm557, %v2713, 0.0
        %2720 = vadd.xlane.f32.xlu0 %v2719
        %v2721 = vpop.xlane.xlu0 %2720
        %v2722 = vsel %vm557, %v2714, 0.0
        %2723 = vadd.xlane.f32.xlu0 %v2722
        %v2724 = vpop.xlane.xlu0 %2723
        %v2725 = vsel %vm557, %v2715, 0.0
        %2726 = vadd.xlane.f32.xlu0 %v2725
        %v2727 = vpop.xlane.xlu0 %2726
        %v2728 = vmul.f32 %v2718, %v2703
        %v2729 = vmul.f32 %v2721, %v2703
        %v2730 = vmul.f32 %v2724, %v2703
        %v2731 = vmul.f32 %v2727, %v2703
        %v2732 = vadd.f32 %v2728, 1e-05
        %v2733 = vadd.f32 %v2729, 1e-05
        %v2734 = vadd.f32 %v2730, 1e-05
        %v2735 = vadd.f32 %v2731, 1e-05
        %v2736 = vrsqrt.pop %v2732
        %v2737 = vrsqrt.pop %v2733
        %v2738 = vrsqrt.pop %v2734
        %v2739 = vrsqrt.pop %v2735
        %v2740 = vmul.f32 %v2708, %v2736
        %v2741 = vmul.f32 %v2709, %v2737
        %v2742 = vmul.f32 %v2710, %v2738
        %v2743 = vmul.f32 %v2711, %v2739
        %v2744 = vlaneseq
        %v2745 = vshrl.u32 %v2744, 7
        %v2746 = vsub.s32 0, %v2745
        %v2747 = vrot.slane %v2689, %v2746
        %v2748 = vmul.f32 %v2740, %v2747
        %v2749 = vmul.f32 %v2741, %v2747
        %v2750 = vmul.f32 %v2742, %v2747
        %v2751 = vmul.f32 %v2743, %v2747
        %v2752 = vlaneseq
        %v2753 = vshrl.u32 %v2752, 7
        %v2754 = vsub.s32 0, %v2753
        %v2755 = vrot.slane %v2690, %v2754
        %v2756 = vadd.f32 %v2748, %v2755
        %v2757 = vadd.f32 %v2749, %v2755
        %v2758 = vadd.f32 %v2750, %v2755
        %v2759 = vadd.f32 %v2751, %v2755
        %s2760 = scalar_lea.vmem %s408, 64 [#allocation10]
        %v2761 = vld [vmem:[%s2760] sm:$0xf]
        %v2762 = vld [vmem:[%s2760 + $0x4] sm:$0xf]
        %v2763 = vld [vmem:[%s2760 + $0x8] sm:$0xf]
        %v2764 = vld [vmem:[%s2760 + $0xc] sm:$0xf]
        %v2765 = vld [vmem:[%s481 + $0x6] sm:$0x1]
        %v2766 = vlaneseq
        %v2767 = vshrl.u32 %v2766, 7
        %v2768 = vsub.s32 0, %v2767
        %v2769 = vrot.slane %v2765, %v2768
        %v2774 = vunpack.c.l.b16 %v2761
        %v2775 = vunpack.c.l.b16 %v2762
        %v2776 = vunpack.c.l.b16 %v2763
        %v2777 = vunpack.c.l.b16 %v2764
        %v2778 = vpack.c.b16 %v2775, %v2774
        %v2779 = vpack.c.b16 %v2777, %v2776
        %2782 = vmatprep.subr.bf16.mxu0 0
        %2783 = vmatpush1.bf16.msra.mxu0 %v2778
        %2784 = vmatprep.subr.bf16.mxu0 0
        %2785 = vmatpush1.bf16.msra.mxu0 %v2779
        %2786 = vmatprep.subr.bf16.mxu0 0
        %2787 = vmatpush1.bf16.msra.mxu0 0
        %2788 = vmatprep.subr.bf16.mxu0 0
        %2789 = vmatpush1.bf16.msra.mxu0 0
        %2790 = vmatprep.subr.bf16.mxu0 0
        %2791 = vmatpush1.bf16.msra.mxu0 0
        %2792 = vmatprep.subr.bf16.mxu0 0
        %2793 = vmatpush1.bf16.msra.mxu0 0
        %2794 = vmatprep.subr.bf16.mxu0 0
        %2795 = vmatpush1.bf16.msra.mxu0 0
        %2796 = vmatprep.subr.bf16.mxu0 0
        %2797 = vmatpush1.bf16.msra.mxu0 0
        %2798 = vmatprep.subr.bf16.mxu0 0
        %2799 = vmatpush1.bf16.msra.mxu0 0
        %2800 = vmatprep.subr.bf16.mxu0 0
        %2801 = vmatpush1.bf16.msra.mxu0 0
        %2802 = vmatprep.subr.bf16.mxu0 0
        %2803 = vmatpush1.bf16.msra.mxu0 0
        %2804 = vmatprep.subr.bf16.mxu0 0
        %2805 = vmatpush1.bf16.msra.mxu0 0
        %2806 = vmatprep.subr.bf16.mxu0 0
        %2807 = vmatpush1.bf16.msra.mxu0 0
        %2808 = vmatprep.subr.bf16.mxu0 0
        %2809 = vmatpush1.bf16.msra.mxu0 0
        %2810 = vmatprep.subr.bf16.mxu0 0
        %2811 = vmatpush1.bf16.msra.mxu0 0
        %2812 = vmatprep.subr.bf16.mxu0 0
        %2813 = vmatpush1.bf16.msra.mxu0 0
        %2814 = vmatprep.mubr.bf16.mxu0 0
        %2815 = vmatmul.mubr.bf16.gmra.mrb[0].mxu0 %v640
        %v2816 = vpop.f32.mrb[0].mxu0
        %v2817 = vadd.f32 %v2769, %v2816
        %v2818 = vpop.f32.mrb[0].mxu0
        %v2819 = vpop.f32.mrb[0].mxu0
        %v2820 = vadd.f32 %v2769, %v2819
        %v2821 = vpop.f32.mrb[0].mxu0
        %2822 = vmatprep.mubr.bf16.mxu0 0
        %2823 = vmatmul.mubr.bf16.gmra.mrb[0].mxu0 %v643
        %v2824 = vpop.f32.mrb[0].mxu0
        %v2825 = vadd.f32 %v2769, %v2824
        %v2826 = vpop.f32.mrb[0].mxu0
        %v2827 = vpop.f32.mrb[0].mxu0
        %v2828 = vadd.f32 %v2769, %v2827
        %v2829 = vpop.f32.mrb[0].mxu0
        %2830 = vmatprep.mubr.bf16.mxu0 0
        %2831 = vmatmul.mubr.bf16.gmra.mrb[0].mxu0 %v646
        %v2832 = vpop.f32.mrb[0].mxu0
        %v2833 = vadd.f32 %v2769, %v2832
        %v2834 = vpop.f32.mrb[0].mxu0
        %v2835 = vpop.f32.mrb[0].mxu0
        %v2836 = vadd.f32 %v2769, %v2835
        %v2837 = vpop.f32.mrb[0].mxu0
        %2838 = vmatprep.mubr.bf16.mxu0 0
        %2839 = vmatmul.mubr.bf16.gmra.mrb[0].mxu0 %v649
        %v2840 = vpop.f32.mrb[0].mxu0
        %v2841 = vadd.f32 %v2769, %v2840
        %v2842 = vpop.f32.mrb[0].mxu0
        %v2843 = vpop.f32.mrb[0].mxu0
        %v2844 = vadd.f32 %v2769, %v2843
        %v2845 = vpop.f32.mrb[0].mxu0
        %2846 = vdwg.mxu0
        %v2847 = vld [vmem:[%s476] sm:$0xf]
        %v2848 = vld [vmem:[%s476 + $0x4] sm:$0xf]
        %v2849 = vld [vmem:[%s476 + $0x8] sm:$0xf]
        %v2850 = vld [vmem:[%s476 + $0xc] sm:$0xf]
        %v2851 = vpack.c.bf16 %v2757, %v2756
        %v2852 = vpack.c.bf16 %v2759, %v2758
        %v2857 = vunpack.c.l.b16 %v2847
        %v2858 = vunpack.c.l.b16 %v2848
        %v2859 = vunpack.c.l.b16 %v2849
        %v2860 = vunpack.c.l.b16 %v2850
        %v2861 = vpack.c.b16 %v2858, %v2857
        %v2862 = vpack.c.b16 %v2860, %v2859
        %v2866 = vsel %vm557, %v2851, 0
        %v2869 = vsel %vm557, %v2852, 0
        %2871 = vmatprep.subr.bf16.mxu0 0
        %2872 = vmatpush1.bf16.msra.mxu0 %v2861
        %2873 = vmatprep.subr.bf16.mxu0 0
        %2874 = vmatpush1.bf16.msra.mxu0 %v2862
        %2875 = vmatprep.subr.bf16.mxu0 0
        %2876 = vmatpush1.bf16.msra.mxu0 0
        %2877 = vmatprep.subr.bf16.mxu0 0
        %2878 = vmatpush1.bf16.msra.mxu0 0
        %2879 = vmatprep.subr.bf16.mxu0 0
        %2880 = vmatpush1.bf16.msra.mxu0 0
        %2881 = vmatprep.subr.bf16.mxu0 0
        %2882 = vmatpush1.bf16.msra.mxu0 0
        %2883 = vmatprep.subr.bf16.mxu0 0
        %2884 = vmatpush1.bf16.msra.mxu0 0
        %2885 = vmatprep.subr.bf16.mxu0 0
        %2886 = vmatpush1.bf16.msra.mxu0 0
        %2887 = vmatprep.subr.bf16.mxu0 0
        %2888 = vmatpush1.bf16.msra.mxu0 0
        %2889 = vmatprep.subr.bf16.mxu0 0
        %2890 = vmatpush1.bf16.msra.mxu0 0
        %2891 = vmatprep.subr.bf16.mxu0 0
        %2892 = vmatpush1.bf16.msra.mxu0 0
        %2893 = vmatprep.subr.bf16.mxu0 0
        %2894 = vmatpush1.bf16.msra.mxu0 0
        %2895 = vmatprep.subr.bf16.mxu0 0
        %2896 = vmatpush1.bf16.msra.mxu0 0
        %2897 = vmatprep.subr.bf16.mxu0 0
        %2898 = vmatpush1.bf16.msra.mxu0 0
        %2899 = vmatprep.subr.bf16.mxu0 0
        %2900 = vmatpush1.bf16.msra.mxu0 0
        %2901 = vmatprep.subr.bf16.mxu0 0
        %2902 = vmatpush1.bf16.msra.mxu0 0
        %2903 = vmatprep.mubr.bf16.mxu0 0
        %2904 = vmatmul.mubr.bf16.gmra.mrb[0].mxu0 %v2866
        %v2905 = vpop.f32.mrb[0].mxu0
        %v2906 = vadd.f32 0.0, %v2905
        %v2907 = vpop.f32.mrb[0].mxu0
        %v2908 = vpop.f32.mrb[0].mxu0
        %v2909 = vadd.f32 0.0, %v2908
        %v2910 = vpop.f32.mrb[0].mxu0
        %2911 = vmatprep.mubr.bf16.mxu0 0
        %2912 = vmatmul.mubr.bf16.gmra.mrb[0].mxu0 %v2869
        %v2913 = vpop.f32.mrb[0].mxu0
        %v2914 = vadd.f32 0.0, %v2913
        %v2915 = vpop.f32.mrb[0].mxu0
        %v2916 = vpop.f32.mrb[0].mxu0
        %v2917 = vadd.f32 0.0, %v2916
        %v2918 = vpop.f32.mrb[0].mxu0
        %2919 = vdwg.mxu0
        %v2920 = vld [vmem:[%s481 + $0x7] sm:$0x1]
        %v2921 = vlaneseq
        %v2922 = vshrl.u32 %v2921, 7
        %v2923 = vsub.s32 0, %v2922
        %v2924 = vrot.slane %v2920, %v2923
        %v2925 = vadd.f32 %v2906, %v2924
        %v2926 = vadd.f32 %v2909, %v2924
        %v2927 = vadd.f32 %v2914, %v2924
        %v2928 = vadd.f32 %v2917, %v2924
        %v2929 = vld [vmem:[%s481 + $0x8] sm:$0x1]
        %v2930 = vlaneseq
        %v2931 = vshrl.u32 %v2930, 7
        %v2932 = vsub.s32 0, %v2931
        %v2933 = vrot.slane %v2929, %v2932
        %2935 = vrot.lane.b32.xlu0 %v2933, 32
        %v2936 = vpop.permute.xlu0 %2935
        %v2938 = vadd.f32 %v2906, %v2936
        %v2939 = vadd.f32 %v2909, %v2936
        %v2940 = vadd.f32 %v2914, %v2936
        %v2941 = vadd.f32 %v2917, %v2936
        %v2942 = vpack.c.bf16 %v2820, %v2817
        %v2943 = vpack.c.bf16 %v2828, %v2825
        %v2944 = vpack.c.bf16 %v2836, %v2833
        %v2945 = vpack.c.bf16 %v2844, %v2841
        %v2946 = vpack.c.bf16 %v2925, %v2925
        %v2947 = vpack.c.bf16 %v2926, %v2926
        %v2948 = vpack.c.bf16 %v2927, %v2927
        %v2949 = vpack.c.bf16 %v2928, %v2928
        %v2950 = vpack.c.bf16 %v2938, %v2938
        %v2951 = vpack.c.bf16 %v2939, %v2939
        %v2952 = vpack.c.bf16 %v2940, %v2940
        %v2953 = vpack.c.bf16 %v2941, %v2941
        %v2955 = vsel %vm831, %v2942, 0
        %v2958 = vsel %vm831, %v2946, 0
        %2960 = vmatprep.subr.bf16.mxu0 0
        %2961 = vmatpush1.bf16.xpose.msra.mxu0 %v2958
        %2962 = vmatprep.subr.bf16.mxu0 0
        %2963 = vmatpush1.bf16.xpose.msra.mxu0 0
        %2964 = vmatprep.subr.bf16.mxu0 0
        %2965 = vmatpush1.bf16.xpose.msra.mxu0 0
        %2966 = vmatprep.subr.bf16.mxu0 0
        %2967 = vmatpush1.bf16.xpose.msra.mxu0 0
        %2968 = vmatprep.subr.bf16.mxu0 0
        %2969 = vmatpush1.bf16.xpose.msra.mxu0 0
        %2970 = vmatprep.subr.bf16.mxu0 0
        %2971 = vmatpush1.bf16.xpose.msra.mxu0 0
        %2972 = vmatprep.subr.bf16.mxu0 0
        %2973 = vmatpush1.bf16.xpose.msra.mxu0 0
        %2974 = vmatprep.subr.bf16.mxu0 0
        %2975 = vmatpush1.bf16.xpose.msra.mxu0 0
        %2976 = vmatprep.subr.bf16.mxu0 0
        %2977 = vmatpush1.bf16.xpose.msra.mxu0 0
        %2978 = vmatprep.subr.bf16.mxu0 0
        %2979 = vmatpush1.bf16.xpose.msra.mxu0 0
        %2980 = vmatprep.subr.bf16.mxu0 0
        %2981 = vmatpush1.bf16.xpose.msra.mxu0 0
        %2982 = vmatprep.subr.bf16.mxu0 0
        %2983 = vmatpush1.bf16.xpose.msra.mxu0 0
        %2984 = vmatprep.subr.bf16.mxu0 0
        %2985 = vmatpush1.bf16.xpose.msra.mxu0 0
        %2986 = vmatprep.subr.bf16.mxu0 0
        %2987 = vmatpush1.bf16.xpose.msra.mxu0 0
        %2988 = vmatprep.subr.bf16.mxu0 0
        %2989 = vmatpush1.bf16.xpose.msra.mxu0 0
        %2990 = vmatprep.subr.bf16.mxu0 0
        %2991 = vmatpush1.bf16.xpose.msra.mxu0 0
        %2992 = vmatprep.mubr.bf16.mxu0 0
        %2993 = vmatmul.mubr.bf16.gmra.mrb[0].mxu0 %v2955
        %v2994 = vpop.f32.mrb[0].mxu0
        %v2995 = vadd.f32 0.0, %v2994
        %v2996 = vpop.f32.mrb[0].mxu0
        %v2997 = vpop.f32.mrb[0].mxu0
        %v2998 = vadd.f32 0.0, %v2997
        %v2999 = vpop.f32.mrb[0].mxu0
        %3000 = vdwg.mxu0
        %v3002 = vsel %vm831, %v2943, 0
        %v3005 = vsel %vm831, %v2947, 0
        %3007 = vmatprep.subr.bf16.mxu0 0
        %3008 = vmatpush1.bf16.xpose.msra.mxu0 %v3005
        %3009 = vmatprep.subr.bf16.mxu0 0
        %3010 = vmatpush1.bf16.xpose.msra.mxu0 0
        %3011 = vmatprep.subr.bf16.mxu0 0
        %3012 = vmatpush1.bf16.xpose.msra.mxu0 0
        %3013 = vmatprep.subr.bf16.mxu0 0
        %3014 = vmatpush1.bf16.xpose.msra.mxu0 0
        %3015 = vmatprep.subr.bf16.mxu0 0
        %3016 = vmatpush1.bf16.xpose.msra.mxu0 0
        %3017 = vmatprep.subr.bf16.mxu0 0
        %3018 = vmatpush1.bf16.xpose.msra.mxu0 0
        %3019 = vmatprep.subr.bf16.mxu0 0
        %3020 = vmatpush1.bf16.xpose.msra.mxu0 0
        %3021 = vmatprep.subr.bf16.mxu0 0
        %3022 = vmatpush1.bf16.xpose.msra.mxu0 0
        %3023 = vmatprep.subr.bf16.mxu0 0
        %3024 = vmatpush1.bf16.xpose.msra.mxu0 0
        %3025 = vmatprep.subr.bf16.mxu0 0
        %3026 = vmatpush1.bf16.xpose.msra.mxu0 0
        %3027 = vmatprep.subr.bf16.mxu0 0
        %3028 = vmatpush1.bf16.xpose.msra.mxu0 0
        %3029 = vmatprep.subr.bf16.mxu0 0
        %3030 = vmatpush1.bf16.xpose.msra.mxu0 0
        %3031 = vmatprep.subr.bf16.mxu0 0
        %3032 = vmatpush1.bf16.xpose.msra.mxu0 0
        %3033 = vmatprep.subr.bf16.mxu0 0
        %3034 = vmatpush1.bf16.xpose.msra.mxu0 0
        %3035 = vmatprep.subr.bf16.mxu0 0
        %3036 = vmatpush1.bf16.xpose.msra.mxu0 0
        %3037 = vmatprep.subr.bf16.mxu0 0
        %3038 = vmatpush1.bf16.xpose.msra.mxu0 0
        %3039 = vmatprep.mubr.bf16.mxu0 0
        %3040 = vmatmul.mubr.bf16.gmra.mrb[0].mxu0 %v3002
        %v3041 = vpop.f32.mrb[0].mxu0
        %v3042 = vadd.f32 0.0, %v3041
        %v3043 = vpop.f32.mrb[0].mxu0
        %v3044 = vpop.f32.mrb[0].mxu0
        %v3045 = vadd.f32 0.0, %v3044
        %v3046 = vpop.f32.mrb[0].mxu0
        %3047 = vdwg.mxu0
        %v3049 = vsel %vm831, %v2944, 0
        %v3052 = vsel %vm831, %v2948, 0
        %3054 = vmatprep.subr.bf16.mxu0 0
        %3055 = vmatpush1.bf16.xpose.msra.mxu0 %v3052
        %3056 = vmatprep.subr.bf16.mxu0 0
        %3057 = vmatpush1.bf16.xpose.msra.mxu0 0
        %3058 = vmatprep.subr.bf16.mxu0 0
        %3059 = vmatpush1.bf16.xpose.msra.mxu0 0
        %3060 = vmatprep.subr.bf16.mxu0 0
        %3061 = vmatpush1.bf16.xpose.msra.mxu0 0
        %3062 = vmatprep.subr.bf16.mxu0 0
        %3063 = vmatpush1.bf16.xpose.msra.mxu0 0
        %3064 = vmatprep.subr.bf16.mxu0 0
        %3065 = vmatpush1.bf16.xpose.msra.mxu0 0
        %3066 = vmatprep.subr.bf16.mxu0 0
        %3067 = vmatpush1.bf16.xpose.msra.mxu0 0
        %3068 = vmatprep.subr.bf16.mxu0 0
        %3069 = vmatpush1.bf16.xpose.msra.mxu0 0
        %3070 = vmatprep.subr.bf16.mxu0 0
        %3071 = vmatpush1.bf16.xpose.msra.mxu0 0
        %3072 = vmatprep.subr.bf16.mxu0 0
        %3073 = vmatpush1.bf16.xpose.msra.mxu0 0
        %3074 = vmatprep.subr.bf16.mxu0 0
        %3075 = vmatpush1.bf16.xpose.msra.mxu0 0
        %3076 = vmatprep.subr.bf16.mxu0 0
        %3077 = vmatpush1.bf16.xpose.msra.mxu0 0
        %3078 = vmatprep.subr.bf16.mxu0 0
        %3079 = vmatpush1.bf16.xpose.msra.mxu0 0
        %3080 = vmatprep.subr.bf16.mxu0 0
        %3081 = vmatpush1.bf16.xpose.msra.mxu0 0
        %3082 = vmatprep.subr.bf16.mxu0 0
        %3083 = vmatpush1.bf16.xpose.msra.mxu0 0
        %3084 = vmatprep.subr.bf16.mxu0 0
        %3085 = vmatpush1.bf16.xpose.msra.mxu0 0
        %3086 = vmatprep.mubr.bf16.mxu0 0
        %3087 = vmatmul.mubr.bf16.gmra.mrb[0].mxu0 %v3049
        %v3088 = vpop.f32.mrb[0].mxu0
        %v3089 = vadd.f32 0.0, %v3088
        %v3090 = vpop.f32.mrb[0].mxu0
        %v3091 = vpop.f32.mrb[0].mxu0
        %v3092 = vadd.f32 0.0, %v3091
        %v3093 = vpop.f32.mrb[0].mxu0
        %3094 = vdwg.mxu0
        %v3096 = vsel %vm831, %v2945, 0
        %v3099 = vsel %vm831, %v2949, 0
        %3101 = vmatprep.subr.bf16.mxu0 0
        %3102 = vmatpush1.bf16.xpose.msra.mxu0 %v3099
        %3103 = vmatprep.subr.bf16.mxu0 0
        %3104 = vmatpush1.bf16.xpose.msra.mxu0 0
        %3105 = vmatprep.subr.bf16.mxu0 0
        %3106 = vmatpush1.bf16.xpose.msra.mxu0 0
        %3107 = vmatprep.subr.bf16.mxu0 0
        %3108 = vmatpush1.bf16.xpose.msra.mxu0 0
        %3109 = vmatprep.subr.bf16.mxu0 0
        %3110 = vmatpush1.bf16.xpose.msra.mxu0 0
        %3111 = vmatprep.subr.bf16.mxu0 0
        %3112 = vmatpush1.bf16.xpose.msra.mxu0 0
        %3113 = vmatprep.subr.bf16.mxu0 0
        %3114 = vmatpush1.bf16.xpose.msra.mxu0 0
        %3115 = vmatprep.subr.bf16.mxu0 0
        %3116 = vmatpush1.bf16.xpose.msra.mxu0 0
        %3117 = vmatprep.subr.bf16.mxu0 0
        %3118 = vmatpush1.bf16.xpose.msra.mxu0 0
        %3119 = vmatprep.subr.bf16.mxu0 0
        %3120 = vmatpush1.bf16.xpose.msra.mxu0 0
        %3121 = vmatprep.subr.bf16.mxu0 0
        %3122 = vmatpush1.bf16.xpose.msra.mxu0 0
        %3123 = vmatprep.subr.bf16.mxu0 0
        %3124 = vmatpush1.bf16.xpose.msra.mxu0 0
        %3125 = vmatprep.subr.bf16.mxu0 0
        %3126 = vmatpush1.bf16.xpose.msra.mxu0 0
        %3127 = vmatprep.subr.bf16.mxu0 0
        %3128 = vmatpush1.bf16.xpose.msra.mxu0 0
        %3129 = vmatprep.subr.bf16.mxu0 0
        %3130 = vmatpush1.bf16.xpose.msra.mxu0 0
        %3131 = vmatprep.subr.bf16.mxu0 0
        %3132 = vmatpush1.bf16.xpose.msra.mxu0 0
        %3133 = vmatprep.mubr.bf16.mxu0 0
        %3134 = vmatmul.mubr.bf16.gmra.mrb[0].mxu0 %v3096
        %v3135 = vpop.f32.mrb[0].mxu0
        %v3136 = vadd.f32 0.0, %v3135
        %v3137 = vpop.f32.mrb[0].mxu0
        %v3138 = vpop.f32.mrb[0].mxu0
        %v3139 = vadd.f32 0.0, %v3138
        %v3140 = vpop.f32.mrb[0].mxu0
        %3141 = vdwg.mxu0
        %v3142 = vsel %vm831, %v2995, -inf
        %3143 = vmax.xlane.f32.xlu0 %v3142
        %v3144 = vpop.xlane.xlu0 %3143
        %v3145 = vsel %vm831, %v2998, -inf
        %3146 = vmax.xlane.f32.xlu0 %v3145
        %v3147 = vpop.xlane.xlu0 %3146
        %v3148 = vsel %vm831, %v3042, -inf
        %3149 = vmax.xlane.f32.xlu0 %v3148
        %v3150 = vpop.xlane.xlu0 %3149
        %v3151 = vsel %vm831, %v3045, -inf
        %3152 = vmax.xlane.f32.xlu0 %v3151
        %v3153 = vpop.xlane.xlu0 %3152
        %v3154 = vsel %vm831, %v3089, -inf
        %3155 = vmax.xlane.f32.xlu0 %v3154
        %v3156 = vpop.xlane.xlu0 %3155
        %v3157 = vsel %vm831, %v3092, -inf
        %3158 = vmax.xlane.f32.xlu0 %v3157
        %v3159 = vpop.xlane.xlu0 %3158
        %v3160 = vsel %vm831, %v3136, -inf
        %3161 = vmax.xlane.f32.xlu0 %v3160
        %v3162 = vpop.xlane.xlu0 %3161
        %v3163 = vsel %vm831, %v3139, -inf
        %3164 = vmax.xlane.f32.xlu0 %v3163
        %v3165 = vpop.xlane.xlu0 %3164
        %v3166 = vsub.f32 %v2995, %v3144
        %v3167 = vsub.f32 %v2998, %v3147
        %v3168 = vsub.f32 %v3042, %v3150
        %v3169 = vsub.f32 %v3045, %v3153
        %v3170 = vsub.f32 %v3089, %v3156
        %v3171 = vsub.f32 %v3092, %v3159
        %v3172 = vsub.f32 %v3136, %v3162
        %v3173 = vsub.f32 %v3139, %v3165
        %v3174 = vmul.f32 %v3166, 1.442695
        %v3175 = vpow.pop %v3174
        %v3176 = vmul.f32 %v3167, 1.442695
        %v3177 = vpow.pop %v3176
        %v3178 = vmul.f32 %v3168, 1.442695
        %v3179 = vpow.pop %v3178
        %v3180 = vmul.f32 %v3169, 1.442695
        %v3181 = vpow.pop %v3180
        %v3182 = vmul.f32 %v3170, 1.442695
        %v3183 = vpow.pop %v3182
        %v3184 = vmul.f32 %v3171, 1.442695
        %v3185 = vpow.pop %v3184
        %v3186 = vmul.f32 %v3172, 1.442695
        %v3187 = vpow.pop %v3186
        %v3188 = vmul.f32 %v3173, 1.442695
        %v3189 = vpow.pop %v3188
        %v3190 = vsel %vm831, %v3175, 0.0
        %3191 = vadd.xlane.f32.xlu0 %v3190
        %v3192 = vpop.xlane.xlu0 %3191
        %v3193 = vsel %vm831, %v3177, 0.0
        %3194 = vadd.xlane.f32.xlu0 %v3193
        %v3195 = vpop.xlane.xlu0 %3194
        %v3196 = vsel %vm831, %v3179, 0.0
        %3197 = vadd.xlane.f32.xlu0 %v3196
        %v3198 = vpop.xlane.xlu0 %3197
        %v3199 = vsel %vm831, %v3181, 0.0
        %3200 = vadd.xlane.f32.xlu0 %v3199
        %v3201 = vpop.xlane.xlu0 %3200
        %v3202 = vsel %vm831, %v3183, 0.0
        %3203 = vadd.xlane.f32.xlu0 %v3202
        %v3204 = vpop.xlane.xlu0 %3203
        %v3205 = vsel %vm831, %v3185, 0.0
        %3206 = vadd.xlane.f32.xlu0 %v3205
        %v3207 = vpop.xlane.xlu0 %3206
        %v3208 = vsel %vm831, %v3187, 0.0
        %3209 = vadd.xlane.f32.xlu0 %v3208
        %v3210 = vpop.xlane.xlu0 %3209
        %v3211 = vsel %vm831, %v3189, 0.0
        %3212 = vadd.xlane.f32.xlu0 %v3211
        %v3213 = vpop.xlane.xlu0 %3212
        %v3214 = vrcp.pop %v3192
        %v3215 = vrcp.pop %v3195
        %v3216 = vrcp.pop %v3198
        %v3217 = vrcp.pop %v3201
        %v3218 = vrcp.pop %v3204
        %v3219 = vrcp.pop %v3207
        %v3220 = vrcp.pop %v3210
        %v3221 = vrcp.pop %v3213
        %v3222 = vmul.f32 %v3175, %v3214
        %v3223 = vmul.f32 %v3177, %v3215
        %v3224 = vmul.f32 %v3179, %v3216
        %v3225 = vmul.f32 %v3181, %v3217
        %v3226 = vmul.f32 %v3183, %v3218
        %v3227 = vmul.f32 %v3185, %v3219
        %v3228 = vmul.f32 %v3187, %v3220
        %v3229 = vmul.f32 %v3189, %v3221
        %v3230 = vpack.c.bf16 %v3223, %v3222
        %v3231 = vpack.c.bf16 %v3225, %v3224
        %v3232 = vpack.c.bf16 %v3227, %v3226
        %v3233 = vpack.c.bf16 %v3229, %v3228
        %3235 = vrot.lane.b32.xlu0 %v2950, 96
        %v3236 = vpop.permute.xlu0 %3235
        %v3238 = vsel %vm831, %v3230, 0
        %vm3240 = vcmask 1043456
        %v3242 = vsel %vm3240, %v3236, 0
        %3244 = vmatprep.subr.bf16.mxu0 0
        %3245 = vmatpush1.bf16.msra.mxu0 %v3242
        %3246 = vmatprep.subr.bf16.mxu0 0
        %3247 = vmatpush1.bf16.msra.mxu0 0
        %3248 = vmatprep.subr.bf16.mxu0 0
        %3249 = vmatpush1.bf16.msra.mxu0 0
        %3250 = vmatprep.subr.bf16.mxu0 0
        %3251 = vmatpush1.bf16.msra.mxu0 0
        %3252 = vmatprep.subr.bf16.mxu0 0
        %3253 = vmatpush1.bf16.msra.mxu0 0
        %3254 = vmatprep.subr.bf16.mxu0 0
        %3255 = vmatpush1.bf16.msra.mxu0 0
        %3256 = vmatprep.subr.bf16.mxu0 0
        %3257 = vmatpush1.bf16.msra.mxu0 0
        %3258 = vmatprep.subr.bf16.mxu0 0
        %3259 = vmatpush1.bf16.msra.mxu0 0
        %3260 = vmatprep.subr.bf16.mxu0 0
        %3261 = vmatpush1.bf16.msra.mxu0 0
        %3262 = vmatprep.subr.bf16.mxu0 0
        %3263 = vmatpush1.bf16.msra.mxu0 0
        %3264 = vmatprep.subr.bf16.mxu0 0
        %3265 = vmatpush1.bf16.msra.mxu0 0
        %3266 = vmatprep.subr.bf16.mxu0 0
        %3267 = vmatpush1.bf16.msra.mxu0 0
        %3268 = vmatprep.subr.bf16.mxu0 0
        %3269 = vmatpush1.bf16.msra.mxu0 0
        %3270 = vmatprep.subr.bf16.mxu0 0
        %3271 = vmatpush1.bf16.msra.mxu0 0
        %3272 = vmatprep.subr.bf16.mxu0 0
        %3273 = vmatpush1.bf16.msra.mxu0 0
        %3274 = vmatprep.subr.bf16.mxu0 0
        %3275 = vmatpush1.bf16.msra.mxu0 0
        %3276 = vmatprep.mubr.bf16.mxu0 0
        %3277 = vmatmul.mubr.bf16.gmra.mrb[0].mxu0 %v3238
        %v3278 = vpop.f32.mrb[0].mxu0
        %v3279 = vadd.f32 0.0, %v3278
        %v3280 = vpop.f32.mrb[0].mxu0
        %v3281 = vpop.f32.mrb[0].mxu0
        %v3282 = vadd.f32 0.0, %v3281
        %v3283 = vpop.f32.mrb[0].mxu0
        %3284 = vdwg.mxu0
        %3286 = vrot.lane.b32.xlu0 %v2951, 96
        %v3287 = vpop.permute.xlu0 %3286
        %v3289 = vsel %vm831, %v3231, 0
        %v3292 = vsel %vm3240, %v3287, 0
        %3294 = vmatprep.subr.bf16.mxu0 0
        %3295 = vmatpush1.bf16.msra.mxu0 %v3292
        %3296 = vmatprep.subr.bf16.mxu0 0
        %3297 = vmatpush1.bf16.msra.mxu0 0
        %3298 = vmatprep.subr.bf16.mxu0 0
        %3299 = vmatpush1.bf16.msra.mxu0 0
        %3300 = vmatprep.subr.bf16.mxu0 0
        %3301 = vmatpush1.bf16.msra.mxu0 0
        %3302 = vmatprep.subr.bf16.mxu0 0
        %3303 = vmatpush1.bf16.msra.mxu0 0
        %3304 = vmatprep.subr.bf16.mxu0 0
        %3305 = vmatpush1.bf16.msra.mxu0 0
        %3306 = vmatprep.subr.bf16.mxu0 0
        %3307 = vmatpush1.bf16.msra.mxu0 0
        %3308 = vmatprep.subr.bf16.mxu0 0
        %3309 = vmatpush1.bf16.msra.mxu0 0
        %3310 = vmatprep.subr.bf16.mxu0 0
        %3311 = vmatpush1.bf16.msra.mxu0 0
        %3312 = vmatprep.subr.bf16.mxu0 0
        %3313 = vmatpush1.bf16.msra.mxu0 0
        %3314 = vmatprep.subr.bf16.mxu0 0
        %3315 = vmatpush1.bf16.msra.mxu0 0
        %3316 = vmatprep.subr.bf16.mxu0 0
        %3317 = vmatpush1.bf16.msra.mxu0 0
        %3318 = vmatprep.subr.bf16.mxu0 0
        %3319 = vmatpush1.bf16.msra.mxu0 0
        %3320 = vmatprep.subr.bf16.mxu0 0
        %3321 = vmatpush1.bf16.msra.mxu0 0
        %3322 = vmatprep.subr.bf16.mxu0 0
        %3323 = vmatpush1.bf16.msra.mxu0 0
        %3324 = vmatprep.subr.bf16.mxu0 0
        %3325 = vmatpush1.bf16.msra.mxu0 0
        %3326 = vmatprep.mubr.bf16.mxu0 0
        %3327 = vmatmul.mubr.bf16.gmra.mrb[0].mxu0 %v3289
        %v3328 = vpop.f32.mrb[0].mxu0
        %v3329 = vadd.f32 0.0, %v3328
        %v3330 = vpop.f32.mrb[0].mxu0
        %v3331 = vpop.f32.mrb[0].mxu0
        %v3332 = vadd.f32 0.0, %v3331
        %v3333 = vpop.f32.mrb[0].mxu0
        %3334 = vdwg.mxu0
        %3336 = vrot.lane.b32.xlu0 %v2952, 96
        %v3337 = vpop.permute.xlu0 %3336
        %v3339 = vsel %vm831, %v3232, 0
        %v3342 = vsel %vm3240, %v3337, 0
        %3344 = vmatprep.subr.bf16.mxu0 0
        %3345 = vmatpush1.bf16.msra.mxu0 %v3342
        %3346 = vmatprep.subr.bf16.mxu0 0
        %3347 = vmatpush1.bf16.msra.mxu0 0
        %3348 = vmatprep.subr.bf16.mxu0 0
        %3349 = vmatpush1.bf16.msra.mxu0 0
        %3350 = vmatprep.subr.bf16.mxu0 0
        %3351 = vmatpush1.bf16.msra.mxu0 0
        %3352 = vmatprep.subr.bf16.mxu0 0
        %3353 = vmatpush1.bf16.msra.mxu0 0
        %3354 = vmatprep.subr.bf16.mxu0 0
        %3355 = vmatpush1.bf16.msra.mxu0 0
        %3356 = vmatprep.subr.bf16.mxu0 0
        %3357 = vmatpush1.bf16.msra.mxu0 0
        %3358 = vmatprep.subr.bf16.mxu0 0
        %3359 = vmatpush1.bf16.msra.mxu0 0
        %3360 = vmatprep.subr.bf16.mxu0 0
        %3361 = vmatpush1.bf16.msra.mxu0 0
        %3362 = vmatprep.subr.bf16.mxu0 0
        %3363 = vmatpush1.bf16.msra.mxu0 0
        %3364 = vmatprep.subr.bf16.mxu0 0
        %3365 = vmatpush1.bf16.msra.mxu0 0
        %3366 = vmatprep.subr.bf16.mxu0 0
        %3367 = vmatpush1.bf16.msra.mxu0 0
        %3368 = vmatprep.subr.bf16.mxu0 0
        %3369 = vmatpush1.bf16.msra.mxu0 0
        %3370 = vmatprep.subr.bf16.mxu0 0
        %3371 = vmatpush1.bf16.msra.mxu0 0
        %3372 = vmatprep.subr.bf16.mxu0 0
        %3373 = vmatpush1.bf16.msra.mxu0 0
        %3374 = vmatprep.subr.bf16.mxu0 0
        %3375 = vmatpush1.bf16.msra.mxu0 0
        %3376 = vmatprep.mubr.bf16.mxu0 0
        %3377 = vmatmul.mubr.bf16.gmra.mrb[0].mxu0 %v3339
        %v3378 = vpop.f32.mrb[0].mxu0
        %v3379 = vadd.f32 0.0, %v3378
        %v3380 = vpop.f32.mrb[0].mxu0
        %v3381 = vpop.f32.mrb[0].mxu0
        %v3382 = vadd.f32 0.0, %v3381
        %v3383 = vpop.f32.mrb[0].mxu0
        %3384 = vdwg.mxu0
        %3386 = vrot.lane.b32.xlu0 %v2953, 96
        %v3387 = vpop.permute.xlu0 %3386
        %v3389 = vsel %vm831, %v3233, 0
        %v3392 = vsel %vm3240, %v3387, 0
        %3394 = vmatprep.subr.bf16.mxu0 0
        %3395 = vmatpush1.bf16.msra.mxu0 %v3392
        %3396 = vmatprep.subr.bf16.mxu0 0
        %3397 = vmatpush1.bf16.msra.mxu0 0
        %3398 = vmatprep.subr.bf16.mxu0 0
        %3399 = vmatpush1.bf16.msra.mxu0 0
        %3400 = vmatprep.subr.bf16.mxu0 0
        %3401 = vmatpush1.bf16.msra.mxu0 0
        %3402 = vmatprep.subr.bf16.mxu0 0
        %3403 = vmatpush1.bf16.msra.mxu0 0
        %3404 = vmatprep.subr.bf16.mxu0 0
        %3405 = vmatpush1.bf16.msra.mxu0 0
        %3406 = vmatprep.subr.bf16.mxu0 0
        %3407 = vmatpush1.bf16.msra.mxu0 0
        %3408 = vmatprep.subr.bf16.mxu0 0
        %3409 = vmatpush1.bf16.msra.mxu0 0
        %3410 = vmatprep.subr.bf16.mxu0 0
        %3411 = vmatpush1.bf16.msra.mxu0 0
        %3412 = vmatprep.subr.bf16.mxu0 0
        %3413 = vmatpush1.bf16.msra.mxu0 0
        %3414 = vmatprep.subr.bf16.mxu0 0
        %3415 = vmatpush1.bf16.msra.mxu0 0
        %3416 = vmatprep.subr.bf16.mxu0 0
        %3417 = vmatpush1.bf16.msra.mxu0 0
        %3418 = vmatprep.subr.bf16.mxu0 0
        %3419 = vmatpush1.bf16.msra.mxu0 0
        %3420 = vmatprep.subr.bf16.mxu0 0
        %3421 = vmatpush1.bf16.msra.mxu0 0
        %3422 = vmatprep.subr.bf16.mxu0 0
        %3423 = vmatpush1.bf16.msra.mxu0 0
        %3424 = vmatprep.subr.bf16.mxu0 0
        %3425 = vmatpush1.bf16.msra.mxu0 0
        %3426 = vmatprep.mubr.bf16.mxu0 0
        %3427 = vmatmul.mubr.bf16.gmra.mrb[0].mxu0 %v3389
        %v3428 = vpop.f32.mrb[0].mxu0
        %v3429 = vadd.f32 0.0, %v3428
        %v3430 = vpop.f32.mrb[0].mxu0
        %v3431 = vpop.f32.mrb[0].mxu0
        %v3432 = vadd.f32 0.0, %v3431
        %v3433 = vpop.f32.mrb[0].mxu0
        %3434 = vdwg.mxu0
        %3436 = vrot.lane.b32.xlu0 %v2942, 120
        %v3437 = vpop.permute.xlu0 %3436
        %3439 = vrot.lane.b32.xlu0 %v2946, 120
        %v3440 = vpop.permute.xlu0 %3439
        %v3442 = vsel %vm831, %v3437, 0
        %v3445 = vsel %vm831, %v3440, 0
        %3447 = vmatprep.subr.bf16.mxu0 0
        %3448 = vmatpush1.bf16.xpose.msra.mxu0 %v3445
        %3449 = vmatprep.subr.bf16.mxu0 0
        %3450 = vmatpush1.bf16.xpose.msra.mxu0 0
        %3451 = vmatprep.subr.bf16.mxu0 0
        %3452 = vmatpush1.bf16.xpose.msra.mxu0 0
        %3453 = vmatprep.subr.bf16.mxu0 0
        %3454 = vmatpush1.bf16.xpose.msra.mxu0 0
        %3455 = vmatprep.subr.bf16.mxu0 0
        %3456 = vmatpush1.bf16.xpose.msra.mxu0 0
        %3457 = vmatprep.subr.bf16.mxu0 0
        %3458 = vmatpush1.bf16.xpose.msra.mxu0 0
        %3459 = vmatprep.subr.bf16.mxu0 0
        %3460 = vmatpush1.bf16.xpose.msra.mxu0 0
        %3461 = vmatprep.subr.bf16.mxu0 0
        %3462 = vmatpush1.bf16.xpose.msra.mxu0 0
        %3463 = vmatprep.subr.bf16.mxu0 0
        %3464 = vmatpush1.bf16.xpose.msra.mxu0 0
        %3465 = vmatprep.subr.bf16.mxu0 0
        %3466 = vmatpush1.bf16.xpose.msra.mxu0 0
        %3467 = vmatprep.subr.bf16.mxu0 0
        %3468 = vmatpush1.bf16.xpose.msra.mxu0 0
        %3469 = vmatprep.subr.bf16.mxu0 0
        %3470 = vmatpush1.bf16.xpose.msra.mxu0 0
        %3471 = vmatprep.subr.bf16.mxu0 0
        %3472 = vmatpush1.bf16.xpose.msra.mxu0 0
        %3473 = vmatprep.subr.bf16.mxu0 0
        %3474 = vmatpush1.bf16.xpose.msra.mxu0 0
        %3475 = vmatprep.subr.bf16.mxu0 0
        %3476 = vmatpush1.bf16.xpose.msra.mxu0 0
        %3477 = vmatprep.subr.bf16.mxu0 0
        %3478 = vmatpush1.bf16.xpose.msra.mxu0 0
        %3479 = vmatprep.mubr.bf16.mxu0 0
        %3480 = vmatmul.mubr.bf16.gmra.mrb[0].mxu0 %v3442
        %v3481 = vpop.f32.mrb[0].mxu0
        %v3482 = vadd.f32 0.0, %v3481
        %v3483 = vpop.f32.mrb[0].mxu0
        %v3484 = vpop.f32.mrb[0].mxu0
        %v3485 = vadd.f32 0.0, %v3484
        %v3486 = vpop.f32.mrb[0].mxu0
        %3487 = vdwg.mxu0
        %3489 = vrot.lane.b32.xlu0 %v2943, 120
        %v3490 = vpop.permute.xlu0 %3489
        %3492 = vrot.lane.b32.xlu0 %v2947, 120
        %v3493 = vpop.permute.xlu0 %3492
        %v3495 = vsel %vm831, %v3490, 0
        %v3498 = vsel %vm831, %v3493, 0
        %3500 = vmatprep.subr.bf16.mxu0 0
        %3501 = vmatpush1.bf16.xpose.msra.mxu0 %v3498
        %3502 = vmatprep.subr.bf16.mxu0 0
        %3503 = vmatpush1.bf16.xpose.msra.mxu0 0
        %3504 = vmatprep.subr.bf16.mxu0 0
        %3505 = vmatpush1.bf16.xpose.msra.mxu0 0
        %3506 = vmatprep.subr.bf16.mxu0 0
        %3507 = vmatpush1.bf16.xpose.msra.mxu0 0
        %3508 = vmatprep.subr.bf16.mxu0 0
        %3509 = vmatpush1.bf16.xpose.msra.mxu0 0
        %3510 = vmatprep.subr.bf16.mxu0 0
        %3511 = vmatpush1.bf16.xpose.msra.mxu0 0
        %3512 = vmatprep.subr.bf16.mxu0 0
        %3513 = vmatpush1.bf16.xpose.msra.mxu0 0
        %3514 = vmatprep.subr.bf16.mxu0 0
        %3515 = vmatpush1.bf16.xpose.msra.mxu0 0
        %3516 = vmatprep.subr.bf16.mxu0 0
        %3517 = vmatpush1.bf16.xpose.msra.mxu0 0
        %3518 = vmatprep.subr.bf16.mxu0 0
        %3519 = vmatpush1.bf16.xpose.msra.mxu0 0
        %3520 = vmatprep.subr.bf16.mxu0 0
        %3521 = vmatpush1.bf16.xpose.msra.mxu0 0
        %3522 = vmatprep.subr.bf16.mxu0 0
        %3523 = vmatpush1.bf16.xpose.msra.mxu0 0
        %3524 = vmatprep.subr.bf16.mxu0 0
        %3525 = vmatpush1.bf16.xpose.msra.mxu0 0
        %3526 = vmatprep.subr.bf16.mxu0 0
        %3527 = vmatpush1.bf16.xpose.msra.mxu0 0
        %3528 = vmatprep.subr.bf16.mxu0 0
        %3529 = vmatpush1.bf16.xpose.msra.mxu0 0
        %3530 = vmatprep.subr.bf16.mxu0 0
        %3531 = vmatpush1.bf16.xpose.msra.mxu0 0
        %3532 = vmatprep.mubr.bf16.mxu0 0
        %3533 = vmatmul.mubr.bf16.gmra.mrb[0].mxu0 %v3495
        %v3534 = vpop.f32.mrb[0].mxu0
        %v3535 = vadd.f32 0.0, %v3534
        %v3536 = vpop.f32.mrb[0].mxu0
        %v3537 = vpop.f32.mrb[0].mxu0
        %v3538 = vadd.f32 0.0, %v3537
        %v3539 = vpop.f32.mrb[0].mxu0
        %3540 = vdwg.mxu0
        %3542 = vrot.lane.b32.xlu0 %v2944, 120
        %v3543 = vpop.permute.xlu0 %3542
        %3545 = vrot.lane.b32.xlu0 %v2948, 120
        %v3546 = vpop.permute.xlu0 %3545
        %v3548 = vsel %vm831, %v3543, 0
        %v3551 = vsel %vm831, %v3546, 0
        %3553 = vmatprep.subr.bf16.mxu0 0
        %3554 = vmatpush1.bf16.xpose.msra.mxu0 %v3551
        %3555 = vmatprep.subr.bf16.mxu0 0
        %3556 = vmatpush1.bf16.xpose.msra.mxu0 0
        %3557 = vmatprep.subr.bf16.mxu0 0
        %3558 = vmatpush1.bf16.xpose.msra.mxu0 0
        %3559 = vmatprep.subr.bf16.mxu0 0
        %3560 = vmatpush1.bf16.xpose.msra.mxu0 0
        %3561 = vmatprep.subr.bf16.mxu0 0
        %3562 = vmatpush1.bf16.xpose.msra.mxu0 0
        %3563 = vmatprep.subr.bf16.mxu0 0
        %3564 = vmatpush1.bf16.xpose.msra.mxu0 0
        %3565 = vmatprep.subr.bf16.mxu0 0
        %3566 = vmatpush1.bf16.xpose.msra.mxu0 0
        %3567 = vmatprep.subr.bf16.mxu0 0
        %3568 = vmatpush1.bf16.xpose.msra.mxu0 0
        %3569 = vmatprep.subr.bf16.mxu0 0
        %3570 = vmatpush1.bf16.xpose.msra.mxu0 0
        %3571 = vmatprep.subr.bf16.mxu0 0
        %3572 = vmatpush1.bf16.xpose.msra.mxu0 0
        %3573 = vmatprep.subr.bf16.mxu0 0
        %3574 = vmatpush1.bf16.xpose.msra.mxu0 0
        %3575 = vmatprep.subr.bf16.mxu0 0
        %3576 = vmatpush1.bf16.xpose.msra.mxu0 0
        %3577 = vmatprep.subr.bf16.mxu0 0
        %3578 = vmatpush1.bf16.xpose.msra.mxu0 0
        %3579 = vmatprep.subr.bf16.mxu0 0
        %3580 = vmatpush1.bf16.xpose.msra.mxu0 0
        %3581 = vmatprep.subr.bf16.mxu0 0
        %3582 = vmatpush1.bf16.xpose.msra.mxu0 0
        %3583 = vmatprep.subr.bf16.mxu0 0
        %3584 = vmatpush1.bf16.xpose.msra.mxu0 0
        %3585 = vmatprep.mubr.bf16.mxu0 0
        %3586 = vmatmul.mubr.bf16.gmra.mrb[0].mxu0 %v3548
        %v3587 = vpop.f32.mrb[0].mxu0
        %v3588 = vadd.f32 0.0, %v3587
        %v3589 = vpop.f32.mrb[0].mxu0
        %v3590 = vpop.f32.mrb[0].mxu0
        %v3591 = vadd.f32 0.0, %v3590
        %v3592 = vpop.f32.mrb[0].mxu0
        %3593 = vdwg.mxu0
        %3595 = vrot.lane.b32.xlu0 %v2945, 120
        %v3596 = vpop.permute.xlu0 %3595
        %3598 = vrot.lane.b32.xlu0 %v2949, 120
        %v3599 = vpop.permute.xlu0 %3598
        %v3601 = vsel %vm831, %v3596, 0
        %v3604 = vsel %vm831, %v3599, 0
        %3606 = vmatprep.subr.bf16.mxu0 0
        %3607 = vmatpush1.bf16.xpose.msra.mxu0 %v3604
        %3608 = vmatprep.subr.bf16.mxu0 0
        %3609 = vmatpush1.bf16.xpose.msra.mxu0 0
        %3610 = vmatprep.subr.bf16.mxu0 0
        %3611 = vmatpush1.bf16.xpose.msra.mxu0 0
        %3612 = vmatprep.subr.bf16.mxu0 0
        %3613 = vmatpush1.bf16.xpose.msra.mxu0 0
        %3614 = vmatprep.subr.bf16.mxu0 0
        %3615 = vmatpush1.bf16.xpose.msra.mxu0 0
        %3616 = vmatprep.subr.bf16.mxu0 0
        %3617 = vmatpush1.bf16.xpose.msra.mxu0 0
        %3618 = vmatprep.subr.bf16.mxu0 0
        %3619 = vmatpush1.bf16.xpose.msra.mxu0 0
        %3620 = vmatprep.subr.bf16.mxu0 0
        %3621 = vmatpush1.bf16.xpose.msra.mxu0 0
        %3622 = vmatprep.subr.bf16.mxu0 0
        %3623 = vmatpush1.bf16.xpose.msra.mxu0 0
        %3624 = vmatprep.subr.bf16.mxu0 0
        %3625 = vmatpush1.bf16.xpose.msra.mxu0 0
        %3626 = vmatprep.subr.bf16.mxu0 0
        %3627 = vmatpush1.bf16.xpose.msra.mxu0 0
        %3628 = vmatprep.subr.bf16.mxu0 0
        %3629 = vmatpush1.bf16.xpose.msra.mxu0 0
        %3630 = vmatprep.subr.bf16.mxu0 0
        %3631 = vmatpush1.bf16.xpose.msra.mxu0 0
        %3632 = vmatprep.subr.bf16.mxu0 0
        %3633 = vmatpush1.bf16.xpose.msra.mxu0 0
        %3634 = vmatprep.subr.bf16.mxu0 0
        %3635 = vmatpush1.bf16.xpose.msra.mxu0 0
        %3636 = vmatprep.subr.bf16.mxu0 0
        %3637 = vmatpush1.bf16.xpose.msra.mxu0 0
        %3638 = vmatprep.mubr.bf16.mxu0 0
        %3639 = vmatmul.mubr.bf16.gmra.mrb[0].mxu0 %v3601
        %v3640 = vpop.f32.mrb[0].mxu0
        %v3641 = vadd.f32 0.0, %v3640
        %v3642 = vpop.f32.mrb[0].mxu0
        %v3643 = vpop.f32.mrb[0].mxu0
        %v3644 = vadd.f32 0.0, %v3643
        %v3645 = vpop.f32.mrb[0].mxu0
        %3646 = vdwg.mxu0
        %v3647 = vsel %vm831, %v3482, -inf
        %3648 = vmax.xlane.f32.xlu0 %v3647
        %v3649 = vpop.xlane.xlu0 %3648
        %v3650 = vsel %vm831, %v3485, -inf
        %3651 = vmax.xlane.f32.xlu0 %v3650
        %v3652 = vpop.xlane.xlu0 %3651
        %v3653 = vsel %vm831, %v3535, -inf
        %3654 = vmax.xlane.f32.xlu0 %v3653
        %v3655 = vpop.xlane.xlu0 %3654
        %v3656 = vsel %vm831, %v3538, -inf
        %3657 = vmax.xlane.f32.xlu0 %v3656
        %v3658 = vpop.xlane.xlu0 %3657
        %v3659 = vsel %vm831, %v3588, -inf
        %3660 = vmax.xlane.f32.xlu0 %v3659
        %v3661 = vpop.xlane.xlu0 %3660
        %v3662 = vsel %vm831, %v3591, -inf
        %3663 = vmax.xlane.f32.xlu0 %v3662
        %v3664 = vpop.xlane.xlu0 %3663
        %v3665 = vsel %vm831, %v3641, -inf
        %3666 = vmax.xlane.f32.xlu0 %v3665
        %v3667 = vpop.xlane.xlu0 %3666
        %v3668 = vsel %vm831, %v3644, -inf
        %3669 = vmax.xlane.f32.xlu0 %v3668
        %v3670 = vpop.xlane.xlu0 %3669
        %v3671 = vsub.f32 %v3482, %v3649
        %v3672 = vsub.f32 %v3485, %v3652
        %v3673 = vsub.f32 %v3535, %v3655
        %v3674 = vsub.f32 %v3538, %v3658
        %v3675 = vsub.f32 %v3588, %v3661
        %v3676 = vsub.f32 %v3591, %v3664
        %v3677 = vsub.f32 %v3641, %v3667
        %v3678 = vsub.f32 %v3644, %v3670
        %v3679 = vmul.f32 %v3671, 1.442695
        %v3680 = vpow.pop %v3679
        %v3681 = vmul.f32 %v3672, 1.442695
        %v3682 = vpow.pop %v3681
        %v3683 = vmul.f32 %v3673, 1.442695
        %v3684 = vpow.pop %v3683
        %v3685 = vmul.f32 %v3674, 1.442695
        %v3686 = vpow.pop %v3685
        %v3687 = vmul.f32 %v3675, 1.442695
        %v3688 = vpow.pop %v3687
        %v3689 = vmul.f32 %v3676, 1.442695
        %v3690 = vpow.pop %v3689
        %v3691 = vmul.f32 %v3677, 1.442695
        %v3692 = vpow.pop %v3691
        %v3693 = vmul.f32 %v3678, 1.442695
        %v3694 = vpow.pop %v3693
        %v3695 = vsel %vm831, %v3680, 0.0
        %3696 = vadd.xlane.f32.xlu0 %v3695
        %v3697 = vpop.xlane.xlu0 %3696
        %v3698 = vsel %vm831, %v3682, 0.0
        %3699 = vadd.xlane.f32.xlu0 %v3698
        %v3700 = vpop.xlane.xlu0 %3699
        %v3701 = vsel %vm831, %v3684, 0.0
        %3702 = vadd.xlane.f32.xlu0 %v3701
        %v3703 = vpop.xlane.xlu0 %3702
        %v3704 = vsel %vm831, %v3686, 0.0
        %3705 = vadd.xlane.f32.xlu0 %v3704
        %v3706 = vpop.xlane.xlu0 %3705
        %v3707 = vsel %vm831, %v3688, 0.0
        %3708 = vadd.xlane.f32.xlu0 %v3707
        %v3709 = vpop.xlane.xlu0 %3708
        %v3710 = vsel %vm831, %v3690, 0.0
        %3711 = vadd.xlane.f32.xlu0 %v3710
        %v3712 = vpop.xlane.xlu0 %3711
        %v3713 = vsel %vm831, %v3692, 0.0
        %3714 = vadd.xlane.f32.xlu0 %v3713
        %v3715 = vpop.xlane.xlu0 %3714
        %v3716 = vsel %vm831, %v3694, 0.0
        %3717 = vadd.xlane.f32.xlu0 %v3716
        %v3718 = vpop.xlane.xlu0 %3717
        %v3719 = vrcp.pop %v3697
        %v3720 = vrcp.pop %v3700
        %v3721 = vrcp.pop %v3703
        %v3722 = vrcp.pop %v3706
        %v3723 = vrcp.pop %v3709
        %v3724 = vrcp.pop %v3712
        %v3725 = vrcp.pop %v3715
        %v3726 = vrcp.pop %v3718
        %v3727 = vmul.f32 %v3680, %v3719
        %v3728 = vmul.f32 %v3682, %v3720
        %v3729 = vmul.f32 %v3684, %v3721
        %v3730 = vmul.f32 %v3686, %v3722
        %v3731 = vmul.f32 %v3688, %v3723
        %v3732 = vmul.f32 %v3690, %v3724
        %v3733 = vmul.f32 %v3692, %v3725
        %v3734 = vmul.f32 %v3694, %v3726
        %v3735 = vpack.c.bf16 %v3728, %v3727
        %v3736 = vpack.c.bf16 %v3730, %v3729
        %v3737 = vpack.c.bf16 %v3732, %v3731
        %v3738 = vpack.c.bf16 %v3734, %v3733
        %3739 = vrot.lane.b32.xlu0 %v2950, 88
        %v3740 = vpop.permute.xlu0 %3739
        %v3742 = vsel %vm831, %v3735, 0
        %v3745 = vsel %vm3240, %v3740, 0
        %3747 = vmatprep.subr.bf16.mxu0 0
        %3748 = vmatpush1.bf16.msra.mxu0 %v3745
        %3749 = vmatprep.subr.bf16.mxu0 0
        %3750 = vmatpush1.bf16.msra.mxu0 0
        %3751 = vmatprep.subr.bf16.mxu0 0
        %3752 = vmatpush1.bf16.msra.mxu0 0
        %3753 = vmatprep.subr.bf16.mxu0 0
        %3754 = vmatpush1.bf16.msra.mxu0 0
        %3755 = vmatprep.subr.bf16.mxu0 0
        %3756 = vmatpush1.bf16.msra.mxu0 0
        %3757 = vmatprep.subr.bf16.mxu0 0
        %3758 = vmatpush1.bf16.msra.mxu0 0
        %3759 = vmatprep.subr.bf16.mxu0 0
        %3760 = vmatpush1.bf16.msra.mxu0 0
        %3761 = vmatprep.subr.bf16.mxu0 0
        %3762 = vmatpush1.bf16.msra.mxu0 0
        %3763 = vmatprep.subr.bf16.mxu0 0
        %3764 = vmatpush1.bf16.msra.mxu0 0
        %3765 = vmatprep.subr.bf16.mxu0 0
        %3766 = vmatpush1.bf16.msra.mxu0 0
        %3767 = vmatprep.subr.bf16.mxu0 0
        %3768 = vmatpush1.bf16.msra.mxu0 0
        %3769 = vmatprep.subr.bf16.mxu0 0
        %3770 = vmatpush1.bf16.msra.mxu0 0
        %3771 = vmatprep.subr.bf16.mxu0 0
        %3772 = vmatpush1.bf16.msra.mxu0 0
        %3773 = vmatprep.subr.bf16.mxu0 0
        %3774 = vmatpush1.bf16.msra.mxu0 0
        %3775 = vmatprep.subr.bf16.mxu0 0
        %3776 = vmatpush1.bf16.msra.mxu0 0
        %3777 = vmatprep.subr.bf16.mxu0 0
        %3778 = vmatpush1.bf16.msra.mxu0 0
        %3779 = vmatprep.mubr.bf16.mxu0 0
        %3780 = vmatmul.mubr.bf16.gmra.mrb[0].mxu0 %v3742
        %v3781 = vpop.f32.mrb[0].mxu0
        %v3782 = vadd.f32 0.0, %v3781
        %v3783 = vpop.f32.mrb[0].mxu0
        %v3784 = vpop.f32.mrb[0].mxu0
        %v3785 = vadd.f32 0.0, %v3784
        %v3786 = vpop.f32.mrb[0].mxu0
        %3787 = vdwg.mxu0
        %3788 = vrot.lane.b32.xlu0 %v2951, 88
        %v3789 = vpop.permute.xlu0 %3788
        %v3791 = vsel %vm831, %v3736, 0
        %v3794 = vsel %vm3240, %v3789, 0
        %3796 = vmatprep.subr.bf16.mxu0 0
        %3797 = vmatpush1.bf16.msra.mxu0 %v3794
        %3798 = vmatprep.subr.bf16.mxu0 0
        %3799 = vmatpush1.bf16.msra.mxu0 0
        %3800 = vmatprep.subr.bf16.mxu0 0
        %3801 = vmatpush1.bf16.msra.mxu0 0
        %3802 = vmatprep.subr.bf16.mxu0 0
        %3803 = vmatpush1.bf16.msra.mxu0 0
        %3804 = vmatprep.subr.bf16.mxu0 0
        %3805 = vmatpush1.bf16.msra.mxu0 0
        %3806 = vmatprep.subr.bf16.mxu0 0
        %3807 = vmatpush1.bf16.msra.mxu0 0
        %3808 = vmatprep.subr.bf16.mxu0 0
        %3809 = vmatpush1.bf16.msra.mxu0 0
        %3810 = vmatprep.subr.bf16.mxu0 0
        %3811 = vmatpush1.bf16.msra.mxu0 0
        %3812 = vmatprep.subr.bf16.mxu0 0
        %3813 = vmatpush1.bf16.msra.mxu0 0
        %3814 = vmatprep.subr.bf16.mxu0 0
        %3815 = vmatpush1.bf16.msra.mxu0 0
        %3816 = vmatprep.subr.bf16.mxu0 0
        %3817 = vmatpush1.bf16.msra.mxu0 0
        %3818 = vmatprep.subr.bf16.mxu0 0
        %3819 = vmatpush1.bf16.msra.mxu0 0
        %3820 = vmatprep.subr.bf16.mxu0 0
        %3821 = vmatpush1.bf16.msra.mxu0 0
        %3822 = vmatprep.subr.bf16.mxu0 0
        %3823 = vmatpush1.bf16.msra.mxu0 0
        %3824 = vmatprep.subr.bf16.mxu0 0
        %3825 = vmatpush1.bf16.msra.mxu0 0
        %3826 = vmatprep.subr.bf16.mxu0 0
        %3827 = vmatpush1.bf16.msra.mxu0 0
        %3828 = vmatprep.mubr.bf16.mxu0 0
        %3829 = vmatmul.mubr.bf16.gmra.mrb[0].mxu0 %v3791
        %v3830 = vpop.f32.mrb[0].mxu0
        %v3831 = vadd.f32 0.0, %v3830
        %v3832 = vpop.f32.mrb[0].mxu0
        %v3833 = vpop.f32.mrb[0].mxu0
        %v3834 = vadd.f32 0.0, %v3833
        %v3835 = vpop.f32.mrb[0].mxu0
        %3836 = vdwg.mxu0
        %3837 = vrot.lane.b32.xlu0 %v2952, 88
        %v3838 = vpop.permute.xlu0 %3837
        %v3840 = vsel %vm831, %v3737, 0
        %v3843 = vsel %vm3240, %v3838, 0
        %3845 = vmatprep.subr.bf16.mxu0 0
        %3846 = vmatpush1.bf16.msra.mxu0 %v3843
        %3847 = vmatprep.subr.bf16.mxu0 0
        %3848 = vmatpush1.bf16.msra.mxu0 0
        %3849 = vmatprep.subr.bf16.mxu0 0
        %3850 = vmatpush1.bf16.msra.mxu0 0
        %3851 = vmatprep.subr.bf16.mxu0 0
        %3852 = vmatpush1.bf16.msra.mxu0 0
        %3853 = vmatprep.subr.bf16.mxu0 0
        %3854 = vmatpush1.bf16.msra.mxu0 0
        %3855 = vmatprep.subr.bf16.mxu0 0
        %3856 = vmatpush1.bf16.msra.mxu0 0
        %3857 = vmatprep.subr.bf16.mxu0 0
        %3858 = vmatpush1.bf16.msra.mxu0 0
        %3859 = vmatprep.subr.bf16.mxu0 0
        %3860 = vmatpush1.bf16.msra.mxu0 0
        %3861 = vmatprep.subr.bf16.mxu0 0
        %3862 = vmatpush1.bf16.msra.mxu0 0
        %3863 = vmatprep.subr.bf16.mxu0 0
        %3864 = vmatpush1.bf16.msra.mxu0 0
        %3865 = vmatprep.subr.bf16.mxu0 0
        %3866 = vmatpush1.bf16.msra.mxu0 0
        %3867 = vmatprep.subr.bf16.mxu0 0
        %3868 = vmatpush1.bf16.msra.mxu0 0
        %3869 = vmatprep.subr.bf16.mxu0 0
        %3870 = vmatpush1.bf16.msra.mxu0 0
        %3871 = vmatprep.subr.bf16.mxu0 0
        %3872 = vmatpush1.bf16.msra.mxu0 0
        %3873 = vmatprep.subr.bf16.mxu0 0
        %3874 = vmatpush1.bf16.msra.mxu0 0
        %3875 = vmatprep.subr.bf16.mxu0 0
        %3876 = vmatpush1.bf16.msra.mxu0 0
        %3877 = vmatprep.mubr.bf16.mxu0 0
        %3878 = vmatmul.mubr.bf16.gmra.mrb[0].mxu0 %v3840
        %v3879 = vpop.f32.mrb[0].mxu0
        %v3880 = vadd.f32 0.0, %v3879
        %v3881 = vpop.f32.mrb[0].mxu0
        %v3882 = vpop.f32.mrb[0].mxu0
        %v3883 = vadd.f32 0.0, %v3882
        %v3884 = vpop.f32.mrb[0].mxu0
        %3885 = vdwg.mxu0
        %3886 = vrot.lane.b32.xlu0 %v2953, 88
        %v3887 = vpop.permute.xlu0 %3886
        %v3889 = vsel %vm831, %v3738, 0
        %v3892 = vsel %vm3240, %v3887, 0
        %3894 = vmatprep.subr.bf16.mxu0 0
        %3895 = vmatpush1.bf16.msra.mxu0 %v3892
        %3896 = vmatprep.subr.bf16.mxu0 0
        %3897 = vmatpush1.bf16.msra.mxu0 0
        %3898 = vmatprep.subr.bf16.mxu0 0
        %3899 = vmatpush1.bf16.msra.mxu0 0
        %3900 = vmatprep.subr.bf16.mxu0 0
        %3901 = vmatpush1.bf16.msra.mxu0 0
        %3902 = vmatprep.subr.bf16.mxu0 0
        %3903 = vmatpush1.bf16.msra.mxu0 0
        %3904 = vmatprep.subr.bf16.mxu0 0
        %3905 = vmatpush1.bf16.msra.mxu0 0
        %3906 = vmatprep.subr.bf16.mxu0 0
        %3907 = vmatpush1.bf16.msra.mxu0 0
        %3908 = vmatprep.subr.bf16.mxu0 0
        %3909 = vmatpush1.bf16.msra.mxu0 0
        %3910 = vmatprep.subr.bf16.mxu0 0
        %3911 = vmatpush1.bf16.msra.mxu0 0
        %3912 = vmatprep.subr.bf16.mxu0 0
        %3913 = vmatpush1.bf16.msra.mxu0 0
        %3914 = vmatprep.subr.bf16.mxu0 0
        %3915 = vmatpush1.bf16.msra.mxu0 0
        %3916 = vmatprep.subr.bf16.mxu0 0
        %3917 = vmatpush1.bf16.msra.mxu0 0
        %3918 = vmatprep.subr.bf16.mxu0 0
        %3919 = vmatpush1.bf16.msra.mxu0 0
        %3920 = vmatprep.subr.bf16.mxu0 0
        %3921 = vmatpush1.bf16.msra.mxu0 0
        %3922 = vmatprep.subr.bf16.mxu0 0
        %3923 = vmatpush1.bf16.msra.mxu0 0
        %3924 = vmatprep.subr.bf16.mxu0 0
        %3925 = vmatpush1.bf16.msra.mxu0 0
        %3926 = vmatprep.mubr.bf16.mxu0 0
        %3927 = vmatmul.mubr.bf16.gmra.mrb[0].mxu0 %v3889
        %v3928 = vpop.f32.mrb[0].mxu0
        %v3929 = vadd.f32 0.0, %v3928
        %v3930 = vpop.f32.mrb[0].mxu0
        %v3931 = vpop.f32.mrb[0].mxu0
        %v3932 = vadd.f32 0.0, %v3931
        %v3933 = vpop.f32.mrb[0].mxu0
        %3934 = vdwg.mxu0
        %3935 = vrot.lane.b32.xlu0 %v2942, 112
        %v3936 = vpop.permute.xlu0 %3935
        %3937 = vrot.lane.b32.xlu0 %v2946, 112
        %v3938 = vpop.permute.xlu0 %3937
        %v3940 = vsel %vm831, %v3936, 0
        %v3943 = vsel %vm831, %v3938, 0
        %3945 = vmatprep.subr.bf16.mxu0 0
        %3946 = vmatpush1.bf16.xpose.msra.mxu0 %v3943
        %3947 = vmatprep.subr.bf16.mxu0 0
        %3948 = vmatpush1.bf16.xpose.msra.mxu0 0
        %3949 = vmatprep.subr.bf16.mxu0 0
        %3950 = vmatpush1.bf16.xpose.msra.mxu0 0
        %3951 = vmatprep.subr.bf16.mxu0 0
        %3952 = vmatpush1.bf16.xpose.msra.mxu0 0
        %3953 = vmatprep.subr.bf16.mxu0 0
        %3954 = vmatpush1.bf16.xpose.msra.mxu0 0
        %3955 = vmatprep.subr.bf16.mxu0 0
        %3956 = vmatpush1.bf16.xpose.msra.mxu0 0
        %3957 = vmatprep.subr.bf16.mxu0 0
        %3958 = vmatpush1.bf16.xpose.msra.mxu0 0
        %3959 = vmatprep.subr.bf16.mxu0 0
        %3960 = vmatpush1.bf16.xpose.msra.mxu0 0
        %3961 = vmatprep.subr.bf16.mxu0 0
        %3962 = vmatpush1.bf16.xpose.msra.mxu0 0
        %3963 = vmatprep.subr.bf16.mxu0 0
        %3964 = vmatpush1.bf16.xpose.msra.mxu0 0
        %3965 = vmatprep.subr.bf16.mxu0 0
        %3966 = vmatpush1.bf16.xpose.msra.mxu0 0
        %3967 = vmatprep.subr.bf16.mxu0 0
        %3968 = vmatpush1.bf16.xpose.msra.mxu0 0
        %3969 = vmatprep.subr.bf16.mxu0 0
        %3970 = vmatpush1.bf16.xpose.msra.mxu0 0
        %3971 = vmatprep.subr.bf16.mxu0 0
        %3972 = vmatpush1.bf16.xpose.msra.mxu0 0
        %3973 = vmatprep.subr.bf16.mxu0 0
        %3974 = vmatpush1.bf16.xpose.msra.mxu0 0
        %3975 = vmatprep.subr.bf16.mxu0 0
        %3976 = vmatpush1.bf16.xpose.msra.mxu0 0
        %3977 = vmatprep.mubr.bf16.mxu0 0
        %3978 = vmatmul.mubr.bf16.gmra.mrb[0].mxu0 %v3940
        %v3979 = vpop.f32.mrb[0].mxu0
        %v3980 = vadd.f32 0.0, %v3979
        %v3981 = vpop.f32.mrb[0].mxu0
        %v3982 = vpop.f32.mrb[0].mxu0
        %v3983 = vadd.f32 0.0, %v3982
        %v3984 = vpop.f32.mrb[0].mxu0
        %3985 = vdwg.mxu0
        %3986 = vrot.lane.b32.xlu0 %v2943, 112
        %v3987 = vpop.permute.xlu0 %3986
        %3988 = vrot.lane.b32.xlu0 %v2947, 112
        %v3989 = vpop.permute.xlu0 %3988
        %v3991 = vsel %vm831, %v3987, 0
        %v3994 = vsel %vm831, %v3989, 0
        %3996 = vmatprep.subr.bf16.mxu0 0
        %3997 = vmatpush1.bf16.xpose.msra.mxu0 %v3994
        %3998 = vmatprep.subr.bf16.mxu0 0
        %3999 = vmatpush1.bf16.xpose.msra.mxu0 0
        %4000 = vmatprep.subr.bf16.mxu0 0
        %4001 = vmatpush1.bf16.xpose.msra.mxu0 0
        %4002 = vmatprep.subr.bf16.mxu0 0
        %4003 = vmatpush1.bf16.xpose.msra.mxu0 0
        %4004 = vmatprep.subr.bf16.mxu0 0
        %4005 = vmatpush1.bf16.xpose.msra.mxu0 0
        %4006 = vmatprep.subr.bf16.mxu0 0
        %4007 = vmatpush1.bf16.xpose.msra.mxu0 0
        %4008 = vmatprep.subr.bf16.mxu0 0
        %4009 = vmatpush1.bf16.xpose.msra.mxu0 0
        %4010 = vmatprep.subr.bf16.mxu0 0
        %4011 = vmatpush1.bf16.xpose.msra.mxu0 0
        %4012 = vmatprep.subr.bf16.mxu0 0
        %4013 = vmatpush1.bf16.xpose.msra.mxu0 0
        %4014 = vmatprep.subr.bf16.mxu0 0
        %4015 = vmatpush1.bf16.xpose.msra.mxu0 0
        %4016 = vmatprep.subr.bf16.mxu0 0
        %4017 = vmatpush1.bf16.xpose.msra.mxu0 0
        %4018 = vmatprep.subr.bf16.mxu0 0
        %4019 = vmatpush1.bf16.xpose.msra.mxu0 0
        %4020 = vmatprep.subr.bf16.mxu0 0
        %4021 = vmatpush1.bf16.xpose.msra.mxu0 0
        %4022 = vmatprep.subr.bf16.mxu0 0
        %4023 = vmatpush1.bf16.xpose.msra.mxu0 0
        %4024 = vmatprep.subr.bf16.mxu0 0
        %4025 = vmatpush1.bf16.xpose.msra.mxu0 0
        %4026 = vmatprep.subr.bf16.mxu0 0
        %4027 = vmatpush1.bf16.xpose.msra.mxu0 0
        %4028 = vmatprep.mubr.bf16.mxu0 0
        %4029 = vmatmul.mubr.bf16.gmra.mrb[0].mxu0 %v3991
        %v4030 = vpop.f32.mrb[0].mxu0
        %v4031 = vadd.f32 0.0, %v4030
        %v4032 = vpop.f32.mrb[0].mxu0
        %v4033 = vpop.f32.mrb[0].mxu0
        %v4034 = vadd.f32 0.0, %v4033
        %v4035 = vpop.f32.mrb[0].mxu0
        %4036 = vdwg.mxu0
        %4037 = vrot.lane.b32.xlu0 %v2944, 112
        %v4038 = vpop.permute.xlu0 %4037
        %4039 = vrot.lane.b32.xlu0 %v2948, 112
        %v4040 = vpop.permute.xlu0 %4039
        %v4042 = vsel %vm831, %v4038, 0
        %v4045 = vsel %vm831, %v4040, 0
        %4047 = vmatprep.subr.bf16.mxu0 0
        %4048 = vmatpush1.bf16.xpose.msra.mxu0 %v4045
        %4049 = vmatprep.subr.bf16.mxu0 0
        %4050 = vmatpush1.bf16.xpose.msra.mxu0 0
        %4051 = vmatprep.subr.bf16.mxu0 0
        %4052 = vmatpush1.bf16.xpose.msra.mxu0 0
        %4053 = vmatprep.subr.bf16.mxu0 0
        %4054 = vmatpush1.bf16.xpose.msra.mxu0 0
        %4055 = vmatprep.subr.bf16.mxu0 0
        %4056 = vmatpush1.bf16.xpose.msra.mxu0 0
        %4057 = vmatprep.subr.bf16.mxu0 0
        %4058 = vmatpush1.bf16.xpose.msra.mxu0 0
        %4059 = vmatprep.subr.bf16.mxu0 0
        %4060 = vmatpush1.bf16.xpose.msra.mxu0 0
        %4061 = vmatprep.subr.bf16.mxu0 0
        %4062 = vmatpush1.bf16.xpose.msra.mxu0 0
        %4063 = vmatprep.subr.bf16.mxu0 0
        %4064 = vmatpush1.bf16.xpose.msra.mxu0 0
        %4065 = vmatprep.subr.bf16.mxu0 0
        %4066 = vmatpush1.bf16.xpose.msra.mxu0 0
        %4067 = vmatprep.subr.bf16.mxu0 0
        %4068 = vmatpush1.bf16.xpose.msra.mxu0 0
        %4069 = vmatprep.subr.bf16.mxu0 0
        %4070 = vmatpush1.bf16.xpose.msra.mxu0 0
        %4071 = vmatprep.subr.bf16.mxu0 0
        %4072 = vmatpush1.bf16.xpose.msra.mxu0 0
        %4073 = vmatprep.subr.bf16.mxu0 0
        %4074 = vmatpush1.bf16.xpose.msra.mxu0 0
        %4075 = vmatprep.subr.bf16.mxu0 0
        %4076 = vmatpush1.bf16.xpose.msra.mxu0 0
        %4077 = vmatprep.subr.bf16.mxu0 0
        %4078 = vmatpush1.bf16.xpose.msra.mxu0 0
        %4079 = vmatprep.mubr.bf16.mxu0 0
        %4080 = vmatmul.mubr.bf16.gmra.mrb[0].mxu0 %v4042
        %v4081 = vpop.f32.mrb[0].mxu0
        %v4082 = vadd.f32 0.0, %v4081
        %v4083 = vpop.f32.mrb[0].mxu0
        %v4084 = vpop.f32.mrb[0].mxu0
        %v4085 = vadd.f32 0.0, %v4084
        %v4086 = vpop.f32.mrb[0].mxu0
        %4087 = vdwg.mxu0
        %4088 = vrot.lane.b32.xlu0 %v2945, 112
        %v4089 = vpop.permute.xlu0 %4088
        %4090 = vrot.lane.b32.xlu0 %v2949, 112
        %v4091 = vpop.permute.xlu0 %4090
        %v4093 = vsel %vm831, %v4089, 0
        %v4096 = vsel %vm831, %v4091, 0
        %4098 = vmatprep.subr.bf16.mxu0 0
        %4099 = vmatpush1.bf16.xpose.msra.mxu0 %v4096
        %4100 = vmatprep.subr.bf16.mxu0 0
        %4101 = vmatpush1.bf16.xpose.msra.mxu0 0
        %4102 = vmatprep.subr.bf16.mxu0 0
        %4103 = vmatpush1.bf16.xpose.msra.mxu0 0
        %4104 = vmatprep.subr.bf16.mxu0 0
        %4105 = vmatpush1.bf16.xpose.msra.mxu0 0
        %4106 = vmatprep.subr.bf16.mxu0 0
        %4107 = vmatpush1.bf16.xpose.msra.mxu0 0
        %4108 = vmatprep.subr.bf16.mxu0 0
        %4109 = vmatpush1.bf16.xpose.msra.mxu0 0
        %4110 = vmatprep.subr.bf16.mxu0 0
        %4111 = vmatpush1.bf16.xpose.msra.mxu0 0
        %4112 = vmatprep.subr.bf16.mxu0 0
        %4113 = vmatpush1.bf16.xpose.msra.mxu0 0
        %4114 = vmatprep.subr.bf16.mxu0 0
        %4115 = vmatpush1.bf16.xpose.msra.mxu0 0
        %4116 = vmatprep.subr.bf16.mxu0 0
        %4117 = vmatpush1.bf16.xpose.msra.mxu0 0
        %4118 = vmatprep.subr.bf16.mxu0 0
        %4119 = vmatpush1.bf16.xpose.msra.mxu0 0
        %4120 = vmatprep.subr.bf16.mxu0 0
        %4121 = vmatpush1.bf16.xpose.msra.mxu0 0
        %4122 = vmatprep.subr.bf16.mxu0 0
        %4123 = vmatpush1.bf16.xpose.msra.mxu0 0
        %4124 = vmatprep.subr.bf16.mxu0 0
        %4125 = vmatpush1.bf16.xpose.msra.mxu0 0
        %4126 = vmatprep.subr.bf16.mxu0 0
        %4127 = vmatpush1.bf16.xpose.msra.mxu0 0
        %4128 = vmatprep.subr.bf16.mxu0 0
        %4129 = vmatpush1.bf16.xpose.msra.mxu0 0
        %4130 = vmatprep.mubr.bf16.mxu0 0
        %4131 = vmatmul.mubr.bf16.gmra.mrb[0].mxu0 %v4093
        %v4132 = vpop.f32.mrb[0].mxu0
        %v4133 = vadd.f32 0.0, %v4132
        %v4134 = vpop.f32.mrb[0].mxu0
        %v4135 = vpop.f32.mrb[0].mxu0
        %v4136 = vadd.f32 0.0, %v4135
        %v4137 = vpop.f32.mrb[0].mxu0
        %4138 = vdwg.mxu0
        %v4139 = vsel %vm831, %v3980, -inf
        %4140 = vmax.xlane.f32.xlu0 %v4139
        %v4141 = vpop.xlane.xlu0 %4140
        %v4142 = vsel %vm831, %v3983, -inf
        %4143 = vmax.xlane.f32.xlu0 %v4142
        %v4144 = vpop.xlane.xlu0 %4143
        %v4145 = vsel %vm831, %v4031, -inf
        %4146 = vmax.xlane.f32.xlu0 %v4145
        %v4147 = vpop.xlane.xlu0 %4146
        %v4148 = vsel %vm831, %v4034, -inf
        %4149 = vmax.xlane.f32.xlu0 %v4148
        %v4150 = vpop.xlane.xlu0 %4149
        %v4151 = vsel %vm831, %v4082, -inf
        %4152 = vmax.xlane.f32.xlu0 %v4151
        %v4153 = vpop.xlane.xlu0 %4152
        %v4154 = vsel %vm831, %v4085, -inf
        %4155 = vmax.xlane.f32.xlu0 %v4154
        %v4156 = vpop.xlane.xlu0 %4155
        %v4157 = vsel %vm831, %v4133, -inf
        %4158 = vmax.xlane.f32.xlu0 %v4157
        %v4159 = vpop.xlane.xlu0 %4158
        %v4160 = vsel %vm831, %v4136, -inf
        %4161 = vmax.xlane.f32.xlu0 %v4160
        %v4162 = vpop.xlane.xlu0 %4161
        %v4163 = vsub.f32 %v3980, %v4141
        %v4164 = vsub.f32 %v3983, %v4144
        %v4165 = vsub.f32 %v4031, %v4147
        %v4166 = vsub.f32 %v4034, %v4150
        %v4167 = vsub.f32 %v4082, %v4153
        %v4168 = vsub.f32 %v4085, %v4156
        %v4169 = vsub.f32 %v4133, %v4159
        %v4170 = vsub.f32 %v4136, %v4162
        %v4171 = vmul.f32 %v4163, 1.442695
        %v4172 = vpow.pop %v4171
        %v4173 = vmul.f32 %v4164, 1.442695
        %v4174 = vpow.pop %v4173
        %v4175 = vmul.f32 %v4165, 1.442695
        %v4176 = vpow.pop %v4175
        %v4177 = vmul.f32 %v4166, 1.442695
        %v4178 = vpow.pop %v4177
        %v4179 = vmul.f32 %v4167, 1.442695
        %v4180 = vpow.pop %v4179
        %v4181 = vmul.f32 %v4168, 1.442695
        %v4182 = vpow.pop %v4181
        %v4183 = vmul.f32 %v4169, 1.442695
        %v4184 = vpow.pop %v4183
        %v4185 = vmul.f32 %v4170, 1.442695
        %v4186 = vpow.pop %v4185
        %v4187 = vsel %vm831, %v4172, 0.0
        %4188 = vadd.xlane.f32.xlu0 %v4187
        %v4189 = vpop.xlane.xlu0 %4188
        %v4190 = vsel %vm831, %v4174, 0.0
        %4191 = vadd.xlane.f32.xlu0 %v4190
        %v4192 = vpop.xlane.xlu0 %4191
        %v4193 = vsel %vm831, %v4176, 0.0
        %4194 = vadd.xlane.f32.xlu0 %v4193
        %v4195 = vpop.xlane.xlu0 %4194
        %v4196 = vsel %vm831, %v4178, 0.0
        %4197 = vadd.xlane.f32.xlu0 %v4196
        %v4198 = vpop.xlane.xlu0 %4197
        %v4199 = vsel %vm831, %v4180, 0.0
        %4200 = vadd.xlane.f32.xlu0 %v4199
        %v4201 = vpop.xlane.xlu0 %4200
        %v4202 = vsel %vm831, %v4182, 0.0
        %4203 = vadd.xlane.f32.xlu0 %v4202
        %v4204 = vpop.xlane.xlu0 %4203
        %v4205 = vsel %vm831, %v4184, 0.0
        %4206 = vadd.xlane.f32.xlu0 %v4205
        %v4207 = vpop.xlane.xlu0 %4206
        %v4208 = vsel %vm831, %v4186, 0.0
        %4209 = vadd.xlane.f32.xlu0 %v4208
        %v4210 = vpop.xlane.xlu0 %4209
        %v4211 = vrcp.pop %v4189
        %v4212 = vrcp.pop %v4192
        %v4213 = vrcp.pop %v4195
        %v4214 = vrcp.pop %v4198
        %v4215 = vrcp.pop %v4201
        %v4216 = vrcp.pop %v4204
        %v4217 = vrcp.pop %v4207
        %v4218 = vrcp.pop %v4210
        %v4219 = vmul.f32 %v4172, %v4211
        %v4220 = vmul.f32 %v4174, %v4212
        %v4221 = vmul.f32 %v4176, %v4213
        %v4222 = vmul.f32 %v4178, %v4214
        %v4223 = vmul.f32 %v4180, %v4215
        %v4224 = vmul.f32 %v4182, %v4216
        %v4225 = vmul.f32 %v4184, %v4217
        %v4226 = vmul.f32 %v4186, %v4218
        %v4227 = vpack.c.bf16 %v4220, %v4219
        %v4228 = vpack.c.bf16 %v4222, %v4221
        %v4229 = vpack.c.bf16 %v4224, %v4223
        %v4230 = vpack.c.bf16 %v4226, %v4225
        %4231 = vrot.lane.b32.xlu0 %v2950, 80
        %v4232 = vpop.permute.xlu0 %4231
        %v4234 = vsel %vm831, %v4227, 0
        %v4237 = vsel %vm3240, %v4232, 0
        %4239 = vmatprep.subr.bf16.mxu0 0
        %4240 = vmatpush1.bf16.msra.mxu0 %v4237
        %4241 = vmatprep.subr.bf16.mxu0 0
        %4242 = vmatpush1.bf16.msra.mxu0 0
        %4243 = vmatprep.subr.bf16.mxu0 0
        %4244 = vmatpush1.bf16.msra.mxu0 0
        %4245 = vmatprep.subr.bf16.mxu0 0
        %4246 = vmatpush1.bf16.msra.mxu0 0
        %4247 = vmatprep.subr.bf16.mxu0 0
        %4248 = vmatpush1.bf16.msra.mxu0 0
        %4249 = vmatprep.subr.bf16.mxu0 0
        %4250 = vmatpush1.bf16.msra.mxu0 0
        %4251 = vmatprep.subr.bf16.mxu0 0
        %4252 = vmatpush1.bf16.msra.mxu0 0
        %4253 = vmatprep.subr.bf16.mxu0 0
        %4254 = vmatpush1.bf16.msra.mxu0 0
        %4255 = vmatprep.subr.bf16.mxu0 0
        %4256 = vmatpush1.bf16.msra.mxu0 0
        %4257 = vmatprep.subr.bf16.mxu0 0
        %4258 = vmatpush1.bf16.msra.mxu0 0
        %4259 = vmatprep.subr.bf16.mxu0 0
        %4260 = vmatpush1.bf16.msra.mxu0 0
        %4261 = vmatprep.subr.bf16.mxu0 0
        %4262 = vmatpush1.bf16.msra.mxu0 0
        %4263 = vmatprep.subr.bf16.mxu0 0
        %4264 = vmatpush1.bf16.msra.mxu0 0
        %4265 = vmatprep.subr.bf16.mxu0 0
        %4266 = vmatpush1.bf16.msra.mxu0 0
        %4267 = vmatprep.subr.bf16.mxu0 0
        %4268 = vmatpush1.bf16.msra.mxu0 0
        %4269 = vmatprep.subr.bf16.mxu0 0
        %4270 = vmatpush1.bf16.msra.mxu0 0
        %4271 = vmatprep.mubr.bf16.mxu0 0
        %4272 = vmatmul.mubr.bf16.gmra.mrb[0].mxu0 %v4234
        %v4273 = vpop.f32.mrb[0].mxu0
        %v4274 = vadd.f32 0.0, %v4273
        %v4275 = vpop.f32.mrb[0].mxu0
        %v4276 = vpop.f32.mrb[0].mxu0
        %v4277 = vadd.f32 0.0, %v4276
        %v4278 = vpop.f32.mrb[0].mxu0
        %4279 = vdwg.mxu0
        %4280 = vrot.lane.b32.xlu0 %v2951, 80
        %v4281 = vpop.permute.xlu0 %4280
        %v4283 = vsel %vm831, %v4228, 0
        %v4286 = vsel %vm3240, %v4281, 0
        %4288 = vmatprep.subr.bf16.mxu0 0
        %4289 = vmatpush1.bf16.msra.mxu0 %v4286
        %4290 = vmatprep.subr.bf16.mxu0 0
        %4291 = vmatpush1.bf16.msra.mxu0 0
        %4292 = vmatprep.subr.bf16.mxu0 0
        %4293 = vmatpush1.bf16.msra.mxu0 0
        %4294 = vmatprep.subr.bf16.mxu0 0
        %4295 = vmatpush1.bf16.msra.mxu0 0
        %4296 = vmatprep.subr.bf16.mxu0 0
        %4297 = vmatpush1.bf16.msra.mxu0 0
        %4298 = vmatprep.subr.bf16.mxu0 0
        %4299 = vmatpush1.bf16.msra.mxu0 0
        %4300 = vmatprep.subr.bf16.mxu0 0
        %4301 = vmatpush1.bf16.msra.mxu0 0
        %4302 = vmatprep.subr.bf16.mxu0 0
        %4303 = vmatpush1.bf16.msra.mxu0 0
        %4304 = vmatprep.subr.bf16.mxu0 0
        %4305 = vmatpush1.bf16.msra.mxu0 0
        %4306 = vmatprep.subr.bf16.mxu0 0
        %4307 = vmatpush1.bf16.msra.mxu0 0
        %4308 = vmatprep.subr.bf16.mxu0 0
        %4309 = vmatpush1.bf16.msra.mxu0 0
        %4310 = vmatprep.subr.bf16.mxu0 0
        %4311 = vmatpush1.bf16.msra.mxu0 0
        %4312 = vmatprep.subr.bf16.mxu0 0
        %4313 = vmatpush1.bf16.msra.mxu0 0
        %4314 = vmatprep.subr.bf16.mxu0 0
        %4315 = vmatpush1.bf16.msra.mxu0 0
        %4316 = vmatprep.subr.bf16.mxu0 0
        %4317 = vmatpush1.bf16.msra.mxu0 0
        %4318 = vmatprep.subr.bf16.mxu0 0
        %4319 = vmatpush1.bf16.msra.mxu0 0
        %4320 = vmatprep.mubr.bf16.mxu0 0
        %4321 = vmatmul.mubr.bf16.gmra.mrb[0].mxu0 %v4283
        %v4322 = vpop.f32.mrb[0].mxu0
        %v4323 = vadd.f32 0.0, %v4322
        %v4324 = vpop.f32.mrb[0].mxu0
        %v4325 = vpop.f32.mrb[0].mxu0
        %v4326 = vadd.f32 0.0, %v4325
        %v4327 = vpop.f32.mrb[0].mxu0
        %4328 = vdwg.mxu0
        %4329 = vrot.lane.b32.xlu0 %v2952, 80
        %v4330 = vpop.permute.xlu0 %4329
        %v4332 = vsel %vm831, %v4229, 0
        %v4335 = vsel %vm3240, %v4330, 0
        %4337 = vmatprep.subr.bf16.mxu0 0
        %4338 = vmatpush1.bf16.msra.mxu0 %v4335
        %4339 = vmatprep.subr.bf16.mxu0 0
        %4340 = vmatpush1.bf16.msra.mxu0 0
        %4341 = vmatprep.subr.bf16.mxu0 0
        %4342 = vmatpush1.bf16.msra.mxu0 0
        %4343 = vmatprep.subr.bf16.mxu0 0
        %4344 = vmatpush1.bf16.msra.mxu0 0
        %4345 = vmatprep.subr.bf16.mxu0 0
        %4346 = vmatpush1.bf16.msra.mxu0 0
        %4347 = vmatprep.subr.bf16.mxu0 0
        %4348 = vmatpush1.bf16.msra.mxu0 0
        %4349 = vmatprep.subr.bf16.mxu0 0
        %4350 = vmatpush1.bf16.msra.mxu0 0
        %4351 = vmatprep.subr.bf16.mxu0 0
        %4352 = vmatpush1.bf16.msra.mxu0 0
        %4353 = vmatprep.subr.bf16.mxu0 0
        %4354 = vmatpush1.bf16.msra.mxu0 0
        %4355 = vmatprep.subr.bf16.mxu0 0
        %4356 = vmatpush1.bf16.msra.mxu0 0
        %4357 = vmatprep.subr.bf16.mxu0 0
        %4358 = vmatpush1.bf16.msra.mxu0 0
        %4359 = vmatprep.subr.bf16.mxu0 0
        %4360 = vmatpush1.bf16.msra.mxu0 0
        %4361 = vmatprep.subr.bf16.mxu0 0
        %4362 = vmatpush1.bf16.msra.mxu0 0
        %4363 = vmatprep.subr.bf16.mxu0 0
        %4364 = vmatpush1.bf16.msra.mxu0 0
        %4365 = vmatprep.subr.bf16.mxu0 0
        %4366 = vmatpush1.bf16.msra.mxu0 0
        %4367 = vmatprep.subr.bf16.mxu0 0
        %4368 = vmatpush1.bf16.msra.mxu0 0
        %4369 = vmatprep.mubr.bf16.mxu0 0
        %4370 = vmatmul.mubr.bf16.gmra.mrb[0].mxu0 %v4332
        %v4371 = vpop.f32.mrb[0].mxu0
        %v4372 = vadd.f32 0.0, %v4371
        %v4373 = vpop.f32.mrb[0].mxu0
        %v4374 = vpop.f32.mrb[0].mxu0
        %v4375 = vadd.f32 0.0, %v4374
        %v4376 = vpop.f32.mrb[0].mxu0
        %4377 = vdwg.mxu0
        %4378 = vrot.lane.b32.xlu0 %v2953, 80
        %v4379 = vpop.permute.xlu0 %4378
        %v4381 = vsel %vm831, %v4230, 0
        %v4384 = vsel %vm3240, %v4379, 0
        %4386 = vmatprep.subr.bf16.mxu0 0
        %4387 = vmatpush1.bf16.msra.mxu0 %v4384
        %4388 = vmatprep.subr.bf16.mxu0 0
        %4389 = vmatpush1.bf16.msra.mxu0 0
        %4390 = vmatprep.subr.bf16.mxu0 0
        %4391 = vmatpush1.bf16.msra.mxu0 0
        %4392 = vmatprep.subr.bf16.mxu0 0
        %4393 = vmatpush1.bf16.msra.mxu0 0
        %4394 = vmatprep.subr.bf16.mxu0 0
        %4395 = vmatpush1.bf16.msra.mxu0 0
        %4396 = vmatprep.subr.bf16.mxu0 0
        %4397 = vmatpush1.bf16.msra.mxu0 0
        %4398 = vmatprep.subr.bf16.mxu0 0
        %4399 = vmatpush1.bf16.msra.mxu0 0
        %4400 = vmatprep.subr.bf16.mxu0 0
        %4401 = vmatpush1.bf16.msra.mxu0 0
        %4402 = vmatprep.subr.bf16.mxu0 0
        %4403 = vmatpush1.bf16.msra.mxu0 0
        %4404 = vmatprep.subr.bf16.mxu0 0
        %4405 = vmatpush1.bf16.msra.mxu0 0
        %4406 = vmatprep.subr.bf16.mxu0 0
        %4407 = vmatpush1.bf16.msra.mxu0 0
        %4408 = vmatprep.subr.bf16.mxu0 0
        %4409 = vmatpush1.bf16.msra.mxu0 0
        %4410 = vmatprep.subr.bf16.mxu0 0
        %4411 = vmatpush1.bf16.msra.mxu0 0
        %4412 = vmatprep.subr.bf16.mxu0 0
        %4413 = vmatpush1.bf16.msra.mxu0 0
        %4414 = vmatprep.subr.bf16.mxu0 0
        %4415 = vmatpush1.bf16.msra.mxu0 0
        %4416 = vmatprep.subr.bf16.mxu0 0
        %4417 = vmatpush1.bf16.msra.mxu0 0
        %4418 = vmatprep.mubr.bf16.mxu0 0
        %4419 = vmatmul.mubr.bf16.gmra.mrb[0].mxu0 %v4381
        %v4420 = vpop.f32.mrb[0].mxu0
        %v4421 = vadd.f32 0.0, %v4420
        %v4422 = vpop.f32.mrb[0].mxu0
        %v4423 = vpop.f32.mrb[0].mxu0
        %v4424 = vadd.f32 0.0, %v4423
        %v4425 = vpop.f32.mrb[0].mxu0
        %4426 = vdwg.mxu0
        %4427 = vrot.lane.b32.xlu0 %v2942, 104
        %v4428 = vpop.permute.xlu0 %4427
        %4429 = vrot.lane.b32.xlu0 %v2946, 104
        %v4430 = vpop.permute.xlu0 %4429
        %v4432 = vsel %vm831, %v4428, 0
        %v4435 = vsel %vm831, %v4430, 0
        %4437 = vmatprep.subr.bf16.mxu0 0
        %4438 = vmatpush1.bf16.xpose.msra.mxu0 %v4435
        %4439 = vmatprep.subr.bf16.mxu0 0
        %4440 = vmatpush1.bf16.xpose.msra.mxu0 0
        %4441 = vmatprep.subr.bf16.mxu0 0
        %4442 = vmatpush1.bf16.xpose.msra.mxu0 0
        %4443 = vmatprep.subr.bf16.mxu0 0
        %4444 = vmatpush1.bf16.xpose.msra.mxu0 0
        %4445 = vmatprep.subr.bf16.mxu0 0
        %4446 = vmatpush1.bf16.xpose.msra.mxu0 0
        %4447 = vmatprep.subr.bf16.mxu0 0
        %4448 = vmatpush1.bf16.xpose.msra.mxu0 0
        %4449 = vmatprep.subr.bf16.mxu0 0
        %4450 = vmatpush1.bf16.xpose.msra.mxu0 0
        %4451 = vmatprep.subr.bf16.mxu0 0
        %4452 = vmatpush1.bf16.xpose.msra.mxu0 0
        %4453 = vmatprep.subr.bf16.mxu0 0
        %4454 = vmatpush1.bf16.xpose.msra.mxu0 0
        %4455 = vmatprep.subr.bf16.mxu0 0
        %4456 = vmatpush1.bf16.xpose.msra.mxu0 0
        %4457 = vmatprep.subr.bf16.mxu0 0
        %4458 = vmatpush1.bf16.xpose.msra.mxu0 0
        %4459 = vmatprep.subr.bf16.mxu0 0
        %4460 = vmatpush1.bf16.xpose.msra.mxu0 0
        %4461 = vmatprep.subr.bf16.mxu0 0
        %4462 = vmatpush1.bf16.xpose.msra.mxu0 0
        %4463 = vmatprep.subr.bf16.mxu0 0
        %4464 = vmatpush1.bf16.xpose.msra.mxu0 0
        %4465 = vmatprep.subr.bf16.mxu0 0
        %4466 = vmatpush1.bf16.xpose.msra.mxu0 0
        %4467 = vmatprep.subr.bf16.mxu0 0
        %4468 = vmatpush1.bf16.xpose.msra.mxu0 0
        %4469 = vmatprep.mubr.bf16.mxu0 0
        %4470 = vmatmul.mubr.bf16.gmra.mrb[0].mxu0 %v4432
        %v4471 = vpop.f32.mrb[0].mxu0
        %v4472 = vadd.f32 0.0, %v4471
        %v4473 = vpop.f32.mrb[0].mxu0
        %v4474 = vpop.f32.mrb[0].mxu0
        %v4475 = vadd.f32 0.0, %v4474
        %v4476 = vpop.f32.mrb[0].mxu0
        %4477 = vdwg.mxu0
        %4478 = vrot.lane.b32.xlu0 %v2943, 104
        %v4479 = vpop.permute.xlu0 %4478
        %4480 = vrot.lane.b32.xlu0 %v2947, 104
        %v4481 = vpop.permute.xlu0 %4480
        %v4483 = vsel %vm831, %v4479, 0
        %v4486 = vsel %vm831, %v4481, 0
        %4488 = vmatprep.subr.bf16.mxu0 0
        %4489 = vmatpush1.bf16.xpose.msra.mxu0 %v4486
        %4490 = vmatprep.subr.bf16.mxu0 0
        %4491 = vmatpush1.bf16.xpose.msra.mxu0 0
        %4492 = vmatprep.subr.bf16.mxu0 0
        %4493 = vmatpush1.bf16.xpose.msra.mxu0 0
        %4494 = vmatprep.subr.bf16.mxu0 0
        %4495 = vmatpush1.bf16.xpose.msra.mxu0 0
        %4496 = vmatprep.subr.bf16.mxu0 0
        %4497 = vmatpush1.bf16.xpose.msra.mxu0 0
        %4498 = vmatprep.subr.bf16.mxu0 0
        %4499 = vmatpush1.bf16.xpose.msra.mxu0 0
        %4500 = vmatprep.subr.bf16.mxu0 0
        %4501 = vmatpush1.bf16.xpose.msra.mxu0 0
        %4502 = vmatprep.subr.bf16.mxu0 0
        %4503 = vmatpush1.bf16.xpose.msra.mxu0 0
        %4504 = vmatprep.subr.bf16.mxu0 0
        %4505 = vmatpush1.bf16.xpose.msra.mxu0 0
        %4506 = vmatprep.subr.bf16.mxu0 0
        %4507 = vmatpush1.bf16.xpose.msra.mxu0 0
        %4508 = vmatprep.subr.bf16.mxu0 0
        %4509 = vmatpush1.bf16.xpose.msra.mxu0 0
        %4510 = vmatprep.subr.bf16.mxu0 0
        %4511 = vmatpush1.bf16.xpose.msra.mxu0 0
        %4512 = vmatprep.subr.bf16.mxu0 0
        %4513 = vmatpush1.bf16.xpose.msra.mxu0 0
        %4514 = vmatprep.subr.bf16.mxu0 0
        %4515 = vmatpush1.bf16.xpose.msra.mxu0 0
        %4516 = vmatprep.subr.bf16.mxu0 0
        %4517 = vmatpush1.bf16.xpose.msra.mxu0 0
        %4518 = vmatprep.subr.bf16.mxu0 0
        %4519 = vmatpush1.bf16.xpose.msra.mxu0 0
        %4520 = vmatprep.mubr.bf16.mxu0 0
        %4521 = vmatmul.mubr.bf16.gmra.mrb[0].mxu0 %v4483
        %v4522 = vpop.f32.mrb[0].mxu0
        %v4523 = vadd.f32 0.0, %v4522
        %v4524 = vpop.f32.mrb[0].mxu0
        %v4525 = vpop.f32.mrb[0].mxu0
        %v4526 = vadd.f32 0.0, %v4525
        %v4527 = vpop.f32.mrb[0].mxu0
        %4528 = vdwg.mxu0
        %4529 = vrot.lane.b32.xlu0 %v2944, 104
        %v4530 = vpop.permute.xlu0 %4529
        %4531 = vrot.lane.b32.xlu0 %v2948, 104
        %v4532 = vpop.permute.xlu0 %4531
        %v4534 = vsel %vm831, %v4530, 0
        %v4537 = vsel %vm831, %v4532, 0
        %4539 = vmatprep.subr.bf16.mxu0 0
        %4540 = vmatpush1.bf16.xpose.msra.mxu0 %v4537
        %4541 = vmatprep.subr.bf16.mxu0 0
        %4542 = vmatpush1.bf16.xpose.msra.mxu0 0
        %4543 = vmatprep.subr.bf16.mxu0 0
        %4544 = vmatpush1.bf16.xpose.msra.mxu0 0
        %4545 = vmatprep.subr.bf16.mxu0 0
        %4546 = vmatpush1.bf16.xpose.msra.mxu0 0
        %4547 = vmatprep.subr.bf16.mxu0 0
        %4548 = vmatpush1.bf16.xpose.msra.mxu0 0
        %4549 = vmatprep.subr.bf16.mxu0 0
        %4550 = vmatpush1.bf16.xpose.msra.mxu0 0
        %4551 = vmatprep.subr.bf16.mxu0 0
        %4552 = vmatpush1.bf16.xpose.msra.mxu0 0
        %4553 = vmatprep.subr.bf16.mxu0 0
        %4554 = vmatpush1.bf16.xpose.msra.mxu0 0
        %4555 = vmatprep.subr.bf16.mxu0 0
        %4556 = vmatpush1.bf16.xpose.msra.mxu0 0
        %4557 = vmatprep.subr.bf16.mxu0 0
        %4558 = vmatpush1.bf16.xpose.msra.mxu0 0
        %4559 = vmatprep.subr.bf16.mxu0 0
        %4560 = vmatpush1.bf16.xpose.msra.mxu0 0
        %4561 = vmatprep.subr.bf16.mxu0 0
        %4562 = vmatpush1.bf16.xpose.msra.mxu0 0
        %4563 = vmatprep.subr.bf16.mxu0 0
        %4564 = vmatpush1.bf16.xpose.msra.mxu0 0
        %4565 = vmatprep.subr.bf16.mxu0 0
        %4566 = vmatpush1.bf16.xpose.msra.mxu0 0
        %4567 = vmatprep.subr.bf16.mxu0 0
        %4568 = vmatpush1.bf16.xpose.msra.mxu0 0
        %4569 = vmatprep.subr.bf16.mxu0 0
        %4570 = vmatpush1.bf16.xpose.msra.mxu0 0
        %4571 = vmatprep.mubr.bf16.mxu0 0
        %4572 = vmatmul.mubr.bf16.gmra.mrb[0].mxu0 %v4534
        %v4573 = vpop.f32.mrb[0].mxu0
        %v4574 = vadd.f32 0.0, %v4573
        %v4575 = vpop.f32.mrb[0].mxu0
        %v4576 = vpop.f32.mrb[0].mxu0
        %v4577 = vadd.f32 0.0, %v4576
        %v4578 = vpop.f32.mrb[0].mxu0
        %4579 = vdwg.mxu0
        %4580 = vrot.lane.b32.xlu0 %v2945, 104
        %v4581 = vpop.permute.xlu0 %4580
        %4582 = vrot.lane.b32.xlu0 %v2949, 104
        %v4583 = vpop.permute.xlu0 %4582
        %v4585 = vsel %vm831, %v4581, 0
        %v4588 = vsel %vm831, %v4583, 0
        %4590 = vmatprep.subr.bf16.mxu0 0
        %4591 = vmatpush1.bf16.xpose.msra.mxu0 %v4588
        %4592 = vmatprep.subr.bf16.mxu0 0
        %4593 = vmatpush1.bf16.xpose.msra.mxu0 0
        %4594 = vmatprep.subr.bf16.mxu0 0
        %4595 = vmatpush1.bf16.xpose.msra.mxu0 0
        %4596 = vmatprep.subr.bf16.mxu0 0
        %4597 = vmatpush1.bf16.xpose.msra.mxu0 0
        %4598 = vmatprep.subr.bf16.mxu0 0
        %4599 = vmatpush1.bf16.xpose.msra.mxu0 0
        %4600 = vmatprep.subr.bf16.mxu0 0
        %4601 = vmatpush1.bf16.xpose.msra.mxu0 0
        %4602 = vmatprep.subr.bf16.mxu0 0
        %4603 = vmatpush1.bf16.xpose.msra.mxu0 0
        %4604 = vmatprep.subr.bf16.mxu0 0
        %4605 = vmatpush1.bf16.xpose.msra.mxu0 0
        %4606 = vmatprep.subr.bf16.mxu0 0
        %4607 = vmatpush1.bf16.xpose.msra.mxu0 0
        %4608 = vmatprep.subr.bf16.mxu0 0
        %4609 = vmatpush1.bf16.xpose.msra.mxu0 0
        %4610 = vmatprep.subr.bf16.mxu0 0
        %4611 = vmatpush1.bf16.xpose.msra.mxu0 0
        %4612 = vmatprep.subr.bf16.mxu0 0
        %4613 = vmatpush1.bf16.xpose.msra.mxu0 0
        %4614 = vmatprep.subr.bf16.mxu0 0
        %4615 = vmatpush1.bf16.xpose.msra.mxu0 0
        %4616 = vmatprep.subr.bf16.mxu0 0
        %4617 = vmatpush1.bf16.xpose.msra.mxu0 0
        %4618 = vmatprep.subr.bf16.mxu0 0
        %4619 = vmatpush1.bf16.xpose.msra.mxu0 0
        %4620 = vmatprep.subr.bf16.mxu0 0
        %4621 = vmatpush1.bf16.xpose.msra.mxu0 0
        %4622 = vmatprep.mubr.bf16.mxu0 0
        %4623 = vmatmul.mubr.bf16.gmra.mrb[0].mxu0 %v4585
        %v4624 = vpop.f32.mrb[0].mxu0
        %v4625 = vadd.f32 0.0, %v4624
        %v4626 = vpop.f32.mrb[0].mxu0
        %v4627 = vpop.f32.mrb[0].mxu0
        %v4628 = vadd.f32 0.0, %v4627
        %v4629 = vpop.f32.mrb[0].mxu0
        %4630 = vdwg.mxu0
        %v4631 = vsel %vm831, %v4472, -inf
        %4632 = vmax.xlane.f32.xlu0 %v4631
        %v4633 = vpop.xlane.xlu0 %4632
        %v4634 = vsel %vm831, %v4475, -inf
        %4635 = vmax.xlane.f32.xlu0 %v4634
        %v4636 = vpop.xlane.xlu0 %4635
        %v4637 = vsel %vm831, %v4523, -inf
        %4638 = vmax.xlane.f32.xlu0 %v4637
        %v4639 = vpop.xlane.xlu0 %4638
        %v4640 = vsel %vm831, %v4526, -inf
        %4641 = vmax.xlane.f32.xlu0 %v4640
        %v4642 = vpop.xlane.xlu0 %4641
        %v4643 = vsel %vm831, %v4574, -inf
        %4644 = vmax.xlane.f32.xlu0 %v4643
        %v4645 = vpop.xlane.xlu0 %4644
        %v4646 = vsel %vm831, %v4577, -inf
        %4647 = vmax.xlane.f32.xlu0 %v4646
        %v4648 = vpop.xlane.xlu0 %4647
        %v4649 = vsel %vm831, %v4625, -inf
        %4650 = vmax.xlane.f32.xlu0 %v4649
        %v4651 = vpop.xlane.xlu0 %4650
        %v4652 = vsel %vm831, %v4628, -inf
        %4653 = vmax.xlane.f32.xlu0 %v4652
        %v4654 = vpop.xlane.xlu0 %4653
        %v4655 = vsub.f32 %v4472, %v4633
        %v4656 = vsub.f32 %v4475, %v4636
        %v4657 = vsub.f32 %v4523, %v4639
        %v4658 = vsub.f32 %v4526, %v4642
        %v4659 = vsub.f32 %v4574, %v4645
        %v4660 = vsub.f32 %v4577, %v4648
        %v4661 = vsub.f32 %v4625, %v4651
        %v4662 = vsub.f32 %v4628, %v4654
        %v4663 = vmul.f32 %v4655, 1.442695
        %v4664 = vpow.pop %v4663
        %v4665 = vmul.f32 %v4656, 1.442695
        %v4666 = vpow.pop %v4665
        %v4667 = vmul.f32 %v4657, 1.442695
        %v4668 = vpow.pop %v4667
        %v4669 = vmul.f32 %v4658, 1.442695
        %v4670 = vpow.pop %v4669
        %v4671 = vmul.f32 %v4659, 1.442695
        %v4672 = vpow.pop %v4671
        %v4673 = vmul.f32 %v4660, 1.442695
        %v4674 = vpow.pop %v4673
        %v4675 = vmul.f32 %v4661, 1.442695
        %v4676 = vpow.pop %v4675
        %v4677 = vmul.f32 %v4662, 1.442695
        %v4678 = vpow.pop %v4677
        %v4679 = vsel %vm831, %v4664, 0.0
        %4680 = vadd.xlane.f32.xlu0 %v4679
        %v4681 = vpop.xlane.xlu0 %4680
        %v4682 = vsel %vm831, %v4666, 0.0
        %4683 = vadd.xlane.f32.xlu0 %v4682
        %v4684 = vpop.xlane.xlu0 %4683
        %v4685 = vsel %vm831, %v4668, 0.0
        %4686 = vadd.xlane.f32.xlu0 %v4685
        %v4687 = vpop.xlane.xlu0 %4686
        %v4688 = vsel %vm831, %v4670, 0.0
        %4689 = vadd.xlane.f32.xlu0 %v4688
        %v4690 = vpop.xlane.xlu0 %4689
        %v4691 = vsel %vm831, %v4672, 0.0
        %4692 = vadd.xlane.f32.xlu0 %v4691
        %v4693 = vpop.xlane.xlu0 %4692
        %v4694 = vsel %vm831, %v4674, 0.0
        %4695 = vadd.xlane.f32.xlu0 %v4694
        %v4696 = vpop.xlane.xlu0 %4695
        %v4697 = vsel %vm831, %v4676, 0.0
        %4698 = vadd.xlane.f32.xlu0 %v4697
        %v4699 = vpop.xlane.xlu0 %4698
        %v4700 = vsel %vm831, %v4678, 0.0
        %4701 = vadd.xlane.f32.xlu0 %v4700
        %v4702 = vpop.xlane.xlu0 %4701
        %v4703 = vrcp.pop %v4681
        %v4704 = vrcp.pop %v4684
        %v4705 = vrcp.pop %v4687
        %v4706 = vrcp.pop %v4690
        %v4707 = vrcp.pop %v4693
        %v4708 = vrcp.pop %v4696
        %v4709 = vrcp.pop %v4699
        %v4710 = vrcp.pop %v4702
        %v4711 = vmul.f32 %v4664, %v4703
        %v4712 = vmul.f32 %v4666, %v4704
        %v4713 = vmul.f32 %v4668, %v4705
        %v4714 = vmul.f32 %v4670, %v4706
        %v4715 = vmul.f32 %v4672, %v4707
        %v4716 = vmul.f32 %v4674, %v4708
        %v4717 = vmul.f32 %v4676, %v4709
        %v4718 = vmul.f32 %v4678, %v4710
        %v4719 = vpack.c.bf16 %v4712, %v4711
        %v4720 = vpack.c.bf16 %v4714, %v4713
        %v4721 = vpack.c.bf16 %v4716, %v4715
        %v4722 = vpack.c.bf16 %v4718, %v4717
        %4723 = vrot.lane.b32.xlu0 %v2950, 72
        %v4724 = vpop.permute.xlu0 %4723
        %v4726 = vsel %vm831, %v4719, 0
        %v4729 = vsel %vm3240, %v4724, 0
        %4731 = vmatprep.subr.bf16.mxu0 0
        %4732 = vmatpush1.bf16.msra.mxu0 %v4729
        %4733 = vmatprep.subr.bf16.mxu0 0
        %4734 = vmatpush1.bf16.msra.mxu0 0
        %4735 = vmatprep.subr.bf16.mxu0 0
        %4736 = vmatpush1.bf16.msra.mxu0 0
        %4737 = vmatprep.subr.bf16.mxu0 0
        %4738 = vmatpush1.bf16.msra.mxu0 0
        %4739 = vmatprep.subr.bf16.mxu0 0
        %4740 = vmatpush1.bf16.msra.mxu0 0
        %4741 = vmatprep.subr.bf16.mxu0 0
        %4742 = vmatpush1.bf16.msra.mxu0 0
        %4743 = vmatprep.subr.bf16.mxu0 0
        %4744 = vmatpush1.bf16.msra.mxu0 0
        %4745 = vmatprep.subr.bf16.mxu0 0
        %4746 = vmatpush1.bf16.msra.mxu0 0
        %4747 = vmatprep.subr.bf16.mxu0 0
        %4748 = vmatpush1.bf16.msra.mxu0 0
        %4749 = vmatprep.subr.bf16.mxu0 0
        %4750 = vmatpush1.bf16.msra.mxu0 0
        %4751 = vmatprep.subr.bf16.mxu0 0
        %4752 = vmatpush1.bf16.msra.mxu0 0
        %4753 = vmatprep.subr.bf16.mxu0 0
        %4754 = vmatpush1.bf16.msra.mxu0 0
        %4755 = vmatprep.subr.bf16.mxu0 0
        %4756 = vmatpush1.bf16.msra.mxu0 0
        %4757 = vmatprep.subr.bf16.mxu0 0
        %4758 = vmatpush1.bf16.msra.mxu0 0
        %4759 = vmatprep.subr.bf16.mxu0 0
        %4760 = vmatpush1.bf16.msra.mxu0 0
        %4761 = vmatprep.subr.bf16.mxu0 0
        %4762 = vmatpush1.bf16.msra.mxu0 0
        %4763 = vmatprep.mubr.bf16.mxu0 0
        %4764 = vmatmul.mubr.bf16.gmra.mrb[0].mxu0 %v4726
        %v4765 = vpop.f32.mrb[0].mxu0
        %v4766 = vadd.f32 0.0, %v4765
        %v4767 = vpop.f32.mrb[0].mxu0
        %v4768 = vpop.f32.mrb[0].mxu0
        %v4769 = vadd.f32 0.0, %v4768
        %v4770 = vpop.f32.mrb[0].mxu0
        %4771 = vdwg.mxu0
        %4772 = vrot.lane.b32.xlu0 %v2951, 72
        %v4773 = vpop.permute.xlu0 %4772
        %v4775 = vsel %vm831, %v4720, 0
        %v4778 = vsel %vm3240, %v4773, 0
        %4780 = vmatprep.subr.bf16.mxu0 0
        %4781 = vmatpush1.bf16.msra.mxu0 %v4778
        %4782 = vmatprep.subr.bf16.mxu0 0
        %4783 = vmatpush1.bf16.msra.mxu0 0
        %4784 = vmatprep.subr.bf16.mxu0 0
        %4785 = vmatpush1.bf16.msra.mxu0 0
        %4786 = vmatprep.subr.bf16.mxu0 0
        %4787 = vmatpush1.bf16.msra.mxu0 0
        %4788 = vmatprep.subr.bf16.mxu0 0
        %4789 = vmatpush1.bf16.msra.mxu0 0
        %4790 = vmatprep.subr.bf16.mxu0 0
        %4791 = vmatpush1.bf16.msra.mxu0 0
        %4792 = vmatprep.subr.bf16.mxu0 0
        %4793 = vmatpush1.bf16.msra.mxu0 0
        %4794 = vmatprep.subr.bf16.mxu0 0
        %4795 = vmatpush1.bf16.msra.mxu0 0
        %4796 = vmatprep.subr.bf16.mxu0 0
        %4797 = vmatpush1.bf16.msra.mxu0 0
        %4798 = vmatprep.subr.bf16.mxu0 0
        %4799 = vmatpush1.bf16.msra.mxu0 0
        %4800 = vmatprep.subr.bf16.mxu0 0
        %4801 = vmatpush1.bf16.msra.mxu0 0
        %4802 = vmatprep.subr.bf16.mxu0 0
        %4803 = vmatpush1.bf16.msra.mxu0 0
        %4804 = vmatprep.subr.bf16.mxu0 0
        %4805 = vmatpush1.bf16.msra.mxu0 0
        %4806 = vmatprep.subr.bf16.mxu0 0
        %4807 = vmatpush1.bf16.msra.mxu0 0
        %4808 = vmatprep.subr.bf16.mxu0 0
        %4809 = vmatpush1.bf16.msra.mxu0 0
        %4810 = vmatprep.subr.bf16.mxu0 0
        %4811 = vmatpush1.bf16.msra.mxu0 0
        %4812 = vmatprep.mubr.bf16.mxu0 0
        %4813 = vmatmul.mubr.bf16.gmra.mrb[0].mxu0 %v4775
        %v4814 = vpop.f32.mrb[0].mxu0
        %v4815 = vadd.f32 0.0, %v4814
        %v4816 = vpop.f32.mrb[0].mxu0
        %v4817 = vpop.f32.mrb[0].mxu0
        %v4818 = vadd.f32 0.0, %v4817
        %v4819 = vpop.f32.mrb[0].mxu0
        %4820 = vdwg.mxu0
        %4821 = vrot.lane.b32.xlu0 %v2952, 72
        %v4822 = vpop.permute.xlu0 %4821
        %v4824 = vsel %vm831, %v4721, 0
        %v4827 = vsel %vm3240, %v4822, 0
        %4829 = vmatprep.subr.bf16.mxu0 0
        %4830 = vmatpush1.bf16.msra.mxu0 %v4827
        %4831 = vmatprep.subr.bf16.mxu0 0
        %4832 = vmatpush1.bf16.msra.mxu0 0
        %4833 = vmatprep.subr.bf16.mxu0 0
        %4834 = vmatpush1.bf16.msra.mxu0 0
        %4835 = vmatprep.subr.bf16.mxu0 0
        %4836 = vmatpush1.bf16.msra.mxu0 0
        %4837 = vmatprep.subr.bf16.mxu0 0
        %4838 = vmatpush1.bf16.msra.mxu0 0
        %4839 = vmatprep.subr.bf16.mxu0 0
        %4840 = vmatpush1.bf16.msra.mxu0 0
        %4841 = vmatprep.subr.bf16.mxu0 0
        %4842 = vmatpush1.bf16.msra.mxu0 0
        %4843 = vmatprep.subr.bf16.mxu0 0
        %4844 = vmatpush1.bf16.msra.mxu0 0
        %4845 = vmatprep.subr.bf16.mxu0 0
        %4846 = vmatpush1.bf16.msra.mxu0 0
        %4847 = vmatprep.subr.bf16.mxu0 0
        %4848 = vmatpush1.bf16.msra.mxu0 0
        %4849 = vmatprep.subr.bf16.mxu0 0
        %4850 = vmatpush1.bf16.msra.mxu0 0
        %4851 = vmatprep.subr.bf16.mxu0 0
        %4852 = vmatpush1.bf16.msra.mxu0 0
        %4853 = vmatprep.subr.bf16.mxu0 0
        %4854 = vmatpush1.bf16.msra.mxu0 0
        %4855 = vmatprep.subr.bf16.mxu0 0
        %4856 = vmatpush1.bf16.msra.mxu0 0
        %4857 = vmatprep.subr.bf16.mxu0 0
        %4858 = vmatpush1.bf16.msra.mxu0 0
        %4859 = vmatprep.subr.bf16.mxu0 0
        %4860 = vmatpush1.bf16.msra.mxu0 0
        %4861 = vmatprep.mubr.bf16.mxu0 0
        %4862 = vmatmul.mubr.bf16.gmra.mrb[0].mxu0 %v4824
        %v4863 = vpop.f32.mrb[0].mxu0
        %v4864 = vadd.f32 0.0, %v4863
        %v4865 = vpop.f32.mrb[0].mxu0
        %v4866 = vpop.f32.mrb[0].mxu0
        %v4867 = vadd.f32 0.0, %v4866
        %v4868 = vpop.f32.mrb[0].mxu0
        %4869 = vdwg.mxu0
        %4870 = vrot.lane.b32.xlu0 %v2953, 72
        %v4871 = vpop.permute.xlu0 %4870
        %v4873 = vsel %vm831, %v4722, 0
        %v4876 = vsel %vm3240, %v4871, 0
        %4878 = vmatprep.subr.bf16.mxu0 0
        %4879 = vmatpush1.bf16.msra.mxu0 %v4876
        %4880 = vmatprep.subr.bf16.mxu0 0
        %4881 = vmatpush1.bf16.msra.mxu0 0
        %4882 = vmatprep.subr.bf16.mxu0 0
        %4883 = vmatpush1.bf16.msra.mxu0 0
        %4884 = vmatprep.subr.bf16.mxu0 0
        %4885 = vmatpush1.bf16.msra.mxu0 0
        %4886 = vmatprep.subr.bf16.mxu0 0
        %4887 = vmatpush1.bf16.msra.mxu0 0
        %4888 = vmatprep.subr.bf16.mxu0 0
        %4889 = vmatpush1.bf16.msra.mxu0 0
        %4890 = vmatprep.subr.bf16.mxu0 0
        %4891 = vmatpush1.bf16.msra.mxu0 0
        %4892 = vmatprep.subr.bf16.mxu0 0
        %4893 = vmatpush1.bf16.msra.mxu0 0
        %4894 = vmatprep.subr.bf16.mxu0 0
        %4895 = vmatpush1.bf16.msra.mxu0 0
        %4896 = vmatprep.subr.bf16.mxu0 0
        %4897 = vmatpush1.bf16.msra.mxu0 0
        %4898 = vmatprep.subr.bf16.mxu0 0
        %4899 = vmatpush1.bf16.msra.mxu0 0
        %4900 = vmatprep.subr.bf16.mxu0 0
        %4901 = vmatpush1.bf16.msra.mxu0 0
        %4902 = vmatprep.subr.bf16.mxu0 0
        %4903 = vmatpush1.bf16.msra.mxu0 0
        %4904 = vmatprep.subr.bf16.mxu0 0
        %4905 = vmatpush1.bf16.msra.mxu0 0
        %4906 = vmatprep.subr.bf16.mxu0 0
        %4907 = vmatpush1.bf16.msra.mxu0 0
        %4908 = vmatprep.subr.bf16.mxu0 0
        %4909 = vmatpush1.bf16.msra.mxu0 0
        %4910 = vmatprep.mubr.bf16.mxu0 0
        %4911 = vmatmul.mubr.bf16.gmra.mrb[0].mxu0 %v4873
        %v4912 = vpop.f32.mrb[0].mxu0
        %v4913 = vadd.f32 0.0, %v4912
        %v4914 = vpop.f32.mrb[0].mxu0
        %v4915 = vpop.f32.mrb[0].mxu0
        %v4916 = vadd.f32 0.0, %v4915
        %v4917 = vpop.f32.mrb[0].mxu0
        %4918 = vdwg.mxu0
        %4927 = vrot.lane.b32.xlu0 %v3782, 8
        %v4928 = vpop.permute.xlu0 %4927
        %4929 = vrot.lane.b32.xlu0 %v3785, 8
        %v4930 = vpop.permute.xlu0 %4929
        %4931 = vrot.lane.b32.xlu0 %v3831, 8
        %v4932 = vpop.permute.xlu0 %4931
        %4933 = vrot.lane.b32.xlu0 %v3834, 8
        %v4934 = vpop.permute.xlu0 %4933
        %4935 = vrot.lane.b32.xlu0 %v3880, 8
        %v4936 = vpop.permute.xlu0 %4935
        %4937 = vrot.lane.b32.xlu0 %v3883, 8
        %v4938 = vpop.permute.xlu0 %4937
        %4939 = vrot.lane.b32.xlu0 %v3929, 8
        %v4940 = vpop.permute.xlu0 %4939
        %4941 = vrot.lane.b32.xlu0 %v3932, 8
        %v4942 = vpop.permute.xlu0 %4941
        %4959 = vrot.lane.b32.xlu0 %v4274, 16
        %v4960 = vpop.permute.xlu0 %4959
        %4961 = vrot.lane.b32.xlu0 %v4277, 16
        %v4962 = vpop.permute.xlu0 %4961
        %4963 = vrot.lane.b32.xlu0 %v4323, 16
        %v4964 = vpop.permute.xlu0 %4963
        %4965 = vrot.lane.b32.xlu0 %v4326, 16
        %v4966 = vpop.permute.xlu0 %4965
        %4967 = vrot.lane.b32.xlu0 %v4372, 16
        %v4968 = vpop.permute.xlu0 %4967
        %4969 = vrot.lane.b32.xlu0 %v4375, 16
        %v4970 = vpop.permute.xlu0 %4969
        %4971 = vrot.lane.b32.xlu0 %v4421, 16
        %v4972 = vpop.permute.xlu0 %4971
        %4973 = vrot.lane.b32.xlu0 %v4424, 16
        %v4974 = vpop.permute.xlu0 %4973
        %4991 = vrot.lane.b32.xlu0 %v4766, 24
        %v4992 = vpop.permute.xlu0 %4991
        %4993 = vrot.lane.b32.xlu0 %v4769, 24
        %v4994 = vpop.permute.xlu0 %4993
        %4995 = vrot.lane.b32.xlu0 %v4815, 24
        %v4996 = vpop.permute.xlu0 %4995
        %4997 = vrot.lane.b32.xlu0 %v4818, 24
        %v4998 = vpop.permute.xlu0 %4997
        %4999 = vrot.lane.b32.xlu0 %v4864, 24
        %v5000 = vpop.permute.xlu0 %4999
        %5001 = vrot.lane.b32.xlu0 %v4867, 24
        %v5002 = vpop.permute.xlu0 %5001
        %5003 = vrot.lane.b32.xlu0 %v4913, 24
        %v5004 = vpop.permute.xlu0 %5003
        %5005 = vrot.lane.b32.xlu0 %v4916, 24
        %v5006 = vpop.permute.xlu0 %5005
        %v5015 = vsel %vm831, %v3279, %v4928
        %v5016 = vsel %vm831, %v3282, %v4930
        %v5017 = vsel %vm831, %v3329, %v4932
        %v5018 = vsel %vm831, %v3332, %v4934
        %v5019 = vsel %vm831, %v3379, %v4936
        %v5020 = vsel %vm831, %v3382, %v4938
        %v5021 = vsel %vm831, %v3429, %v4940
        %v5022 = vsel %vm831, %v3432, %v4942
        %v5023 = vsel %vm1016, %v5015, %v4960
        %v5024 = vsel %vm1016, %v5016, %v4962
        %v5025 = vsel %vm1016, %v5017, %v4964
        %v5026 = vsel %vm1016, %v5018, %v4966
        %v5027 = vsel %vm1016, %v5019, %v4968
        %v5028 = vsel %vm1016, %v5020, %v4970
        %v5029 = vsel %vm1016, %v5021, %v4972
        %v5030 = vsel %vm1016, %v5022, %v4974
        %v5031 = vsel %vm2601, %v5023, %v4992
        %v5032 = vsel %vm2601, %v5024, %v4994
        %v5033 = vsel %vm2601, %v5025, %v4996
        %v5034 = vsel %vm2601, %v5026, %v4998
        %v5035 = vsel %vm2601, %v5027, %v5000
        %v5036 = vsel %vm2601, %v5028, %v5002
        %v5037 = vsel %vm2601, %v5029, %v5004
        %v5038 = vsel %vm2601, %v5030, %v5006
        %s5039 = scalar_lea.vmem %s408, 80 [#allocation10]
        %v5040 = vld [vmem:[%s5039] sm:$0xf]
        %v5041 = vld [vmem:[%s5039 + $0x4] sm:$0xf]
        %v5042 = vld [vmem:[%s5039 + $0x8] sm:$0xf]
        %v5043 = vld [vmem:[%s5039 + $0xc] sm:$0xf]
        %v5044 = vld [vmem:[%s481 + $0x9] sm:$0x1]
        %v5045 = vpack.c.bf16 %v5032, %v5031
        %v5046 = vpack.c.bf16 %v5034, %v5033
        %v5047 = vpack.c.bf16 %v5036, %v5035
        %v5048 = vpack.c.bf16 %v5038, %v5037
        %v5049 = vlaneseq
        %v5050 = vshrl.u32 %v5049, 7
        %v5051 = vsub.s32 0, %v5050
        %v5052 = vrot.slane %v5044, %v5051
        %v5057 = vunpack.c.l.b16 %v5040
        %v5058 = vunpack.c.l.b16 %v5041
        %v5059 = vunpack.c.l.b16 %v5042
        %v5060 = vunpack.c.l.b16 %v5043
        %v5061 = vpack.c.b16 %v5058, %v5057
        %v5062 = vpack.c.b16 %v5060, %v5059
        %v5066 = vsel %vm557, %v5045, 0
        %v5069 = vsel %vm557, %v5046, 0
        %v5072 = vsel %vm557, %v5047, 0
        %v5075 = vsel %vm557, %v5048, 0
        %5077 = vmatprep.subr.bf16.mxu0 0
        %5078 = vmatpush1.bf16.msra.mxu0 %v5061
        %5079 = vmatprep.subr.bf16.mxu0 0
        %5080 = vmatpush1.bf16.msra.mxu0 %v5062
        %5081 = vmatprep.subr.bf16.mxu0 0
        %5082 = vmatpush1.bf16.msra.mxu0 0
        %5083 = vmatprep.subr.bf16.mxu0 0
        %5084 = vmatpush1.bf16.msra.mxu0 0
        %5085 = vmatprep.subr.bf16.mxu0 0
        %5086 = vmatpush1.bf16.msra.mxu0 0
        %5087 = vmatprep.subr.bf16.mxu0 0
        %5088 = vmatpush1.bf16.msra.mxu0 0
        %5089 = vmatprep.subr.bf16.mxu0 0
        %5090 = vmatpush1.bf16.msra.mxu0 0
        %5091 = vmatprep.subr.bf16.mxu0 0
        %5092 = vmatpush1.bf16.msra.mxu0 0
        %5093 = vmatprep.subr.bf16.mxu0 0
        %5094 = vmatpush1.bf16.msra.mxu0 0
        %5095 = vmatprep.subr.bf16.mxu0 0
        %5096 = vmatpush1.bf16.msra.mxu0 0
        %5097 = vmatprep.subr.bf16.mxu0 0
        %5098 = vmatpush1.bf16.msra.mxu0 0
        %5099 = vmatprep.subr.bf16.mxu0 0
        %5100 = vmatpush1.bf16.msra.mxu0 0
        %5101 = vmatprep.subr.bf16.mxu0 0
        %5102 = vmatpush1.bf16.msra.mxu0 0
        %5103 = vmatprep.subr.bf16.mxu0 0
        %5104 = vmatpush1.bf16.msra.mxu0 0
        %5105 = vmatprep.subr.bf16.mxu0 0
        %5106 = vmatpush1.bf16.msra.mxu0 0
        %5107 = vmatprep.subr.bf16.mxu0 0
        %5108 = vmatpush1.bf16.msra.mxu0 0
        %5109 = vmatprep.mubr.bf16.mxu0 0
        %5110 = vmatmul.mubr.bf16.gmra.mrb[0].mxu0 %v5066
        %v5111 = vpop.f32.mrb[0].mxu0
        %v5112 = vadd.f32 %v5052, %v5111
        %v5113 = vpop.f32.mrb[0].mxu0
        %v5114 = vpop.f32.mrb[0].mxu0
        %v5115 = vadd.f32 %v5052, %v5114
        %v5116 = vpop.f32.mrb[0].mxu0
        %5117 = vmatprep.mubr.bf16.mxu0 0
        %5118 = vmatmul.mubr.bf16.gmra.mrb[0].mxu0 %v5069
        %v5119 = vpop.f32.mrb[0].mxu0
        %v5120 = vadd.f32 %v5052, %v5119
        %v5121 = vpop.f32.mrb[0].mxu0
        %v5122 = vpop.f32.mrb[0].mxu0
        %v5123 = vadd.f32 %v5052, %v5122
        %v5124 = vpop.f32.mrb[0].mxu0
        %5125 = vmatprep.mubr.bf16.mxu0 0
        %5126 = vmatmul.mubr.bf16.gmra.mrb[0].mxu0 %v5072
        %v5127 = vpop.f32.mrb[0].mxu0
        %v5128 = vadd.f32 %v5052, %v5127
        %v5129 = vpop.f32.mrb[0].mxu0
        %v5130 = vpop.f32.mrb[0].mxu0
        %v5131 = vadd.f32 %v5052, %v5130
        %v5132 = vpop.f32.mrb[0].mxu0
        %5133 = vmatprep.mubr.bf16.mxu0 0
        %5134 = vmatmul.mubr.bf16.gmra.mrb[0].mxu0 %v5075
        %v5135 = vpop.f32.mrb[0].mxu0
        %v5136 = vadd.f32 %v5052, %v5135
        %v5137 = vpop.f32.mrb[0].mxu0
        %v5138 = vpop.f32.mrb[0].mxu0
        %v5139 = vadd.f32 %v5052, %v5138
        %v5140 = vpop.f32.mrb[0].mxu0
        %5141 = vdwg.mxu0
        %v5142 = vadd.f32 %v518, %v5112
        %v5143 = vadd.f32 %v519, %v5115
        %v5144 = vadd.f32 %v520, %v5120
        %v5145 = vadd.f32 %v521, %v5123
        %v5146 = vadd.f32 %v522, %v5128
        %v5147 = vadd.f32 %v523, %v5131
        %v5148 = vadd.f32 %v524, %v5136
        %v5149 = vadd.f32 %v525, %v5139
        %v5150 = vld [vmem:[%s481 + $0xa] sm:$0x1]
        %v5151 = vld [vmem:[%s481 + $0xb] sm:$0x1]
        %v5152 = vsel %vm557, %v5142, 0.0
        %5153 = vadd.xlane.f32.xlu0 %v5152
        %v5154 = vpop.xlane.xlu0 %5153
        %v5155 = vsel %vm557, %v5143, 0.0
        %5156 = vadd.xlane.f32.xlu0 %v5155
        %v5157 = vpop.xlane.xlu0 %5156
        %v5158 = vsel %vm557, %v5144, 0.0
        %5159 = vadd.xlane.f32.xlu0 %v5158
        %v5160 = vpop.xlane.xlu0 %5159
        %v5161 = vsel %vm557, %v5145, 0.0
        %5162 = vadd.xlane.f32.xlu0 %v5161
        %v5163 = vpop.xlane.xlu0 %5162
        %v5164 = vsel %vm557, %v5146, 0.0
        %5165 = vadd.xlane.f32.xlu0 %v5164
        %v5166 = vpop.xlane.xlu0 %5165
        %v5167 = vsel %vm557, %v5147, 0.0
        %5168 = vadd.xlane.f32.xlu0 %v5167
        %v5169 = vpop.xlane.xlu0 %5168
        %v5170 = vsel %vm557, %v5148, 0.0
        %5171 = vadd.xlane.f32.xlu0 %v5170
        %v5172 = vpop.xlane.xlu0 %5171
        %v5173 = vsel %vm557, %v5149, 0.0
        %5174 = vadd.xlane.f32.xlu0 %v5173
        %v5175 = vpop.xlane.xlu0 %5174
        %v5176 = vmul.f32 %v5154, %v2703
        %v5177 = vmul.f32 %v5157, %v2703
        %v5178 = vmul.f32 %v5160, %v2703
        %v5179 = vmul.f32 %v5163, %v2703
        %v5180 = vmul.f32 %v5166, %v2703
        %v5181 = vmul.f32 %v5169, %v2703
        %v5182 = vmul.f32 %v5172, %v2703
        %v5183 = vmul.f32 %v5175, %v2703
        %v5184 = vsub.f32 %v5142, %v5176
        %v5185 = vsub.f32 %v5143, %v5177
        %v5186 = vsub.f32 %v5144, %v5178
        %v5187 = vsub.f32 %v5145, %v5179
        %v5188 = vsub.f32 %v5146, %v5180
        %v5189 = vsub.f32 %v5147, %v5181
        %v5190 = vsub.f32 %v5148, %v5182
        %v5191 = vsub.f32 %v5149, %v5183
        %v5192 = vmul.f32 %v5184, %v5184
        %v5193 = vmul.f32 %v5185, %v5185
        %v5194 = vmul.f32 %v5186, %v5186
        %v5195 = vmul.f32 %v5187, %v5187
        %v5196 = vmul.f32 %v5188, %v5188
        %v5197 = vmul.f32 %v5189, %v5189
        %v5198 = vmul.f32 %v5190, %v5190
        %v5199 = vmul.f32 %v5191, %v5191
        %v5200 = vsel %vm557, %v5192, 0.0
        %5201 = vadd.xlane.f32.xlu0 %v5200
        %v5202 = vpop.xlane.xlu0 %5201
        %v5203 = vsel %vm557, %v5193, 0.0
        %5204 = vadd.xlane.f32.xlu0 %v5203
        %v5205 = vpop.xlane.xlu0 %5204
        %v5206 = vsel %vm557, %v5194, 0.0
        %5207 = vadd.xlane.f32.xlu0 %v5206
        %v5208 = vpop.xlane.xlu0 %5207
        %v5209 = vsel %vm557, %v5195, 0.0
        %5210 = vadd.xlane.f32.xlu0 %v5209
        %v5211 = vpop.xlane.xlu0 %5210
        %v5212 = vsel %vm557, %v5196, 0.0
        %5213 = vadd.xlane.f32.xlu0 %v5212
        %v5214 = vpop.xlane.xlu0 %5213
        %v5215 = vsel %vm557, %v5197, 0.0
        %5216 = vadd.xlane.f32.xlu0 %v5215
        %v5217 = vpop.xlane.xlu0 %5216
        %v5218 = vsel %vm557, %v5198, 0.0
        %5219 = vadd.xlane.f32.xlu0 %v5218
        %v5220 = vpop.xlane.xlu0 %5219
        %v5221 = vsel %vm557, %v5199, 0.0
        %5222 = vadd.xlane.f32.xlu0 %v5221
        %v5223 = vpop.xlane.xlu0 %5222
        %v5224 = vmul.f32 %v5202, %v2703
        %v5225 = vmul.f32 %v5205, %v2703
        %v5226 = vmul.f32 %v5208, %v2703
        %v5227 = vmul.f32 %v5211, %v2703
        %v5228 = vmul.f32 %v5214, %v2703
        %v5229 = vmul.f32 %v5217, %v2703
        %v5230 = vmul.f32 %v5220, %v2703
        %v5231 = vmul.f32 %v5223, %v2703
        %v5232 = vadd.f32 %v5224, 1e-05
        %v5233 = vadd.f32 %v5225, 1e-05
        %v5234 = vadd.f32 %v5226, 1e-05
        %v5235 = vadd.f32 %v5227, 1e-05
        %v5236 = vadd.f32 %v5228, 1e-05
        %v5237 = vadd.f32 %v5229, 1e-05
        %v5238 = vadd.f32 %v5230, 1e-05
        %v5239 = vadd.f32 %v5231, 1e-05
        %v5240 = vrsqrt.pop %v5232
        %v5241 = vrsqrt.pop %v5233
        %v5242 = vrsqrt.pop %v5234
        %v5243 = vrsqrt.pop %v5235
        %v5244 = vrsqrt.pop %v5236
        %v5245 = vrsqrt.pop %v5237
        %v5246 = vrsqrt.pop %v5238
        %v5247 = vrsqrt.pop %v5239
        %v5248 = vmul.f32 %v5184, %v5240
        %v5249 = vmul.f32 %v5185, %v5241
        %v5250 = vmul.f32 %v5186, %v5242
        %v5251 = vmul.f32 %v5187, %v5243
        %v5252 = vmul.f32 %v5188, %v5244
        %v5253 = vmul.f32 %v5189, %v5245
        %v5254 = vmul.f32 %v5190, %v5246
        %v5255 = vmul.f32 %v5191, %v5247
        %v5256 = vlaneseq
        %v5257 = vshrl.u32 %v5256, 7
        %v5258 = vsub.s32 0, %v5257
        %v5259 = vrot.slane %v5150, %v5258
        %v5260 = vmul.f32 %v5248, %v5259
        %v5261 = vmul.f32 %v5249, %v5259
        %v5262 = vmul.f32 %v5250, %v5259
        %v5263 = vmul.f32 %v5251, %v5259
        %v5264 = vmul.f32 %v5252, %v5259
        %v5265 = vmul.f32 %v5253, %v5259
        %v5266 = vmul.f32 %v5254, %v5259
        %v5267 = vmul.f32 %v5255, %v5259
        %v5268 = vlaneseq
        %v5269 = vshrl.u32 %v5268, 7
        %v5270 = vsub.s32 0, %v5269
        %v5271 = vrot.slane %v5151, %v5270
        %v5272 = vadd.f32 %v5260, %v5271
        %v5273 = vadd.f32 %v5261, %v5271
        %v5274 = vadd.f32 %v5262, %v5271
        %v5275 = vadd.f32 %v5263, %v5271
        %v5276 = vadd.f32 %v5264, %v5271
        %v5277 = vadd.f32 %v5265, %v5271
        %v5278 = vadd.f32 %v5266, %v5271
        %v5279 = vadd.f32 %v5267, %v5271
        %5280 = vst.msk [vmem:[#allocation2] sm:$0xff] %vm557, %v2756
        %5281 = vst.msk [vmem:[#allocation2 + $0x8] sm:$0xff] %vm557, %v2757
        %5282 = vst.msk [vmem:[#allocation2 + $0x10] sm:$0xff] %vm557, %v2758
        %5283 = vst.msk [vmem:[#allocation2 + $0x18] sm:$0xff] %vm557, %v2759
        %5284 = vst.msk [vmem:[#allocation3] sm:$0xff] %vm557, %v5272
        %5285 = vst.msk [vmem:[#allocation3 + $0x8] sm:$0xff] %vm557, %v5273
        %5286 = vst.msk [vmem:[#allocation3 + $0x10] sm:$0xff] %vm557, %v5274
        %5287 = vst.msk [vmem:[#allocation3 + $0x18] sm:$0xff] %vm557, %v5275
        %5288 = vst.msk [vmem:[#allocation3 + $0x20] sm:$0xff] %vm557, %v5276
        %5289 = vst.msk [vmem:[#allocation3 + $0x28] sm:$0xff] %vm557, %v5277
        %5290 = vst.msk [vmem:[#allocation3 + $0x30] sm:$0xff] %vm557, %v5278
        %5291 = vst.msk [vmem:[#allocation3 + $0x38] sm:$0xff] %vm557, %v5279
        %p5292 = scmp.eq.s32.totalorder %s39, 1
        // Predicated region
        $region65: #{tpu_custom_call.1} parent=43 // pred_check
          %p5293 = pneg %p5292
        $region66: #{tpu_custom_call.1} parent=43 // pred_check_branch
          %5295 = sbr.rel (%p5293) target = $region68
        $region67: #{tpu_custom_call.1} parent=43 // pred_region
          %5296 = vst.msk [vmem:[%s461] sm:$0xff] %vm557, %v2756
          %5297 = vst.msk [vmem:[%s461 + $0x8] sm:$0xff] %vm557, %v2757
          %5298 = vst.msk [vmem:[%s461 + $0x10] sm:$0xff] %vm557, %v2758
          %5299 = vst.msk [vmem:[%s461 + $0x18] sm:$0xff] %vm557, %v2759
          %5300 = vst.msk [vmem:[%s468] sm:$0xff] %vm557, %v5272
          %5301 = vst.msk [vmem:[%s468 + $0x8] sm:$0xff] %vm557, %v5273
          %5302 = vst.msk [vmem:[%s468 + $0x10] sm:$0xff] %vm557, %v5274
          %5303 = vst.msk [vmem:[%s468 + $0x18] sm:$0xff] %vm557, %v5275
          %5304 = vst.msk [vmem:[%s468 + $0x20] sm:$0xff] %vm557, %v5276
          %5305 = vst.msk [vmem:[%s468 + $0x28] sm:$0xff] %vm557, %v5277
          %5306 = vst.msk [vmem:[%s468 + $0x30] sm:$0xff] %vm557, %v5278
          %5307 = vst.msk [vmem:[%s468 + $0x38] sm:$0xff] %vm557, %v5279
        $region68: #{tpu_custom_call.1} parent=43 // pred_fallthru
          _
        %s5308 = sand.u32 %s210, 1
        %s5309 = scalar_lea.sflag [#allocation6], %s5308
        %s5310 = sand.u32 %s210, 1
        %s5311 = smul.addr %s5310, 32
        %s5312 = scalar_lea.vmem [#allocation12], %s5311
        %s5313 = sand.u32 %s236, 1
        %s5314 = scalar_lea.sflag [#allocation14], %s5313
        %s5315 = sand.u32 %s236, 1
        %s5316 = smul.addr %s5315, 64
        %s5317 = scalar_lea.vmem [#allocation13], %s5316
        // Predicated region
        $region69: #{tpu_custom_call.1} parent=43 // pred_check
          %p5318 = pneg %p220
        $region70: #{tpu_custom_call.1} parent=43 // pred_check_branch
          %5320 = sbr.rel (%p5318) target = $region72
        $region71: #{tpu_custom_call.1} parent=43 // pred_region
          %s5321 = smul.u32 4, %s38
          %s5323 = ssub.s32 512, 512
          %5324 = vsyncadd %s5309, %s5323
          %s5325 = smul.addr %s5321, 128
          %s5326 = scalar_lea.hbm %s6, %s5325
          %s5327 = sshll.u32 %s5312, 4
          %s5328 = int_to_ptr.vmem [resolvable:$true] %s5327
          %5333 = dma.vmem_to_hbm [thread:$0]  %s5328, 512, %s5326, %s5309, 128, 128, 8
        $region72: #{tpu_custom_call.1} parent=43 // pred_fallthru
          _
        // Predicated region
        $region73: #{tpu_custom_call.1} parent=43 // pred_check
          %p5334 = pneg %p246
        $region74: #{tpu_custom_call.1} parent=43 // pred_check_branch
          %5336 = sbr.rel (%p5334) target = $region76
        $region75: #{tpu_custom_call.1} parent=43 // pred_region
          %s5337 = smul.u32 4, %s38
          %s5339 = ssub.s32 1024, 1024
          %5340 = vsyncadd %s5314, %s5339
          %s5341 = smul.addr %s5337, 2
          %s5342 = smul.addr %s5341, 128
          %s5343 = scalar_lea.hbm %s7, %s5342
          %s5344 = sshll.u32 %s5317, 4
          %s5345 = int_to_ptr.vmem [resolvable:$true] %s5344
          %5350 = dma.vmem_to_hbm [thread:$0]  %s5345, 1024, %s5343, %s5314, 128, 128, 8
        $region76: #{tpu_custom_call.1} parent=43 // pred_fallthru
          _
      $region44: #{tpu_custom_call.1} parent=5 // pred_fallthru
        _
      %p5351 = scmp.le.s32.totalorder 2, %s29
      // Predicated region
      $region77: #{tpu_custom_call.1} parent=5 // pred_check
        %p5352 = pneg %p5351
      $region78: #{tpu_custom_call.1} parent=5 // pred_check_branch
        %5354 = sbr.rel (%p5352) target = $region80
      $region79: #{tpu_custom_call.1} parent=5 // pred_region
        %s5355 = ssub.s32 %s29, 2
        // Predicated region
        $region81: #{tpu_custom_call.1} parent=79 // pred_check
          %p5356 = pneg %p226
        $region82: #{tpu_custom_call.1} parent=79 // pred_check_branch
          %5358 = sbr.rel (%p5356) target = $region84
        $region83: #{tpu_custom_call.1} parent=79 // pred_region
          %s5359 = sand.u32 %s211, 1
          %s5360 = scalar_lea.sflag [#allocation6], %s5359
          %s5361 = sand.u32 %s211, 1
          %s5362 = smul.addr %s5361, 32
          %s5363 = scalar_lea.vmem [#allocation12], %s5362
          %5364 = dma.done %s5360, 512
        $region84: #{tpu_custom_call.1} parent=79 // pred_fallthru
          _
        // Predicated region
        $region85: #{tpu_custom_call.1} parent=79 // pred_check
          %p5365 = pneg %p252
        $region86: #{tpu_custom_call.1} parent=79 // pred_check_branch
          %5367 = sbr.rel (%p5365) target = $region88
        $region87: #{tpu_custom_call.1} parent=79 // pred_region
          %s5368 = sand.u32 %s237, 1
          %s5369 = scalar_lea.sflag [#allocation14], %s5368
          %s5370 = sand.u32 %s237, 1
          %s5371 = smul.addr %s5370, 64
          %s5372 = scalar_lea.vmem [#allocation13], %s5371
          %5373 = dma.done %s5369, 1024
        $region88: #{tpu_custom_call.1} parent=79 // pred_fallthru
          _
      $region80: #{tpu_custom_call.1} parent=5 // pred_fallthru
        _
    $region6: #{tpu_custom_call.1} parent=1 // loop_footer
      %s33 = sadd.s32 1, %s29
    $region7: #{tpu_custom_call.1} parent=1 // loop_footer_branch
      %28 = sbr.rel target = $region3
    $region8: #{tpu_custom_call.1} parent=1 // loop_exit
      _
    %5374 = vsyncpa [#allocation5], 1
    %s5375 = scalar_lea.sflag [#allocation5], 1
    %5376 = vsyncpa %s5375, 1
    %5377 = vsyncpa [#allocation8], 1
    %s5378 = scalar_lea.sflag [#allocation8], 1
    %5379 = vsyncpa %s5378, 1
    %5380 = vsyncpa [#allocation11], 1
    %s5381 = scalar_lea.sflag [#allocation11], 1
    %5382 = vsyncpa %s5381, 1
    %5383 = vsyncpa [#allocation6], 1
    %s5384 = scalar_lea.sflag [#allocation6], 1
    %5385 = vsyncpa %s5384, 1
    %5386 = vsyncpa [#allocation14], 1
    %s5387 = scalar_lea.sflag [#allocation14], 1
    %5388 = vsyncpa %s5387, 1

</llo_original>
